<compile_context>
chip_gen: v7x
topology: tpu7x:2x2x1
jax: 0.10.0
libtpu: 0.0.40
codegen_flags: <defaults>
</compile_context>

<pallas_src>
import functools

import jax
import jax.numpy as jnp
from jax.experimental import pallas as pl
from jax.experimental.pallas import tpu as pltpu

LANE = 128   # lane-dense padding target for every layer dim


def _round_up(n, m):
    return (n + m - 1) // m * m


def _pick_batch_tile(padded_batch):
    """Largest batch tile in {512, 384, 256, 128} that divides the padded batch
    exactly (no wasted rows) AND leaves >= 2 grid steps (so both v7x
    TensorCores get work); otherwise 128."""
    for cand in (512, 384, 256, 128):
        if 2 * cand <= padded_batch and padded_batch % cand == 0:
            return cand
    return 128


# ----------------------------------------------------------------------------
# Single fused kernel: chains all Linear(+LeakyReLU) layers of the AE.
#   refs = (x, w0, b0, w1, b1, ..., w_{L-1}, b_{L-1}, feat_out, rec_out)
# ----------------------------------------------------------------------------
def _ae_fused_kernel(*refs, n_layers, feature_idx):
    x_ref = refs[0]
    wb = refs[1:1 + 2 * n_layers]
    feat_ref = refs[1 + 2 * n_layers]
    rec_ref = refs[2 + 2 * n_layers]

    # Input block may arrive as f32 (aligned, zero-copy path) or bf16 (padded
    # path); cast to bf16 on the loaded VMEM block for the MXU.
    h = x_ref[...].astype(jnp.bfloat16)
    for l in range(n_layers):
        w = wb[2 * l][...]                                 # (Din_l, Dout_l) bf16, resident
        b = wb[2 * l + 1][...]                             # (1, Dout_l) f32
        # MXU matmul with f32 accumulation; bias added to the f32 accumulator.
        y = jnp.dot(h, w, preferred_element_type=jnp.float32) + b
        # LeakyReLU(0.01) on every layer except the bottleneck (feature) layer
        # and the final reconstruction layer (matches the PyTorch forward).
        if l != feature_idx and l != n_layers - 1:
            y = jnp.where(y > 0, y, 0.01 * y)
        if l == feature_idx:
            feat_ref[...] = y.astype(feat_ref.dtype)        # bf16 store
        if l == n_layers - 1:
            rec_ref[...] = y.astype(rec_ref.dtype)          # bf16 store
        else:
            h = y.astype(jnp.bfloat16)                      # bf16 for next matmul


# ----------------------------------------------------------------------------
# AE model: parameter construction + single fused (jitted) pallas_call
# ----------------------------------------------------------------------------
class AEPallas:
    def __init__(self, key, *, input_size, dim_hidden, num_hidden, dim_out,
                 dim_hidden_fact, out_dtype=jnp.bfloat16):
        # --- replicate the size bookkeeping of the PyTorch __init__ ---
        dim_h = dim_hidden
        self.h_size_enc = [input_size]
        for _ in range(num_hidden):
            self.h_size_enc.append(dim_h)
            dim_h = int(dim_h * dim_hidden_fact)
        self.h_size_enc.append(dim_out)
        self.h_size_dec = list(reversed(self.h_size_enc))

        self.input_size = input_size
        self.dim_out = dim_out
        self.out_dtype = out_dtype

        # full layer chain: encoder layers followed by decoder layers
        sizes = self.h_size_enc + self.h_size_dec[1:]
        self.layer_dims = list(zip(sizes[:-1], sizes[1:]))
        self.n_layers = len(self.layer_dims)
        self.feature_idx = len(self.h_size_enc) - 2   # index of last encoder layer

        def make_linear(k, d_in, d_out):
            # deterministic init mimicking torch.nn.Linear default
            kw, kb = jax.random.split(k)
            bound = 1.0 / (d_in ** 0.5)
            w = jax.random.uniform(kw, (d_in, d_out), jnp.float32,
                                   minval=-bound, maxval=bound)
            b = jax.random.uniform(kb, (d_out,), jnp.float32,
                                   minval=-bound, maxval=bound)
            return w, b

        keys = jax.random.split(key, self.n_layers)
        self.params_f32 = [make_linear(keys[i], din, dout)
                           for i, (din, dout) in enumerate(self.layer_dims)]

        # Lane-dense padded parameters for the fused kernel:
        #   weights -> bf16, zero-padded to multiples of 128 on both dims
        #   biases  -> f32 (added to the f32 accumulator), zero-padded
        self.padded_dims = [(_round_up(din, LANE), _round_up(dout, LANE))
                            for din, dout in self.layer_dims]
        flat = []
        for (w, b), (dpi, dpo), (din, dout) in zip(self.params_f32,
                                                   self.padded_dims,
                                                   self.layer_dims):
            wp = jnp.zeros((dpi, dpo), jnp.bfloat16).at[:din, :dout].set(
                w.astype(jnp.bfloat16))
            bp = jnp.zeros((1, dpo), jnp.float32).at[0, :dout].set(b)
            flat += [wp, bp]
        self.flat_kernel_params = tuple(flat)

        self._single_buffer = True
        self._jit_forward = jax.jit(self._forward_impl,
                                    static_argnames=("single_buffer_weights",))

    # ------------------------------------------------------------------ #
    def _forward_impl(self, x, flat_params, *, single_buffer_weights):
        B, D = x.shape
        d0p = self.padded_dims[0][0]
        feat_p = self.padded_dims[self.feature_idx][1]
        rec_p = self.padded_dims[-1][1]

        Bp0 = _round_up(B, LANE)
        TB = _pick_batch_tile(Bp0)
        grid_len = pl.cdiv(Bp0, TB)
        Bp = grid_len * TB

        if (Bp, d0p) == (B, D):
            xp = x                     # zero-copy: cast to bf16 inside the kernel
        else:
            # pad + bf16 cast fuse into one XLA op under jit
            xp = jnp.pad(x.astype(jnp.bfloat16), ((0, Bp - B), (0, d0p - D)))

        def const_spec(shape):
            # grid-invariant (resident) operand; single-buffer when supported
            index_map = lambda i: (0,) * len(shape)
            if single_buffer_weights:
                try:
                    return pl.BlockSpec(shape, index_map,
                                        pipeline_mode=pl.Buffered(1))
                except (TypeError, AttributeError):
                    pass
            return pl.BlockSpec(shape, index_map)

        in_specs = [pl.BlockSpec((TB, d0p), lambda i: (i, 0))]
        for dpi, dpo in self.padded_dims:
            in_specs.append(const_spec((dpi, dpo)))
            in_specs.append(const_spec((1, dpo)))

        out_specs = [pl.BlockSpec((TB, feat_p), lambda i: (i, 0)),
                     pl.BlockSpec((TB, rec_p), lambda i: (i, 0))]
        out_shape = [jax.ShapeDtypeStruct((Bp, feat_p), jnp.bfloat16),
                     jax.ShapeDtypeStruct((Bp, rec_p), jnp.bfloat16)]

        # advisory cost estimate + explicit VMEM budget
        flops = 2 * Bp * sum(dpi * dpo for dpi, dpo in self.padded_dims)
        param_bytes = sum(dpi * dpo * 2 + dpo * 4 for dpi, dpo in self.padded_dims)
        bytes_accessed = (xp.size * xp.dtype.itemsize + param_bytes
                          + Bp * (feat_p + rec_p) * 2)
        max_dim = max(max(d) for d in self.padded_dims)
        vmem_need = ((1 if single_buffer_weights else 2) * param_bytes
                     + 2 * TB * d0p * 4                    # double-buffered input
                     + 2 * TB * (feat_p + rec_p) * 2       # double-buffered outputs
                     + 6 * TB * max_dim * 4)               # activation temporaries
        vmem_limit = int(min(48 << 20, max(8 << 20, 2 * vmem_need)))

        kernel = functools.partial(_ae_fused_kernel,
                                   n_layers=self.n_layers,
                                   feature_idx=self.feature_idx)

        feat_pad, rec_pad = pl.pallas_call(
            kernel,
            out_shape=out_shape,
            grid=(grid_len,),
            in_specs=in_specs,
            out_specs=out_specs,
            compiler_params=pltpu.CompilerParams(
                dimension_semantics=("parallel",),
                vmem_limit_bytes=vmem_limit),
            cost_estimate=pl.CostEstimate(flops=flops, transcendentals=0,
                                          bytes_accessed=bytes_accessed),
        )(xp, *flat_params)

        feature = feat_pad[:B, :self.dim_out].astype(self.out_dtype)
        x_rec = rec_pad[:B, :self.input_size].astype(self.out_dtype)
        return feature, x_rec

    # ------------------------------------------------------------------ #
    def __call__(self, x):
        assert x.ndim == 2 and x.shape[1] == self.input_size
        try:
            return self._jit_forward(x, self.flat_kernel_params,
                                     single_buffer_weights=self._single_buffer)
        except Exception:
            if not self._single_buffer:
                raise
            # pl.Buffered(1) single-buffering rejected by this jax/Mosaic build;
            # retry with default double-buffered resident weights.
            self._single_buffer = False
            return self._jit_forward(x, self.flat_kernel_params,
                                     single_buffer_weights=False)


# ----------------------------------------------------------------------------
# Pure-JAX reference (same bf16 matmul / f32 accumulate recipe, unpadded)
# ----------------------------------------------------------------------------
def _ref_forward(model, x):
    h = x.astype(jnp.bfloat16)
    feat, y = None, None
    for l, (w, b) in enumerate(model.params_f32):
        y = jnp.dot(h, w.astype(jnp.bfloat16),
                    preferred_element_type=jnp.float32) + b
        if l != model.feature_idx and l != model.n_layers - 1:
            y = jnp.where(y > 0, y, 0.01 * y)
        if l == model.feature_idx:
            feat = y
        h = y.astype(jnp.bfloat16)
    return feat, y


if __name__ == "__main__":
    key = jax.random.PRNGKey(0)
    k_param, k_x = jax.random.split(key)

    # small, forward-consistent config:
    #   DIM_HIDDEN=64, NUM_HIDDEN=2, DIM_OUT=32, DIM_HIDDEN_FACT=0.5
    #   -> enc sizes [128, 64, 32, 32], dec sizes [32, 32, 64, 128]
    input_size = 128
    batch = 512   # -> padded batch 512, batch tile 256, 2 "parallel" grid steps

    model = AEPallas(k_param, input_size=input_size, dim_hidden=64,
                     num_hidden=2, dim_out=32, dim_hidden_fact=0.5)

    x = jax.random.normal(k_x, (batch, input_size), jnp.float32)

    feature, x_rec = model(x)
    feature = jax.block_until_ready(feature)
    x_rec = jax.block_until_ready(x_rec)

    assert feature.shape == (batch, 32)
    assert x_rec.shape == (batch, input_size)

    # correctness check against a matched (bf16 matmul, f32 accumulate) reference
    feat_ref, rec_ref = _ref_forward(model, x)
    assert jnp.allclose(feature.astype(jnp.float32), feat_ref, atol=2e-2, rtol=2e-2)
    assert jnp.allclose(x_rec.astype(jnp.float32), rec_ref, atol=2e-2, rtol=2e-2)

    print("KERNEL_OK")
</pallas_src>

<mosaic_0001>
module attributes {stable_mosaic.version = 11 : i64} {
  func.func @_ae_fused_kernel(%arg0: i32, %arg1: memref<256x128xf32, #tpu.memory_space<vmem>>, %arg2: memref<128x128xbf16, #tpu.memory_space<vmem>>, %arg3: memref<1x128xf32, #tpu.memory_space<vmem>>, %arg4: memref<128x128xbf16, #tpu.memory_space<vmem>>, %arg5: memref<1x128xf32, #tpu.memory_space<vmem>>, %arg6: memref<128x128xbf16, #tpu.memory_space<vmem>>, %arg7: memref<1x128xf32, #tpu.memory_space<vmem>>, %arg8: memref<128x128xbf16, #tpu.memory_space<vmem>>, %arg9: memref<1x128xf32, #tpu.memory_space<vmem>>, %arg10: memref<128x128xbf16, #tpu.memory_space<vmem>>, %arg11: memref<1x128xf32, #tpu.memory_space<vmem>>, %arg12: memref<128x128xbf16, #tpu.memory_space<vmem>>, %arg13: memref<1x128xf32, #tpu.memory_space<vmem>>, %arg14: memref<256x128xbf16, #tpu.memory_space<vmem>>, %arg15: memref<256x128xbf16, #tpu.memory_space<vmem>>) attributes {dimension_semantics = [#tpu.dimension_semantics<parallel>], iteration_bounds = array<i64: 2>, scalar_prefetch = 0 : i64, scratch_operands = 0 : i64, tpu.core_type = #tpu.core_type<tc>, window_params = [{transform_indices = @transform_0, window_bounds = array<i64: 256, 128>}, {pipeline_mode = #tpu.pipeline_mode<synchronous>, transform_indices = @transform_1, window_bounds = array<i64: 128, 128>}, {pipeline_mode = #tpu.pipeline_mode<synchronous>, transform_indices = @transform_2, window_bounds = array<i64: 1, 128>}, {pipeline_mode = #tpu.pipeline_mode<synchronous>, transform_indices = @transform_3, window_bounds = array<i64: 128, 128>}, {pipeline_mode = #tpu.pipeline_mode<synchronous>, transform_indices = @transform_4, window_bounds = array<i64: 1, 128>}, {pipeline_mode = #tpu.pipeline_mode<synchronous>, transform_indices = @transform_5, window_bounds = array<i64: 128, 128>}, {pipeline_mode = #tpu.pipeline_mode<synchronous>, transform_indices = @transform_6, window_bounds = array<i64: 1, 128>}, {pipeline_mode = #tpu.pipeline_mode<synchronous>, transform_indices = @transform_7, window_bounds = array<i64: 128, 128>}, {pipeline_mode = #tpu.pipeline_mode<synchronous>, transform_indices = @transform_8, window_bounds = array<i64: 1, 128>}, {pipeline_mode = #tpu.pipeline_mode<synchronous>, transform_indices = @transform_9, window_bounds = array<i64: 128, 128>}, {pipeline_mode = #tpu.pipeline_mode<synchronous>, transform_indices = @transform_10, window_bounds = array<i64: 1, 128>}, {pipeline_mode = #tpu.pipeline_mode<synchronous>, transform_indices = @transform_11, window_bounds = array<i64: 128, 128>}, {pipeline_mode = #tpu.pipeline_mode<synchronous>, transform_indices = @transform_12, window_bounds = array<i64: 1, 128>}, {transform_indices = @transform_13, window_bounds = array<i64: 256, 128>}, {transform_indices = @transform_14, window_bounds = array<i64: 256, 128>}]} {
    %c0 = arith.constant 0 : index
    %c0_0 = arith.constant 0 : index
    %0 = vector.load %arg1[%c0, %c0_0] : memref<256x128xf32, #tpu.memory_space<vmem>>, vector<256x128xf32>
    %1 = arith.truncf %0 : vector<256x128xf32> to vector<256x128xbf16>
    %c0_1 = arith.constant 0 : index
    %c0_2 = arith.constant 0 : index
    %2 = vector.load %arg2[%c0_1, %c0_2] : memref<128x128xbf16, #tpu.memory_space<vmem>>, vector<128x128xbf16>
    %c0_3 = arith.constant 0 : index
    %c0_4 = arith.constant 0 : index
    %3 = vector.load %arg3[%c0_3, %c0_4] : memref<1x128xf32, #tpu.memory_space<vmem>>, vector<1x128xf32>
    %cst = arith.constant dense<0.000000e+00> : vector<256x128xf32>
    %4 = tpu.matmul %1, %2, %cst {dimension_numbers = #tpu.dot_dimension_numbers<[1], [0], [0], [1], [0, 0, 1, 1], [], []>} : vector<256x128xbf16>, vector<128x128xbf16>, vector<256x128xf32> -> vector<256x128xf32>
    %5 = vector.broadcast %3 : vector<1x128xf32> to vector<256x128xf32>
    %6 = arith.addf %4, %5 : vector<256x128xf32>
    %cst_5 = arith.constant 0.000000e+00 : f32
    %7 = vector.broadcast %cst_5 : f32 to vector<256x128xf32>
    %8 = arith.cmpf ogt, %6, %7 : vector<256x128xf32>
    %cst_6 = arith.constant 0.00999999977 : f32
    %9 = vector.broadcast %cst_6 : f32 to vector<256x128xf32>
    %10 = arith.mulf %9, %6 : vector<256x128xf32>
    %11 = arith.select %8, %6, %10 : vector<256x128xi1>, vector<256x128xf32>
    %12 = arith.truncf %11 : vector<256x128xf32> to vector<256x128xbf16>
    %c0_7 = arith.constant 0 : index
    %c0_8 = arith.constant 0 : index
    %13 = vector.load %arg4[%c0_7, %c0_8] : memref<128x128xbf16, #tpu.memory_space<vmem>>, vector<128x128xbf16>
    %c0_9 = arith.constant 0 : index
    %c0_10 = arith.constant 0 : index
    %14 = vector.load %arg5[%c0_9, %c0_10] : memref<1x128xf32, #tpu.memory_space<vmem>>, vector<1x128xf32>
    %cst_11 = arith.constant dense<0.000000e+00> : vector<256x128xf32>
    %15 = tpu.matmul %12, %13, %cst_11 {dimension_numbers = #tpu.dot_dimension_numbers<[1], [0], [0], [1], [0, 0, 1, 1], [], []>} : vector<256x128xbf16>, vector<128x128xbf16>, vector<256x128xf32> -> vector<256x128xf32>
    %16 = vector.broadcast %14 : vector<1x128xf32> to vector<256x128xf32>
    %17 = arith.addf %15, %16 : vector<256x128xf32>
    %cst_12 = arith.constant 0.000000e+00 : f32
    %18 = vector.broadcast %cst_12 : f32 to vector<256x128xf32>
    %19 = arith.cmpf ogt, %17, %18 : vector<256x128xf32>
    %cst_13 = arith.constant 0.00999999977 : f32
    %20 = vector.broadcast %cst_13 : f32 to vector<256x128xf32>
    %21 = arith.mulf %20, %17 : vector<256x128xf32>
    %22 = arith.select %19, %17, %21 : vector<256x128xi1>, vector<256x128xf32>
    %23 = arith.truncf %22 : vector<256x128xf32> to vector<256x128xbf16>
    %c0_14 = arith.constant 0 : index
    %c0_15 = arith.constant 0 : index
    %24 = vector.load %arg6[%c0_14, %c0_15] : memref<128x128xbf16, #tpu.memory_space<vmem>>, vector<128x128xbf16>
    %c0_16 = arith.constant 0 : index
    %c0_17 = arith.constant 0 : index
    %25 = vector.load %arg7[%c0_16, %c0_17] : memref<1x128xf32, #tpu.memory_space<vmem>>, vector<1x128xf32>
    %cst_18 = arith.constant dense<0.000000e+00> : vector<256x128xf32>
    %26 = tpu.matmul %23, %24, %cst_18 {dimension_numbers = #tpu.dot_dimension_numbers<[1], [0], [0], [1], [0, 0, 1, 1], [], []>} : vector<256x128xbf16>, vector<128x128xbf16>, vector<256x128xf32> -> vector<256x128xf32>
    %27 = vector.broadcast %25 : vector<1x128xf32> to vector<256x128xf32>
    %28 = arith.addf %26, %27 : vector<256x128xf32>
    %29 = arith.truncf %28 : vector<256x128xf32> to vector<256x128xbf16>
    %c0_19 = arith.constant 0 : index
    %c0_20 = arith.constant 0 : index
    %30 = vector.load %arg14[%c0_19, %c0_20] : memref<256x128xbf16, #tpu.memory_space<vmem>>, vector<256x128xbf16>
    tpu.vector_store %arg14[%c0_19, %c0_20], %29 {strides = array<i32>} : memref<256x128xbf16, #tpu.memory_space<vmem>>, vector<256x128xbf16>,
    %31 = arith.truncf %28 : vector<256x128xf32> to vector<256x128xbf16>
    %c0_21 = arith.constant 0 : index
    %c0_22 = arith.constant 0 : index
    %32 = vector.load %arg8[%c0_21, %c0_22] : memref<128x128xbf16, #tpu.memory_space<vmem>>, vector<128x128xbf16>
    %c0_23 = arith.constant 0 : index
    %c0_24 = arith.constant 0 : index
    %33 = vector.load %arg9[%c0_23, %c0_24] : memref<1x128xf32, #tpu.memory_space<vmem>>, vector<1x128xf32>
    %cst_25 = arith.constant dense<0.000000e+00> : vector<256x128xf32>
    %34 = tpu.matmul %31, %32, %cst_25 {dimension_numbers = #tpu.dot_dimension_numbers<[1], [0], [0], [1], [0, 0, 1, 1], [], []>} : vector<256x128xbf16>, vector<128x128xbf16>, vector<256x128xf32> -> vector<256x128xf32>
    %35 = vector.broadcast %33 : vector<1x128xf32> to vector<256x128xf32>
    %36 = arith.addf %34, %35 : vector<256x128xf32>
    %cst_26 = arith.constant 0.000000e+00 : f32
    %37 = vector.broadcast %cst_26 : f32 to vector<256x128xf32>
    %38 = arith.cmpf ogt, %36, %37 : vector<256x128xf32>
    %cst_27 = arith.constant 0.00999999977 : f32
    %39 = vector.broadcast %cst_27 : f32 to vector<256x128xf32>
    %40 = arith.mulf %39, %36 : vector<256x128xf32>
    %41 = arith.select %38, %36, %40 : vector<256x128xi1>, vector<256x128xf32>
    %42 = arith.truncf %41 : vector<256x128xf32> to vector<256x128xbf16>
    %c0_28 = arith.constant 0 : index
    %c0_29 = arith.constant 0 : index
    %43 = vector.load %arg10[%c0_28, %c0_29] : memref<128x128xbf16, #tpu.memory_space<vmem>>, vector<128x128xbf16>
    %c0_30 = arith.constant 0 : index
    %c0_31 = arith.constant 0 : index
    %44 = vector.load %arg11[%c0_30, %c0_31] : memref<1x128xf32, #tpu.memory_space<vmem>>, vector<1x128xf32>
    %cst_32 = arith.constant dense<0.000000e+00> : vector<256x128xf32>
    %45 = tpu.matmul %42, %43, %cst_32 {dimension_numbers = #tpu.dot_dimension_numbers<[1], [0], [0], [1], [0, 0, 1, 1], [], []>} : vector<256x128xbf16>, vector<128x128xbf16>, vector<256x128xf32> -> vector<256x128xf32>
    %46 = vector.broadcast %44 : vector<1x128xf32> to vector<256x128xf32>
    %47 = arith.addf %45, %46 : vector<256x128xf32>
    %cst_33 = arith.constant 0.000000e+00 : f32
    %48 = vector.broadcast %cst_33 : f32 to vector<256x128xf32>
    %49 = arith.cmpf ogt, %47, %48 : vector<256x128xf32>
    %cst_34 = arith.constant 0.00999999977 : f32
    %50 = vector.broadcast %cst_34 : f32 to vector<256x128xf32>
    %51 = arith.mulf %50, %47 : vector<256x128xf32>
    %52 = arith.select %49, %47, %51 : vector<256x128xi1>, vector<256x128xf32>
    %53 = arith.truncf %52 : vector<256x128xf32> to vector<256x128xbf16>
    %c0_35 = arith.constant 0 : index
    %c0_36 = arith.constant 0 : index
    %54 = vector.load %arg12[%c0_35, %c0_36] : memref<128x128xbf16, #tpu.memory_space<vmem>>, vector<128x128xbf16>
    %c0_37 = arith.constant 0 : index
    %c0_38 = arith.constant 0 : index
    %55 = vector.load %arg13[%c0_37, %c0_38] : memref<1x128xf32, #tpu.memory_space<vmem>>, vector<1x128xf32>
    %cst_39 = arith.constant dense<0.000000e+00> : vector<256x128xf32>
    %56 = tpu.matmul %53, %54, %cst_39 {dimension_numbers = #tpu.dot_dimension_numbers<[1], [0], [0], [1], [0, 0, 1, 1], [], []>} : vector<256x128xbf16>, vector<128x128xbf16>, vector<256x128xf32> -> vector<256x128xf32>
    %57 = vector.broadcast %55 : vector<1x128xf32> to vector<256x128xf32>
    %58 = arith.addf %56, %57 : vector<256x128xf32>
    %59 = arith.truncf %58 : vector<256x128xf32> to vector<256x128xbf16>
    %c0_40 = arith.constant 0 : index
    %c0_41 = arith.constant 0 : index
    %60 = vector.load %arg15[%c0_40, %c0_41] : memref<256x128xbf16, #tpu.memory_space<vmem>>, vector<256x128xbf16>
    tpu.vector_store %arg15[%c0_40, %c0_41], %59 {strides = array<i32>} : memref<256x128xbf16, #tpu.memory_space<vmem>>, vector<256x128xbf16>,
    return
  }
  func.func @transform_0(%arg0: i32) -> (i32, i32) {
    %c0_i32 = arith.constant 0 : i32
    %c0_i32_0 = arith.constant 0 : i32
    return %arg0, %c0_i32 : i32, i32
  }
  func.func @transform_1(%arg0: i32) -> (i32, i32) {
    %c0_i32 = arith.constant 0 : i32
    %c0_i32_0 = arith.constant 0 : i32
    %c0_i32_1 = arith.constant 0 : i32
    return %c0_i32, %c0_i32_0 : i32, i32
  }
  func.func @transform_2(%arg0: i32) -> (i32, i32) {
    %c0_i32 = arith.constant 0 : i32
    %c0_i32_0 = arith.constant 0 : i32
    %c0_i32_1 = arith.constant 0 : i32
    return %c0_i32, %c0_i32_0 : i32, i32
  }
  func.func @transform_3(%arg0: i32) -> (i32, i32) {
    %c0_i32 = arith.constant 0 : i32
    %c0_i32_0 = arith.constant 0 : i32
    %c0_i32_1 = arith.constant 0 : i32
    return %c0_i32, %c0_i32_0 : i32, i32
  }
  func.func @transform_4(%arg0: i32) -> (i32, i32) {
    %c0_i32 = arith.constant 0 : i32
    %c0_i32_0 = arith.constant 0 : i32
    %c0_i32_1 = arith.constant 0 : i32
    return %c0_i32, %c0_i32_0 : i32, i32
  }
  func.func @transform_5(%arg0: i32) -> (i32, i32) {
    %c0_i32 = arith.constant 0 : i32
    %c0_i32_0 = arith.constant 0 : i32
    %c0_i32_1 = arith.constant 0 : i32
    return %c0_i32, %c0_i32_0 : i32, i32
  }
  func.func @transform_6(%arg0: i32) -> (i32, i32) {
    %c0_i32 = arith.constant 0 : i32
    %c0_i32_0 = arith.constant 0 : i32
    %c0_i32_1 = arith.constant 0 : i32
    return %c0_i32, %c0_i32_0 : i32, i32
  }
  func.func @transform_7(%arg0: i32) -> (i32, i32) {
    %c0_i32 = arith.constant 0 : i32
    %c0_i32_0 = arith.constant 0 : i32
    %c0_i32_1 = arith.constant 0 : i32
    return %c0_i32, %c0_i32_0 : i32, i32
  }
  func.func @transform_8(%arg0: i32) -> (i32, i32) {
    %c0_i32 = arith.constant 0 : i32
    %c0_i32_0 = arith.constant 0 : i32
    %c0_i32_1 = arith.constant 0 : i32
    return %c0_i32, %c0_i32_0 : i32, i32
  }
  func.func @transform_9(%arg0: i32) -> (i32, i32) {
    %c0_i32 = arith.constant 0 : i32
    %c0_i32_0 = arith.constant 0 : i32
    %c0_i32_1 = arith.constant 0 : i32
    return %c0_i32, %c0_i32_0 : i32, i32
  }
  func.func @transform_10(%arg0: i32) -> (i32, i32) {
    %c0_i32 = arith.constant 0 : i32
    %c0_i32_0 = arith.constant 0 : i32
    %c0_i32_1 = arith.constant 0 : i32
    return %c0_i32, %c0_i32_0 : i32, i32
  }
  func.func @transform_11(%arg0: i32) -> (i32, i32) {
    %c0_i32 = arith.constant 0 : i32
    %c0_i32_0 = arith.constant 0 : i32
    %c0_i32_1 = arith.constant 0 : i32
    return %c0_i32, %c0_i32_0 : i32, i32
  }
  func.func @transform_12(%arg0: i32) -> (i32, i32) {
    %c0_i32 = arith.constant 0 : i32
    %c0_i32_0 = arith.constant 0 : i32
    %c0_i32_1 = arith.constant 0 : i32
    return %c0_i32, %c0_i32_0 : i32, i32
  }
  func.func @transform_13(%arg0: i32) -> (i32, i32) {
    %c0_i32 = arith.constant 0 : i32
    %c0_i32_0 = arith.constant 0 : i32
    return %arg0, %c0_i32 : i32, i32
  }
  func.func @transform_14(%arg0: i32) -> (i32, i32) {
    %c0_i32 = arith.constant 0 : i32
    %c0_i32_0 = arith.constant 0 : i32
    return %arg0, %c0_i32 : i32, i32
  }
}

module attributes {stable_mosaic.version = 11 : i64} {
  func.func @_ae_fused_kernel(%arg0: i32, %arg1: memref<256x128xf32, #tpu.memory_space<vmem>>, %arg2: memref<128x128xbf16, #tpu.memory_space<vmem>>, %arg3: memref<1x128xf32, #tpu.memory_space<vmem>>, %arg4: memref<128x128xbf16, #tpu.memory_space<vmem>>, %arg5: memref<1x128xf32, #tpu.memory_space<vmem>>, %arg6: memref<128x128xbf16, #tpu.memory_space<vmem>>, %arg7: memref<1x128xf32, #tpu.memory_space<vmem>>, %arg8: memref<128x128xbf16, #tpu.memory_space<vmem>>, %arg9: memref<1x128xf32, #tpu.memory_space<vmem>>, %arg10: memref<128x128xbf16, #tpu.memory_space<vmem>>, %arg11: memref<1x128xf32, #tpu.memory_space<vmem>>, %arg12: memref<128x128xbf16, #tpu.memory_space<vmem>>, %arg13: memref<1x128xf32, #tpu.memory_space<vmem>>, %arg14: memref<256x128xbf16, #tpu.memory_space<vmem>>, %arg15: memref<256x128xbf16, #tpu.memory_space<vmem>>) attributes {dimension_semantics = [#tpu.dimension_semantics<parallel>], iteration_bounds = array<i64: 2>, scalar_prefetch = 0 : i64, scratch_operands = 0 : i64, tpu.core_type = #tpu.core_type<tc>, window_params = [{transform_indices = @transform_0, window_bounds = array<i64: 256, 128>}, {pipeline_mode = #tpu.pipeline_mode<synchronous>, transform_indices = @transform_1, window_bounds = array<i64: 128, 128>}, {pipeline_mode = #tpu.pipeline_mode<synchronous>, transform_indices = @transform_2, window_bounds = array<i64: 1, 128>}, {pipeline_mode = #tpu.pipeline_mode<synchronous>, transform_indices = @transform_3, window_bounds = array<i64: 128, 128>}, {pipeline_mode = #tpu.pipeline_mode<synchronous>, transform_indices = @transform_4, window_bounds = array<i64: 1, 128>}, {pipeline_mode = #tpu.pipeline_mode<synchronous>, transform_indices = @transform_5, window_bounds = array<i64: 128, 128>}, {pipeline_mode = #tpu.pipeline_mode<synchronous>, transform_indices = @transform_6, window_bounds = array<i64: 1, 128>}, {pipeline_mode = #tpu.pipeline_mode<synchronous>, transform_indices = @transform_7, window_bounds = array<i64: 128, 128>}, {pipeline_mode = #tpu.pipeline_mode<synchronous>, transform_indices = @transform_8, window_bounds = array<i64: 1, 128>}, {pipeline_mode = #tpu.pipeline_mode<synchronous>, transform_indices = @transform_9, window_bounds = array<i64: 128, 128>}, {pipeline_mode = #tpu.pipeline_mode<synchronous>, transform_indices = @transform_10, window_bounds = array<i64: 1, 128>}, {pipeline_mode = #tpu.pipeline_mode<synchronous>, transform_indices = @transform_11, window_bounds = array<i64: 128, 128>}, {pipeline_mode = #tpu.pipeline_mode<synchronous>, transform_indices = @transform_12, window_bounds = array<i64: 1, 128>}, {transform_indices = @transform_13, window_bounds = array<i64: 256, 128>}, {transform_indices = @transform_14, window_bounds = array<i64: 256, 128>}]} {
    %c0 = arith.constant 0 : index
    %c0_0 = arith.constant 0 : index
    %0 = vector.load %arg1[%c0, %c0_0] : memref<256x128xf32, #tpu.memory_space<vmem>>, vector<256x128xf32>
    %1 = arith.truncf %0 : vector<256x128xf32> to vector<256x128xbf16>
    %c0_1 = arith.constant 0 : index
    %c0_2 = arith.constant 0 : index
    %2 = vector.load %arg2[%c0_1, %c0_2] : memref<128x128xbf16, #tpu.memory_space<vmem>>, vector<128x128xbf16>
    %c0_3 = arith.constant 0 : index
    %c0_4 = arith.constant 0 : index
    %3 = vector.load %arg3[%c0_3, %c0_4] : memref<1x128xf32, #tpu.memory_space<vmem>>, vector<1x128xf32>
    %cst = arith.constant dense<0.000000e+00> : vector<256x128xf32>
    %4 = tpu.matmul %1, %2, %cst {dimension_numbers = #tpu.dot_dimension_numbers<[1], [0], [0], [1], [0, 0, 1, 1], [], []>} : vector<256x128xbf16>, vector<128x128xbf16>, vector<256x128xf32> -> vector<256x128xf32>
    %5 = vector.broadcast %3 : vector<1x128xf32> to vector<256x128xf32>
    %6 = arith.addf %4, %5 : vector<256x128xf32>
    %cst_5 = arith.constant 0.000000e+00 : f32
    %7 = vector.broadcast %cst_5 : f32 to vector<256x128xf32>
    %8 = arith.cmpf ogt, %6, %7 : vector<256x128xf32>
    %cst_6 = arith.constant 0.00999999977 : f32
    %9 = vector.broadcast %cst_6 : f32 to vector<256x128xf32>
    %10 = arith.mulf %9, %6 : vector<256x128xf32>
    %11 = arith.select %8, %6, %10 : vector<256x128xi1>, vector<256x128xf32>
    %12 = arith.truncf %11 : vector<256x128xf32> to vector<256x128xbf16>
    %c0_7 = arith.constant 0 : index
    %c0_8 = arith.constant 0 : index
    %13 = vector.load %arg4[%c0_7, %c0_8] : memref<128x128xbf16, #tpu.memory_space<vmem>>, vector<128x128xbf16>
    %c0_9 = arith.constant 0 : index
    %c0_10 = arith.constant 0 : index
    %14 = vector.load %arg5[%c0_9, %c0_10] : memref<1x128xf32, #tpu.memory_space<vmem>>, vector<1x128xf32>
    %cst_11 = arith.constant dense<0.000000e+00> : vector<256x128xf32>
    %15 = tpu.matmul %12, %13, %cst_11 {dimension_numbers = #tpu.dot_dimension_numbers<[1], [0], [0], [1], [0, 0, 1, 1], [], []>} : vector<256x128xbf16>, vector<128x128xbf16>, vector<256x128xf32> -> vector<256x128xf32>
    %16 = vector.broadcast %14 : vector<1x128xf32> to vector<256x128xf32>
    %17 = arith.addf %15, %16 : vector<256x128xf32>
    %cst_12 = arith.constant 0.000000e+00 : f32
    %18 = vector.broadcast %cst_12 : f32 to vector<256x128xf32>
    %19 = arith.cmpf ogt, %17, %18 : vector<256x128xf32>
    %cst_13 = arith.constant 0.00999999977 : f32
    %20 = vector.broadcast %cst_13 : f32 to vector<256x128xf32>
    %21 = arith.mulf %20, %17 : vector<256x128xf32>
    %22 = arith.select %19, %17, %21 : vector<256x128xi1>, vector<256x128xf32>
    %23 = arith.truncf %22 : vector<256x128xf32> to vector<256x128xbf16>
    %c0_14 = arith.constant 0 : index
    %c0_15 = arith.constant 0 : index
    %24 = vector.load %arg6[%c0_14, %c0_15] : memref<128x128xbf16, #tpu.memory_space<vmem>>, vector<128x128xbf16>
    %c0_16 = arith.constant 0 : index
    %c0_17 = arith.constant 0 : index
    %25 = vector.load %arg7[%c0_16, %c0_17] : memref<1x128xf32, #tpu.memory_space<vmem>>, vector<1x128xf32>
    %cst_18 = arith.constant dense<0.000000e+00> : vector<256x128xf32>
    %26 = tpu.matmul %23, %24, %cst_18 {dimension_numbers = #tpu.dot_dimension_numbers<[1], [0], [0], [1], [0, 0, 1, 1], [], []>} : vector<256x128xbf16>, vector<128x128xbf16>, vector<256x128xf32> -> vector<256x128xf32>
    %27 = vector.broadcast %25 : vector<1x128xf32> to vector<256x128xf32>
    %28 = arith.addf %26, %27 : vector<256x128xf32>
    %29 = arith.truncf %28 : vector<256x128xf32> to vector<256x128xbf16>
    %c0_19 = arith.constant 0 : index
    %c0_20 = arith.constant 0 : index
    %30 = vector.load %arg14[%c0_19, %c0_20] : memref<256x128xbf16, #tpu.memory_space<vmem>>, vector<256x128xbf16>
    tpu.vector_store %arg14[%c0_19, %c0_20], %29 {strides = array<i32>} : memref<256x128xbf16, #tpu.memory_space<vmem>>, vector<256x128xbf16>,
    %31 = arith.truncf %28 : vector<256x128xf32> to vector<256x128xbf16>
    %c0_21 = arith.constant 0 : index
    %c0_22 = arith.constant 0 : index
    %32 = vector.load %arg8[%c0_21, %c0_22] : memref<128x128xbf16, #tpu.memory_space<vmem>>, vector<128x128xbf16>
    %c0_23 = arith.constant 0 : index
    %c0_24 = arith.constant 0 : index
    %33 = vector.load %arg9[%c0_23, %c0_24] : memref<1x128xf32, #tpu.memory_space<vmem>>, vector<1x128xf32>
    %cst_25 = arith.constant dense<0.000000e+00> : vector<256x128xf32>
    %34 = tpu.matmul %31, %32, %cst_25 {dimension_numbers = #tpu.dot_dimension_numbers<[1], [0], [0], [1], [0, 0, 1, 1], [], []>} : vector<256x128xbf16>, vector<128x128xbf16>, vector<256x128xf32> -> vector<256x128xf32>
    %35 = vector.broadcast %33 : vector<1x128xf32> to vector<256x128xf32>
    %36 = arith.addf %34, %35 : vector<256x128xf32>
    %cst_26 = arith.constant 0.000000e+00 : f32
    %37 = vector.broadcast %cst_26 : f32 to vector<256x128xf32>
    %38 = arith.cmpf ogt, %36, %37 : vector<256x128xf32>
    %cst_27 = arith.constant 0.00999999977 : f32
    %39 = vector.broadcast %cst_27 : f32 to vector<256x128xf32>
    %40 = arith.mulf %39, %36 : vector<256x128xf32>
    %41 = arith.select %38, %36, %40 : vector<256x128xi1>, vector<256x128xf32>
    %42 = arith.truncf %41 : vector<256x128xf32> to vector<256x128xbf16>
    %c0_28 = arith.constant 0 : index
    %c0_29 = arith.constant 0 : index
    %43 = vector.load %arg10[%c0_28, %c0_29] : memref<128x128xbf16, #tpu.memory_space<vmem>>, vector<128x128xbf16>
    %c0_30 = arith.constant 0 : index
    %c0_31 = arith.constant 0 : index
    %44 = vector.load %arg11[%c0_30, %c0_31] : memref<1x128xf32, #tpu.memory_space<vmem>>, vector<1x128xf32>
    %cst_32 = arith.constant dense<0.000000e+00> : vector<256x128xf32>
    %45 = tpu.matmul %42, %43, %cst_32 {dimension_numbers = #tpu.dot_dimension_numbers<[1], [0], [0], [1], [0, 0, 1, 1], [], []>} : vector<256x128xbf16>, vector<128x128xbf16>, vector<256x128xf32> -> vector<256x128xf32>
    %46 = vector.broadcast %44 : vector<1x128xf32> to vector<256x128xf32>
    %47 = arith.addf %45, %46 : vector<256x128xf32>
    %cst_33 = arith.constant 0.000000e+00 : f32
    %48 = vector.broadcast %cst_33 : f32 to vector<256x128xf32>
    %49 = arith.cmpf ogt, %47, %48 : vector<256x128xf32>
    %cst_34 = arith.constant 0.00999999977 : f32
    %50 = vector.broadcast %cst_34 : f32 to vector<256x128xf32>
    %51 = arith.mulf %50, %47 : vector<256x128xf32>
    %52 = arith.select %49, %47, %51 : vector<256x128xi1>, vector<256x128xf32>
    %53 = arith.truncf %52 : vector<256x128xf32> to vector<256x128xbf16>
    %c0_35 = arith.constant 0 : index
    %c0_36 = arith.constant 0 : index
    %54 = vector.load %arg12[%c0_35, %c0_36] : memref<128x128xbf16, #tpu.memory_space<vmem>>, vector<128x128xbf16>
    %c0_37 = arith.constant 0 : index
    %c0_38 = arith.constant 0 : index
    %55 = vector.load %arg13[%c0_37, %c0_38] : memref<1x128xf32, #tpu.memory_space<vmem>>, vector<1x128xf32>
    %cst_39 = arith.constant dense<0.000000e+00> : vector<256x128xf32>
    %56 = tpu.matmul %53, %54, %cst_39 {dimension_numbers = #tpu.dot_dimension_numbers<[1], [0], [0], [1], [0, 0, 1, 1], [], []>} : vector<256x128xbf16>, vector<128x128xbf16>, vector<256x128xf32> -> vector<256x128xf32>
    %57 = vector.broadcast %55 : vector<1x128xf32> to vector<256x128xf32>
    %58 = arith.addf %56, %57 : vector<256x128xf32>
    %59 = arith.truncf %58 : vector<256x128xf32> to vector<256x128xbf16>
    %c0_40 = arith.constant 0 : index
    %c0_41 = arith.constant 0 : index
    %60 = vector.load %arg15[%c0_40, %c0_41] : memref<256x128xbf16, #tpu.memory_space<vmem>>, vector<256x128xbf16>
    tpu.vector_store %arg15[%c0_40, %c0_41], %59 {strides = array<i32>} : memref<256x128xbf16, #tpu.memory_space<vmem>>, vector<256x128xbf16>,
    return
  }
  func.func @transform_0(%arg0: i32) -> (i32, i32) {
    %c0_i32 = arith.constant 0 : i32
    %c0_i32_0 = arith.constant 0 : i32
    return %arg0, %c0_i32 : i32, i32
  }
  func.func @transform_1(%arg0: i32) -> (i32, i32) {
    %c0_i32 = arith.constant 0 : i32
    %c0_i32_0 = arith.constant 0 : i32
    %c0_i32_1 = arith.constant 0 : i32
    return %c0_i32, %c0_i32_0 : i32, i32
  }
  func.func @transform_2(%arg0: i32) -> (i32, i32) {
    %c0_i32 = arith.constant 0 : i32
    %c0_i32_0 = arith.constant 0 : i32
    %c0_i32_1 = arith.constant 0 : i32
    return %c0_i32, %c0_i32_0 : i32, i32
  }
  func.func @transform_3(%arg0: i32) -> (i32, i32) {
    %c0_i32 = arith.constant 0 : i32
    %c0_i32_0 = arith.constant 0 : i32
    %c0_i32_1 = arith.constant 0 : i32
    return %c0_i32, %c0_i32_0 : i32, i32
  }
  func.func @transform_4(%arg0: i32) -> (i32, i32) {
    %c0_i32 = arith.constant 0 : i32
    %c0_i32_0 = arith.constant 0 : i32
    %c0_i32_1 = arith.constant 0 : i32
    return %c0_i32, %c0_i32_0 : i32, i32
  }
  func.func @transform_5(%arg0: i32) -> (i32, i32) {
    %c0_i32 = arith.constant 0 : i32
    %c0_i32_0 = arith.constant 0 : i32
    %c0_i32_1 = arith.constant 0 : i32
    return %c0_i32, %c0_i32_0 : i32, i32
  }
  func.func @transform_6(%arg0: i32) -> (i32, i32) {
    %c0_i32 = arith.constant 0 : i32
    %c0_i32_0 = arith.constant 0 : i32
    %c0_i32_1 = arith.constant 0 : i32
    return %c0_i32, %c0_i32_0 : i32, i32
  }
  func.func @transform_7(%arg0: i32) -> (i32, i32) {
    %c0_i32 = arith.constant 0 : i32
    %c0_i32_0 = arith.constant 0 : i32
    %c0_i32_1 = arith.constant 0 : i32
    return %c0_i32, %c0_i32_0 : i32, i32
  }
  func.func @transform_8(%arg0: i32) -> (i32, i32) {
    %c0_i32 = arith.constant 0 : i32
    %c0_i32_0 = arith.constant 0 : i32
    %c0_i32_1 = arith.constant 0 : i32
    return %c0_i32, %c0_i32_0 : i32, i32
  }
  func.func @transform_9(%arg0: i32) -> (i32, i32) {
    %c0_i32 = arith.constant 0 : i32
    %c0_i32_0 = arith.constant 0 : i32
    %c0_i32_1 = arith.constant 0 : i32
    return %c0_i32, %c0_i32_0 : i32, i32
  }
  func.func @transform_10(%arg0: i32) -> (i32, i32) {
    %c0_i32 = arith.constant 0 : i32
    %c0_i32_0 = arith.constant 0 : i32
    %c0_i32_1 = arith.constant 0 : i32
    return %c0_i32, %c0_i32_0 : i32, i32
  }
  func.func @transform_11(%arg0: i32) -> (i32, i32) {
    %c0_i32 = arith.constant 0 : i32
    %c0_i32_0 = arith.constant 0 : i32
    %c0_i32_1 = arith.constant 0 : i32
    return %c0_i32, %c0_i32_0 : i32, i32
  }
  func.func @transform_12(%arg0: i32) -> (i32, i32) {
    %c0_i32 = arith.constant 0 : i32
    %c0_i32_0 = arith.constant 0 : i32
    %c0_i32_1 = arith.constant 0 : i32
    return %c0_i32, %c0_i32_0 : i32, i32
  }
  func.func @transform_13(%arg0: i32) -> (i32, i32) {
    %c0_i32 = arith.constant 0 : i32
    %c0_i32_0 = arith.constant 0 : i32
    return %arg0, %c0_i32 : i32, i32
  }
  func.func @transform_14(%arg0: i32) -> (i32, i32) {
    %c0_i32 = arith.constant 0 : i32
    %c0_i32_0 = arith.constant 0 : i32
    return %arg0, %c0_i32 : i32, i32
  }
}

</mosaic_0001>

<llo_original>
// kernel: _forward_impl.1
$region0: #{_forward_impl.1}
  #allocation0 [shape = 'u32[]', space=smem, size = 0x4, offset = 0x4, fixed_abs, tag = 'smem constant byte address 0x4 - core index']
  #allocation1 [shape = 'u32[144,128]{1,0:T(1,128)}', space=vmem, size = 0x12000, scoped, tag = 'internal scratch']
  %s0 = inlined_call_operand.hbm [shape: f32[512,128], index: 0, kind: input, shape index: {}]
  %s1 = inlined_call_operand.hbm [shape: bf16[128,128], index: 1, kind: input, shape index: {}]
  %s2 = inlined_call_operand.vmem [shape: f32[1,128], index: 2, kind: input, shape index: {}]
  %s3 = inlined_call_operand.hbm [shape: bf16[128,128], index: 3, kind: input, shape index: {}]
  %s4 = inlined_call_operand.vmem [shape: f32[1,128], index: 4, kind: input, shape index: {}]
  %s5 = inlined_call_operand.hbm [shape: bf16[128,128], index: 5, kind: input, shape index: {}]
  %s6 = inlined_call_operand.vmem [shape: f32[1,128], index: 6, kind: input, shape index: {}]
  %s7 = inlined_call_operand.hbm [shape: bf16[128,128], index: 7, kind: input, shape index: {}]
  %s8 = inlined_call_operand.vmem [shape: f32[1,128], index: 8, kind: input, shape index: {}]
  %s9 = inlined_call_operand.hbm [shape: bf16[128,128], index: 9, kind: input, shape index: {}]
  %s10 = inlined_call_operand.vmem [shape: f32[1,128], index: 10, kind: input, shape index: {}]
  %s11 = inlined_call_operand.hbm [shape: bf16[128,128], index: 11, kind: input, shape index: {}]
  %s12 = inlined_call_operand.vmem [shape: f32[1,128], index: 12, kind: input, shape index: {}]
  %s13 = inlined_call_operand.vmem [shape: bf16[512,128], index: 13, kind: output, shape index: {0}]
  %s14 = inlined_call_operand.hbm [shape: bf16[512,128], index: 14, kind: output, shape index: {1}]
  %15 = xla_tuple %s13, %s14
  %s16 = sld [smem:[#allocation0]]
  $region121: #{_forward_impl.1} parent=0
    _
  %s18 = ssub.s32 1, %s16
  %s19 = scalar_select 0, %s18, %s16
  $region1: #{_forward_impl.1} parent=0
    #allocation2 [shape = 'u8[262144]{0}', space=vmem, size = 0x40000, scoped, tag = 'input window, operand 0']
    #allocation3 [shape = 's32[2]{0}', space=sflag, size = 0x8, scoped, tag = 'scoped memory for _forward_impl.1']
    #allocation4 [shape = 's32[2]{0}', space=sflag, size = 0x8, scoped, tag = 'scoped memory for _forward_impl.1']
    #allocation5 [shape = 'u8[32768]{0}', space=vmem, size = 0x8000, scoped, tag = 'input window, operand 1, single buffered']
    #allocation6 [shape = 's32[1]{0}', space=sflag, size = 0x4, scoped, tag = 'scoped memory for _forward_impl.1']
    #allocation7 [shape = 'u8[32768]{0}', space=vmem, size = 0x8000, scoped, tag = 'input window, operand 3, single buffered']
    #allocation8 [shape = 'u8[32768]{0}', space=vmem, size = 0x8000, scoped, tag = 'input window, operand 5, single buffered']
    #allocation9 [shape = 's32[1]{0}', space=sflag, size = 0x4, scoped, tag = 'scoped memory for _forward_impl.1']
    #allocation10 [shape = 'u8[32768]{0}', space=vmem, size = 0x8000, scoped, tag = 'input window, operand 7, single buffered']
    #allocation11 [shape = 'u8[32768]{0}', space=vmem, size = 0x8000, scoped, tag = 'input window, operand 9, single buffered']
    #allocation12 [shape = 's32[1]{0}', space=sflag, size = 0x4, scoped, tag = 'scoped memory for _forward_impl.1']
    #allocation13 [shape = 'u8[32768]{0}', space=vmem, size = 0x8000, scoped, tag = 'input window, operand 11, single buffered']
    #allocation14 [shape = 'u8[131072]{0}', space=vmem, size = 0x20000, scoped, tag = 'output window, operand 1']
    %20 = vsyncpa [#allocation3], 0
    %s21 = scalar_lea.sflag [#allocation3], 1
    %22 = vsyncpa %s21, 0
    %23 = vsyncpa [#allocation6], 0
    %24 = vsyncpa [#allocation9], 0
    %25 = vsyncpa [#allocation12], 0
    %26 = vsyncpa [#allocation4], 0
    %s27 = scalar_lea.sflag [#allocation4], 1
    %28 = vsyncpa %s27, 0
    loop: start=0, step=1, limit=4
    $region2: #{_forward_impl.1} parent=1 // loop_pre_header
      _
    $region3: #{_forward_impl.1} parent=1 // loop_header
      %s30 = sphi 0, %s34
      %p31 = scmp.ge.s32.totalorder %s30, 4
      %s40 = sphi 0, %s42
      %s43 = sphi 0, %s40
      %s44 = sphi 0, %s43
      %s60 = sphi 0, %s44
      %s64 = sphi 0, %s64
      %s66 = sphi 0, %s64
      %s67 = sphi 0, %s66
      %s81 = sphi 0, %s67
      %s85 = sphi 0, %s85
      %s87 = sphi 0, %s85
      %s88 = sphi 0, %s87
      %s102 = sphi 0, %s88
      %s106 = sphi 0, %s106
      %s108 = sphi 0, %s106
      %s109 = sphi 0, %s108
      %s123 = sphi 0, %s109
      %s127 = sphi 0, %s127
      %s129 = sphi 0, %s127
      %s130 = sphi 0, %s129
      %s144 = sphi 0, %s130
      %s148 = sphi 0, %s148
      %s150 = sphi 0, %s148
      %s151 = sphi 0, %s150
      %s165 = sphi 0, %s151
      %s169 = sphi 0, %s169
      %s171 = sphi 0, %s169
      %s172 = sphi 0, %s171
      %s186 = sphi 0, %s172
      %s190 = sphi 0, %s190
      %s192 = sphi 0, %s190
      %s193 = sphi 0, %s192
      %s207 = sphi 0, %s193
      %s211 = sphi 0, %s211
      %s213 = sphi 0, %s211
      %s214 = sphi 0, %s213
      %s228 = sphi 0, %s214
      %s232 = sphi 0, %s232
      %s234 = sphi 0, %s232
      %s235 = sphi 0, %s234
      %s249 = sphi 0, %s235
      %s253 = sphi 0, %s253
      %s255 = sphi 0, %s253
      %s256 = sphi 0, %s255
      %s270 = sphi 0, %s256
      %s274 = sphi 0, %s274
      %s276 = sphi 0, %s274
      %s277 = sphi 0, %s276
      %s291 = sphi 0, %s277
      %s295 = sphi 0, %s295
      %s297 = sphi 0, %s295
      %s298 = sphi 0, %s297
      %s312 = sphi 0, %s298
      %s318 = sphi 0, %s320
      %s321 = sphi 0, %s318
      %s322 = sphi 0, %s321
      %s338 = sphi 0, %s322
      %s344 = sphi 0, %s346
      %s347 = sphi 0, %s344
      %s348 = sphi 0, %s347
      %s364 = sphi 0, %s348
    $region4: #{_forward_impl.1} parent=1 // loop_header_branch
      %33 = sbr.rel (%p31) target = $region8
    $region5: #{_forward_impl.1} parent=1 // loop_body
      %s35 = ssub.s32 %s30, 1
      %s36 = ssub.s32 %s30, 2
      %s37 = sadd.s32 %s30, 1
      %s38 = ssub.s32 %s30, %s37
      %p39 = scmp.eq.s32.totalorder %s38, 0
      %s41 = sadd.s32 %s40, 1
      %s42 = scalar_select %p39, %s40, %s41
      %p45 = pneg %p39
      %p46 = scmp.eq.s32.totalorder %s30, 1
      %p47 = por %p45, %p46
      %p48 = scmp.ne.s32.totalorder %s40, %s43
      %p49 = scmp.eq.s32.totalorder %s30, 0
      %p50 = por %p48, %p49
      %p51 = scmp.ne.s32.totalorder %s40, %s43
      %p52 = scmp.eq.s32.totalorder %s35, 1
      %p53 = por %p51, %p52
      %p54 = scmp.ne.s32.totalorder %s43, %s44
      %p55 = scmp.eq.s32.totalorder %s35, 0
      %p56 = por %p54, %p55
      %p57 = scmp.ne.s32.totalorder %s43, %s44
      %p58 = scmp.eq.s32.totalorder %s36, 1
      %p59 = por %p57, %p58
      %p61 = scmp.ne.s32.totalorder %s44, %s60
      %p62 = scmp.eq.s32.totalorder %s36, 0
      %p63 = por %p61, %p62
      %s65 = sadd.s32 %s64, 1
      %p68 = scmp.eq.s32.totalorder %s30, 1
      %p69 = scmp.ne.s32.totalorder %s64, %s66
      %p70 = scmp.eq.s32.totalorder %s30, 0
      %p71 = por %p69, %p70
      %p72 = scmp.ne.s32.totalorder %s64, %s66
      %p73 = scmp.eq.s32.totalorder %s35, 1
      %p74 = por %p72, %p73
      %p75 = scmp.ne.s32.totalorder %s66, %s67
      %p76 = scmp.eq.s32.totalorder %s35, 0
      %p77 = por %p75, %p76
      %p78 = scmp.ne.s32.totalorder %s66, %s67
      %p79 = scmp.eq.s32.totalorder %s36, 1
      %p80 = por %p78, %p79
      %p82 = scmp.ne.s32.totalorder %s67, %s81
      %p83 = scmp.eq.s32.totalorder %s36, 0
      %p84 = por %p82, %p83
      %s86 = sadd.s32 %s85, 1
      %p89 = scmp.eq.s32.totalorder %s30, 1
      %p90 = scmp.ne.s32.totalorder %s85, %s87
      %p91 = scmp.eq.s32.totalorder %s30, 0
      %p92 = por %p90, %p91
      %p93 = scmp.ne.s32.totalorder %s85, %s87
      %p94 = scmp.eq.s32.totalorder %s35, 1
      %p95 = por %p93, %p94
      %p96 = scmp.ne.s32.totalorder %s87, %s88
      %p97 = scmp.eq.s32.totalorder %s35, 0
      %p98 = por %p96, %p97
      %p99 = scmp.ne.s32.totalorder %s87, %s88
      %p100 = scmp.eq.s32.totalorder %s36, 1
      %p101 = por %p99, %p100
      %p103 = scmp.ne.s32.totalorder %s88, %s102
      %p104 = scmp.eq.s32.totalorder %s36, 0
      %p105 = por %p103, %p104
      %s107 = sadd.s32 %s106, 1
      %p110 = scmp.eq.s32.totalorder %s30, 1
      %p111 = scmp.ne.s32.totalorder %s106, %s108
      %p112 = scmp.eq.s32.totalorder %s30, 0
      %p113 = por %p111, %p112
      %p114 = scmp.ne.s32.totalorder %s106, %s108
      %p115 = scmp.eq.s32.totalorder %s35, 1
      %p116 = por %p114, %p115
      %p117 = scmp.ne.s32.totalorder %s108, %s109
      %p118 = scmp.eq.s32.totalorder %s35, 0
      %p119 = por %p117, %p118
      %p120 = scmp.ne.s32.totalorder %s108, %s109
      %p121 = scmp.eq.s32.totalorder %s36, 1
      %p122 = por %p120, %p121
      %p124 = scmp.ne.s32.totalorder %s109, %s123
      %p125 = scmp.eq.s32.totalorder %s36, 0
      %p126 = por %p124, %p125
      %s128 = sadd.s32 %s127, 1
      %p131 = scmp.eq.s32.totalorder %s30, 1
      %p132 = scmp.ne.s32.totalorder %s127, %s129
      %p133 = scmp.eq.s32.totalorder %s30, 0
      %p134 = por %p132, %p133
      %p135 = scmp.ne.s32.totalorder %s127, %s129
      %p136 = scmp.eq.s32.totalorder %s35, 1
      %p137 = por %p135, %p136
      %p138 = scmp.ne.s32.totalorder %s129, %s130
      %p139 = scmp.eq.s32.totalorder %s35, 0
      %p140 = por %p138, %p139
      %p141 = scmp.ne.s32.totalorder %s129, %s130
      %p142 = scmp.eq.s32.totalorder %s36, 1
      %p143 = por %p141, %p142
      %p145 = scmp.ne.s32.totalorder %s130, %s144
      %p146 = scmp.eq.s32.totalorder %s36, 0
      %p147 = por %p145, %p146
      %s149 = sadd.s32 %s148, 1
      %p152 = scmp.eq.s32.totalorder %s30, 1
      %p153 = scmp.ne.s32.totalorder %s148, %s150
      %p154 = scmp.eq.s32.totalorder %s30, 0
      %p155 = por %p153, %p154
      %p156 = scmp.ne.s32.totalorder %s148, %s150
      %p157 = scmp.eq.s32.totalorder %s35, 1
      %p158 = por %p156, %p157
      %p159 = scmp.ne.s32.totalorder %s150, %s151
      %p160 = scmp.eq.s32.totalorder %s35, 0
      %p161 = por %p159, %p160
      %p162 = scmp.ne.s32.totalorder %s150, %s151
      %p163 = scmp.eq.s32.totalorder %s36, 1
      %p164 = por %p162, %p163
      %p166 = scmp.ne.s32.totalorder %s151, %s165
      %p167 = scmp.eq.s32.totalorder %s36, 0
      %p168 = por %p166, %p167
      %s170 = sadd.s32 %s169, 1
      %p173 = scmp.eq.s32.totalorder %s30, 1
      %p174 = scmp.ne.s32.totalorder %s169, %s171
      %p175 = scmp.eq.s32.totalorder %s30, 0
      %p176 = por %p174, %p175
      %p177 = scmp.ne.s32.totalorder %s169, %s171
      %p178 = scmp.eq.s32.totalorder %s35, 1
      %p179 = por %p177, %p178
      %p180 = scmp.ne.s32.totalorder %s171, %s172
      %p181 = scmp.eq.s32.totalorder %s35, 0
      %p182 = por %p180, %p181
      %p183 = scmp.ne.s32.totalorder %s171, %s172
      %p184 = scmp.eq.s32.totalorder %s36, 1
      %p185 = por %p183, %p184
      %p187 = scmp.ne.s32.totalorder %s172, %s186
      %p188 = scmp.eq.s32.totalorder %s36, 0
      %p189 = por %p187, %p188
      %s191 = sadd.s32 %s190, 1
      %p194 = scmp.eq.s32.totalorder %s30, 1
      %p195 = scmp.ne.s32.totalorder %s190, %s192
      %p196 = scmp.eq.s32.totalorder %s30, 0
      %p197 = por %p195, %p196
      %p198 = scmp.ne.s32.totalorder %s190, %s192
      %p199 = scmp.eq.s32.totalorder %s35, 1
      %p200 = por %p198, %p199
      %p201 = scmp.ne.s32.totalorder %s192, %s193
      %p202 = scmp.eq.s32.totalorder %s35, 0
      %p203 = por %p201, %p202
      %p204 = scmp.ne.s32.totalorder %s192, %s193
      %p205 = scmp.eq.s32.totalorder %s36, 1
      %p206 = por %p204, %p205
      %p208 = scmp.ne.s32.totalorder %s193, %s207
      %p209 = scmp.eq.s32.totalorder %s36, 0
      %p210 = por %p208, %p209
      %s212 = sadd.s32 %s211, 1
      %p215 = scmp.eq.s32.totalorder %s30, 1
      %p216 = scmp.ne.s32.totalorder %s211, %s213
      %p217 = scmp.eq.s32.totalorder %s30, 0
      %p218 = por %p216, %p217
      %p219 = scmp.ne.s32.totalorder %s211, %s213
      %p220 = scmp.eq.s32.totalorder %s35, 1
      %p221 = por %p219, %p220
      %p222 = scmp.ne.s32.totalorder %s213, %s214
      %p223 = scmp.eq.s32.totalorder %s35, 0
      %p224 = por %p222, %p223
      %p225 = scmp.ne.s32.totalorder %s213, %s214
      %p226 = scmp.eq.s32.totalorder %s36, 1
      %p227 = por %p225, %p226
      %p229 = scmp.ne.s32.totalorder %s214, %s228
      %p230 = scmp.eq.s32.totalorder %s36, 0
      %p231 = por %p229, %p230
      %s233 = sadd.s32 %s232, 1
      %p236 = scmp.eq.s32.totalorder %s30, 1
      %p237 = scmp.ne.s32.totalorder %s232, %s234
      %p238 = scmp.eq.s32.totalorder %s30, 0
      %p239 = por %p237, %p238
      %p240 = scmp.ne.s32.totalorder %s232, %s234
      %p241 = scmp.eq.s32.totalorder %s35, 1
      %p242 = por %p240, %p241
      %p243 = scmp.ne.s32.totalorder %s234, %s235
      %p244 = scmp.eq.s32.totalorder %s35, 0
      %p245 = por %p243, %p244
      %p246 = scmp.ne.s32.totalorder %s234, %s235
      %p247 = scmp.eq.s32.totalorder %s36, 1
      %p248 = por %p246, %p247
      %p250 = scmp.ne.s32.totalorder %s235, %s249
      %p251 = scmp.eq.s32.totalorder %s36, 0
      %p252 = por %p250, %p251
      %s254 = sadd.s32 %s253, 1
      %p257 = scmp.eq.s32.totalorder %s30, 1
      %p258 = scmp.ne.s32.totalorder %s253, %s255
      %p259 = scmp.eq.s32.totalorder %s30, 0
      %p260 = por %p258, %p259
      %p261 = scmp.ne.s32.totalorder %s253, %s255
      %p262 = scmp.eq.s32.totalorder %s35, 1
      %p263 = por %p261, %p262
      %p264 = scmp.ne.s32.totalorder %s255, %s256
      %p265 = scmp.eq.s32.totalorder %s35, 0
      %p266 = por %p264, %p265
      %p267 = scmp.ne.s32.totalorder %s255, %s256
      %p268 = scmp.eq.s32.totalorder %s36, 1
      %p269 = por %p267, %p268
      %p271 = scmp.ne.s32.totalorder %s256, %s270
      %p272 = scmp.eq.s32.totalorder %s36, 0
      %p273 = por %p271, %p272
      %s275 = sadd.s32 %s274, 1
      %p278 = scmp.eq.s32.totalorder %s30, 1
      %p279 = scmp.ne.s32.totalorder %s274, %s276
      %p280 = scmp.eq.s32.totalorder %s30, 0
      %p281 = por %p279, %p280
      %p282 = scmp.ne.s32.totalorder %s274, %s276
      %p283 = scmp.eq.s32.totalorder %s35, 1
      %p284 = por %p282, %p283
      %p285 = scmp.ne.s32.totalorder %s276, %s277
      %p286 = scmp.eq.s32.totalorder %s35, 0
      %p287 = por %p285, %p286
      %p288 = scmp.ne.s32.totalorder %s276, %s277
      %p289 = scmp.eq.s32.totalorder %s36, 1
      %p290 = por %p288, %p289
      %p292 = scmp.ne.s32.totalorder %s277, %s291
      %p293 = scmp.eq.s32.totalorder %s36, 0
      %p294 = por %p292, %p293
      %s296 = sadd.s32 %s295, 1
      %p299 = scmp.eq.s32.totalorder %s30, 1
      %p300 = scmp.ne.s32.totalorder %s295, %s297
      %p301 = scmp.eq.s32.totalorder %s30, 0
      %p302 = por %p300, %p301
      %p303 = scmp.ne.s32.totalorder %s295, %s297
      %p304 = scmp.eq.s32.totalorder %s35, 1
      %p305 = por %p303, %p304
      %p306 = scmp.ne.s32.totalorder %s297, %s298
      %p307 = scmp.eq.s32.totalorder %s35, 0
      %p308 = por %p306, %p307
      %p309 = scmp.ne.s32.totalorder %s297, %s298
      %p310 = scmp.eq.s32.totalorder %s36, 1
      %p311 = por %p309, %p310
      %p313 = scmp.ne.s32.totalorder %s298, %s312
      %p314 = scmp.eq.s32.totalorder %s36, 0
      %p315 = por %p313, %p314
      %s316 = ssub.s32 %s30, %s37
      %p317 = scmp.eq.s32.totalorder %s316, 0
      %s319 = sadd.s32 %s318, 1
      %s320 = scalar_select %p317, %s318, %s319
      %p323 = pneg %p317
      %p324 = scmp.eq.s32.totalorder %s30, 1
      %p325 = por %p323, %p324
      %p326 = scmp.ne.s32.totalorder %s318, %s321
      %p327 = scmp.eq.s32.totalorder %s30, 0
      %p328 = por %p326, %p327
      %p329 = scmp.ne.s32.totalorder %s318, %s321
      %p330 = scmp.eq.s32.totalorder %s35, 1
      %p331 = por %p329, %p330
      %p332 = scmp.ne.s32.totalorder %s321, %s322
      %p333 = scmp.eq.s32.totalorder %s35, 0
      %p334 = por %p332, %p333
      %p335 = scmp.ne.s32.totalorder %s321, %s322
      %p336 = scmp.eq.s32.totalorder %s36, 1
      %p337 = por %p335, %p336
      %p339 = scmp.ne.s32.totalorder %s322, %s338
      %p340 = scmp.eq.s32.totalorder %s36, 0
      %p341 = por %p339, %p340
      %s342 = ssub.s32 %s30, %s37
      %p343 = scmp.eq.s32.totalorder %s342, 0
      %s345 = sadd.s32 %s344, 1
      %s346 = scalar_select %p343, %s344, %s345
      %p349 = pneg %p343
      %p350 = scmp.eq.s32.totalorder %s30, 1
      %p351 = por %p349, %p350
      %p352 = scmp.ne.s32.totalorder %s344, %s347
      %p353 = scmp.eq.s32.totalorder %s30, 0
      %p354 = por %p352, %p353
      %p355 = scmp.ne.s32.totalorder %s344, %s347
      %p356 = scmp.eq.s32.totalorder %s35, 1
      %p357 = por %p355, %p356
      %p358 = scmp.ne.s32.totalorder %s347, %s348
      %p359 = scmp.eq.s32.totalorder %s35, 0
      %p360 = por %p358, %p359
      %p361 = scmp.ne.s32.totalorder %s347, %s348
      %p362 = scmp.eq.s32.totalorder %s36, 1
      %p363 = por %p361, %p362
      %p365 = scmp.ne.s32.totalorder %s348, %s364
      %p366 = scmp.eq.s32.totalorder %s36, 0
      %p367 = por %p365, %p366
      %p368 = scmp.le.s32.totalorder 1, %s30
      %p369 = scmp.lt.s32.totalorder %s30, 3
      %p370 = pnand %p368, %p369
      %p371 = pneg %p370
      // Predicated region
      $region9: #{_forward_impl.1} parent=5 // pred_check
        _
      $region10: #{_forward_impl.1} parent=5 // pred_check_branch
        %373 = sbr.rel (%p370) target = $region12
      $region11: #{_forward_impl.1} parent=5 // pred_region
        %s374 = ssub.s32 %s30, 1
        // Predicated region
        $region13: #{_forward_impl.1} parent=11 // pred_check
          %p375 = pneg %p77
        $region14: #{_forward_impl.1} parent=11 // pred_check_branch
          %377 = sbr.rel (%p375) target = $region16
        $region15: #{_forward_impl.1} parent=11 // pred_region
          %s379 = ssub.s32 1024, 1024
          %380 = vsyncadd [#allocation6], %s379
          %s381 = sshll.u32 [#allocation5], 4
          %s382 = int_to_ptr.vmem [resolvable:$true] %s381
          %387 = dma.hbm_to_vmem [thread:$0]  %s1, 1024, %s382, [#allocation6], 64, 64, 4
        $region16: #{_forward_impl.1} parent=11 // pred_fallthru
          _
        // Predicated region
        $region17: #{_forward_impl.1} parent=11 // pred_check
          %p388 = pneg %p98
        $region18: #{_forward_impl.1} parent=11 // pred_check_branch
          %390 = sbr.rel (%p388) target = $region20
        $region19: #{_forward_impl.1} parent=11 // pred_region
          _
        $region20: #{_forward_impl.1} parent=11 // pred_fallthru
          _
        // Predicated region
        $region21: #{_forward_impl.1} parent=11 // pred_check
          %p391 = pneg %p119
        $region22: #{_forward_impl.1} parent=11 // pred_check_branch
          %393 = sbr.rel (%p391) target = $region24
        $region23: #{_forward_impl.1} parent=11 // pred_region
          %s395 = ssub.s32 1024, 1024
          %396 = vsyncadd [#allocation6], %s395
          %s397 = sshll.u32 [#allocation7], 4
          %s398 = int_to_ptr.vmem [resolvable:$true] %s397
          %403 = dma.hbm_to_vmem [thread:$0]  %s3, 1024, %s398, [#allocation6], 64, 64, 4
        $region24: #{_forward_impl.1} parent=11 // pred_fallthru
          _
        // Predicated region
        $region25: #{_forward_impl.1} parent=11 // pred_check
          %p404 = pneg %p140
        $region26: #{_forward_impl.1} parent=11 // pred_check_branch
          %406 = sbr.rel (%p404) target = $region28
        $region27: #{_forward_impl.1} parent=11 // pred_region
          _
        $region28: #{_forward_impl.1} parent=11 // pred_fallthru
          _
        // Predicated region
        $region29: #{_forward_impl.1} parent=11 // pred_check
          %p407 = pneg %p161
        $region30: #{_forward_impl.1} parent=11 // pred_check_branch
          %409 = sbr.rel (%p407) target = $region32
        $region31: #{_forward_impl.1} parent=11 // pred_region
          %s411 = ssub.s32 1024, 1024
          %412 = vsyncadd [#allocation9], %s411
          %s413 = sshll.u32 [#allocation8], 4
          %s414 = int_to_ptr.vmem [resolvable:$true] %s413
          %419 = dma.hbm_to_vmem [thread:$0]  %s5, 1024, %s414, [#allocation9], 64, 64, 4
        $region32: #{_forward_impl.1} parent=11 // pred_fallthru
          _
        // Predicated region
        $region33: #{_forward_impl.1} parent=11 // pred_check
          %p420 = pneg %p182
        $region34: #{_forward_impl.1} parent=11 // pred_check_branch
          %422 = sbr.rel (%p420) target = $region36
        $region35: #{_forward_impl.1} parent=11 // pred_region
          _
        $region36: #{_forward_impl.1} parent=11 // pred_fallthru
          _
        // Predicated region
        $region37: #{_forward_impl.1} parent=11 // pred_check
          %p423 = pneg %p203
        $region38: #{_forward_impl.1} parent=11 // pred_check_branch
          %425 = sbr.rel (%p423) target = $region40
        $region39: #{_forward_impl.1} parent=11 // pred_region
          %s427 = ssub.s32 1024, 1024
          %428 = vsyncadd [#allocation9], %s427
          %s429 = sshll.u32 [#allocation10], 4
          %s430 = int_to_ptr.vmem [resolvable:$true] %s429
          %435 = dma.hbm_to_vmem [thread:$0]  %s7, 1024, %s430, [#allocation9], 64, 64, 4
        $region40: #{_forward_impl.1} parent=11 // pred_fallthru
          _
        // Predicated region
        $region41: #{_forward_impl.1} parent=11 // pred_check
          %p436 = pneg %p224
        $region42: #{_forward_impl.1} parent=11 // pred_check_branch
          %438 = sbr.rel (%p436) target = $region44
        $region43: #{_forward_impl.1} parent=11 // pred_region
          _
        $region44: #{_forward_impl.1} parent=11 // pred_fallthru
          _
        // Predicated region
        $region45: #{_forward_impl.1} parent=11 // pred_check
          %p439 = pneg %p245
        $region46: #{_forward_impl.1} parent=11 // pred_check_branch
          %441 = sbr.rel (%p439) target = $region48
        $region47: #{_forward_impl.1} parent=11 // pred_region
          %s443 = ssub.s32 1024, 1024
          %444 = vsyncadd [#allocation12], %s443
          %s445 = sshll.u32 [#allocation11], 4
          %s446 = int_to_ptr.vmem [resolvable:$true] %s445
          %451 = dma.hbm_to_vmem [thread:$0]  %s9, 1024, %s446, [#allocation12], 64, 64, 4
        $region48: #{_forward_impl.1} parent=11 // pred_fallthru
          _
        // Predicated region
        $region49: #{_forward_impl.1} parent=11 // pred_check
          %p452 = pneg %p266
        $region50: #{_forward_impl.1} parent=11 // pred_check_branch
          %454 = sbr.rel (%p452) target = $region52
        $region51: #{_forward_impl.1} parent=11 // pred_region
          _
        $region52: #{_forward_impl.1} parent=11 // pred_fallthru
          _
        // Predicated region
        $region53: #{_forward_impl.1} parent=11 // pred_check
          %p455 = pneg %p287
        $region54: #{_forward_impl.1} parent=11 // pred_check_branch
          %457 = sbr.rel (%p455) target = $region56
        $region55: #{_forward_impl.1} parent=11 // pred_region
          %s459 = ssub.s32 1024, 1024
          %460 = vsyncadd [#allocation12], %s459
          %s461 = sshll.u32 [#allocation13], 4
          %s462 = int_to_ptr.vmem [resolvable:$true] %s461
          %467 = dma.hbm_to_vmem [thread:$0]  %s11, 1024, %s462, [#allocation12], 64, 64, 4
        $region56: #{_forward_impl.1} parent=11 // pred_fallthru
          _
        // Predicated region
        $region57: #{_forward_impl.1} parent=11 // pred_check
          %p468 = pneg %p308
        $region58: #{_forward_impl.1} parent=11 // pred_check_branch
          %470 = sbr.rel (%p468) target = $region60
        $region59: #{_forward_impl.1} parent=11 // pred_region
          _
        $region60: #{_forward_impl.1} parent=11 // pred_fallthru
          _
      $region12: #{_forward_impl.1} parent=5 // pred_fallthru
        _
      %p471 = scmp.lt.s32.totalorder %s30, 2
      // Predicated region
      $region61: #{_forward_impl.1} parent=5 // pred_check
        %p472 = pneg %p471
      $region62: #{_forward_impl.1} parent=5 // pred_check_branch
        %474 = sbr.rel (%p472) target = $region64
      $region63: #{_forward_impl.1} parent=5 // pred_region
        // Predicated region
        $region65: #{_forward_impl.1} parent=63 // pred_check
          %p475 = pneg %p50
        $region66: #{_forward_impl.1} parent=63 // pred_check_branch
          %477 = sbr.rel (%p475) target = $region68
        $region67: #{_forward_impl.1} parent=63 // pred_region
          %s478 = sand.u32 %s40, 1
          %s479 = scalar_lea.sflag [#allocation3], %s478
          %s480 = sand.u32 %s40, 1
          %s481 = smul.addr %s480, 256
          %s482 = scalar_lea.vmem [#allocation2], %s481
          %s483 = smul.u32 32, %s30
          %s485 = ssub.s32 4096, 4096
          %486 = vsyncadd %s479, %s485
          %s487 = smul.addr %s483, 128
          %s488 = scalar_lea.hbm %s0, %s487
          %s489 = sshll.u32 %s482, 4
          %s490 = int_to_ptr.vmem [resolvable:$true] %s489
          %495 = dma.hbm_to_vmem [thread:$0]  %s488, 4096, %s490, %s479, 128, 128, 8
        $region68: #{_forward_impl.1} parent=63 // pred_fallthru
          _
      $region64: #{_forward_impl.1} parent=5 // pred_fallthru
        _
      %p496 = scmp.le.s32.totalorder 1, %s30
      %p497 = scmp.lt.s32.totalorder %s30, 3
      %p498 = pnand %p496, %p497
      %p499 = pneg %p498
      // Predicated region
      $region69: #{_forward_impl.1} parent=5 // pred_check
        _
      $region70: #{_forward_impl.1} parent=5 // pred_check_branch
        %501 = sbr.rel (%p498) target = $region72
      $region71: #{_forward_impl.1} parent=5 // pred_region
        %s502 = ssub.s32 %s30, 1
        %s503 = sand.u32 %s43, 1
        %s504 = scalar_lea.sflag [#allocation3], %s503
        %s505 = sand.u32 %s43, 1
        %s506 = smul.addr %s505, 256
        %s507 = scalar_lea.vmem [#allocation2], %s506
        // Predicated region
        $region73: #{_forward_impl.1} parent=71 // pred_check
          %p508 = pneg %p56
        $region74: #{_forward_impl.1} parent=71 // pred_check_branch
          %510 = sbr.rel (%p508) target = $region76
        $region75: #{_forward_impl.1} parent=71 // pred_region
          %511 = dma.done %s504, 4096
        $region76: #{_forward_impl.1} parent=71 // pred_fallthru
          _
        // Predicated region
        $region77: #{_forward_impl.1} parent=71 // pred_check
          %p512 = pneg %p77
        $region78: #{_forward_impl.1} parent=71 // pred_check_branch
          %514 = sbr.rel (%p512) target = $region80
        $region79: #{_forward_impl.1} parent=71 // pred_region
          %515 = dma.done [#allocation6], 1024
        $region80: #{_forward_impl.1} parent=71 // pred_fallthru
          _
        // Predicated region
        $region81: #{_forward_impl.1} parent=71 // pred_check
          %p516 = pneg %p119
        $region82: #{_forward_impl.1} parent=71 // pred_check_branch
          %518 = sbr.rel (%p516) target = $region84
        $region83: #{_forward_impl.1} parent=71 // pred_region
          %519 = dma.done [#allocation6], 1024
        $region84: #{_forward_impl.1} parent=71 // pred_fallthru
          _
        // Predicated region
        $region85: #{_forward_impl.1} parent=71 // pred_check
          %p520 = pneg %p161
        $region86: #{_forward_impl.1} parent=71 // pred_check_branch
          %522 = sbr.rel (%p520) target = $region88
        $region87: #{_forward_impl.1} parent=71 // pred_region
          %523 = dma.done [#allocation9], 1024
        $region88: #{_forward_impl.1} parent=71 // pred_fallthru
          _
        // Predicated region
        $region89: #{_forward_impl.1} parent=71 // pred_check
          %p524 = pneg %p203
        $region90: #{_forward_impl.1} parent=71 // pred_check_branch
          %526 = sbr.rel (%p524) target = $region92
        $region91: #{_forward_impl.1} parent=71 // pred_region
          %527 = dma.done [#allocation9], 1024
        $region92: #{_forward_impl.1} parent=71 // pred_fallthru
          _
        // Predicated region
        $region93: #{_forward_impl.1} parent=71 // pred_check
          %p528 = pneg %p245
        $region94: #{_forward_impl.1} parent=71 // pred_check_branch
          %530 = sbr.rel (%p528) target = $region96
        $region95: #{_forward_impl.1} parent=71 // pred_region
          %531 = dma.done [#allocation12], 1024
        $region96: #{_forward_impl.1} parent=71 // pred_fallthru
          _
        // Predicated region
        $region97: #{_forward_impl.1} parent=71 // pred_check
          %p532 = pneg %p287
        $region98: #{_forward_impl.1} parent=71 // pred_check_branch
          %534 = sbr.rel (%p532) target = $region100
        $region99: #{_forward_impl.1} parent=71 // pred_region
          %535 = dma.done [#allocation12], 1024
        $region100: #{_forward_impl.1} parent=71 // pred_fallthru
          _
        %s536 = sand.u32 %s43, 1
        %s537 = scalar_lea.sflag [#allocation3], %s536
        %s538 = sand.u32 %s43, 1
        %s539 = smul.addr %s538, 256
        %s540 = scalar_lea.vmem [#allocation2], %s539
        %p541 = pneg %p56
        %p542 = pneg %p53
        %p543 = pneg %p77
        %p544 = pneg %p74
        %p545 = pneg %p98
        %p546 = pneg %p95
        %p547 = pneg %p119
        %p548 = pneg %p116
        %p549 = pneg %p140
        %p550 = pneg %p137
        %p551 = pneg %p161
        %p552 = pneg %p158
        %p553 = pneg %p182
        %p554 = pneg %p179
        %p555 = pneg %p203
        %p556 = pneg %p200
        %p557 = pneg %p224
        %p558 = pneg %p221
        %p559 = pneg %p245
        %p560 = pneg %p242
        %p561 = pneg %p266
        %p562 = pneg %p263
        %p563 = pneg %p287
        %p564 = pneg %p284
        %p565 = pneg %p308
        %p566 = pneg %p305
        %p567 = pneg %p334
        %p568 = pneg %p331
        %s569 = smul.u32 32, %s35
        %p570 = scmp.lt.s32.totalorder %s569, 63
        %s571 = scalar_select %p570, %s569, 63
        %s572 = smul.addr %s571, 4
        %s573 = scalar_lea.vmem %s13, %s572
        %p574 = pneg %p360
        %p575 = pneg %p357
        %s576 = sand.u32 %s347, 1
        %s577 = scalar_lea.sflag [#allocation4], %s576
        %s578 = sand.u32 %s347, 1
        %s579 = smul.addr %s578, 128
        %s580 = scalar_lea.vmem [#allocation14], %s579
        %s581 = smul.u32 32, %s35
        %s582 = smul.u32 32, %s35
        %p583 = scmp.lt.s32.totalorder %s582, 63
        %s584 = scalar_select %p583, %s582, 63
        %s585 = smul.addr %s584, 4
        %s586 = scalar_lea.vmem %s13, %s585
        %s587 = smul.u32 32, %s35
        %s588 = smul.u32 32, %s35
        %v590 = vld [vmem:[%s507] sm:$0xff]
        %v591 = vld [vmem:[%s507 + $0x8] sm:$0xff]
        %v592 = vld [vmem:[%s507 + $0x10] sm:$0xff]
        %v593 = vld [vmem:[%s507 + $0x18] sm:$0xff]
        %v594 = vld [vmem:[%s507 + $0x20] sm:$0xff]
        %v595 = vld [vmem:[%s507 + $0x28] sm:$0xff]
        %v596 = vld [vmem:[%s507 + $0x30] sm:$0xff]
        %v597 = vld [vmem:[%s507 + $0x38] sm:$0xff]
        %v598 = vld [vmem:[%s507 + $0x40] sm:$0xff]
        %v599 = vld [vmem:[%s507 + $0x48] sm:$0xff]
        %v600 = vld [vmem:[%s507 + $0x50] sm:$0xff]
        %v601 = vld [vmem:[%s507 + $0x58] sm:$0xff]
        %v602 = vld [vmem:[%s507 + $0x60] sm:$0xff]
        %v603 = vld [vmem:[%s507 + $0x68] sm:$0xff]
        %v604 = vld [vmem:[%s507 + $0x70] sm:$0xff]
        %v605 = vld [vmem:[%s507 + $0x78] sm:$0xff]
        %v606 = vld [vmem:[%s507 + $0x80] sm:$0xff]
        %v607 = vld [vmem:[%s507 + $0x88] sm:$0xff]
        %v608 = vld [vmem:[%s507 + $0x90] sm:$0xff]
        %v609 = vld [vmem:[%s507 + $0x98] sm:$0xff]
        %v610 = vld [vmem:[%s507 + $0xa0] sm:$0xff]
        %v611 = vld [vmem:[%s507 + $0xa8] sm:$0xff]
        %v612 = vld [vmem:[%s507 + $0xb0] sm:$0xff]
        %v613 = vld [vmem:[%s507 + $0xb8] sm:$0xff]
        %v614 = vld [vmem:[%s507 + $0xc0] sm:$0xff]
        %v615 = vld [vmem:[%s507 + $0xc8] sm:$0xff]
        %v616 = vld [vmem:[%s507 + $0xd0] sm:$0xff]
        %v617 = vld [vmem:[%s507 + $0xd8] sm:$0xff]
        %v618 = vld [vmem:[%s507 + $0xe0] sm:$0xff]
        %v619 = vld [vmem:[%s507 + $0xe8] sm:$0xff]
        %v620 = vld [vmem:[%s507 + $0xf0] sm:$0xff]
        %v621 = vld [vmem:[%s507 + $0xf8] sm:$0xff]
        %v622 = vpack.c.bf16 %v591, %v590
        %v623 = vpack.c.bf16 %v593, %v592
        %v624 = vpack.c.bf16 %v595, %v594
        %v625 = vpack.c.bf16 %v597, %v596
        %v626 = vpack.c.bf16 %v599, %v598
        %v627 = vpack.c.bf16 %v601, %v600
        %v628 = vpack.c.bf16 %v603, %v602
        %v629 = vpack.c.bf16 %v605, %v604
        %v630 = vpack.c.bf16 %v607, %v606
        %v631 = vpack.c.bf16 %v609, %v608
        %v632 = vpack.c.bf16 %v611, %v610
        %v633 = vpack.c.bf16 %v613, %v612
        %v634 = vpack.c.bf16 %v615, %v614
        %v635 = vpack.c.bf16 %v617, %v616
        %v636 = vpack.c.bf16 %v619, %v618
        %v637 = vpack.c.bf16 %v621, %v620
        %v638 = vld [vmem:[#allocation5] sm:$0xf]
        %v639 = vld [vmem:[#allocation5 + $0x4] sm:$0xf]
        %v640 = vld [vmem:[#allocation5 + $0x8] sm:$0xf]
        %v641 = vld [vmem:[#allocation5 + $0xc] sm:$0xf]
        %v642 = vld [vmem:[#allocation5 + $0x10] sm:$0xf]
        %v643 = vld [vmem:[#allocation5 + $0x14] sm:$0xf]
        %v644 = vld [vmem:[#allocation5 + $0x18] sm:$0xf]
        %v645 = vld [vmem:[#allocation5 + $0x1c] sm:$0xf]
        %v646 = vld [vmem:[#allocation5 + $0x20] sm:$0xf]
        %v647 = vld [vmem:[#allocation5 + $0x24] sm:$0xf]
        %v648 = vld [vmem:[#allocation5 + $0x28] sm:$0xf]
        %v649 = vld [vmem:[#allocation5 + $0x2c] sm:$0xf]
        %v650 = vld [vmem:[#allocation5 + $0x30] sm:$0xf]
        %v651 = vld [vmem:[#allocation5 + $0x34] sm:$0xf]
        %v652 = vld [vmem:[#allocation5 + $0x38] sm:$0xf]
        %v653 = vld [vmem:[#allocation5 + $0x3c] sm:$0xf]
        %v654 = vld [vmem:[%s2] sm:$0x1]
        %v656 = vlaneseq
        %v657 = vshrl.u32 %v656, 7
        %v658 = vsub.s32 0, %v657
        %v659 = vrot.slane %v654, %v658
        %v677 = vunpack.c.l.b16 %v638
        %v678 = vunpack.c.l.b16 %v639
        %v679 = vunpack.c.l.b16 %v640
        %v680 = vunpack.c.l.b16 %v641
        %v681 = vunpack.c.l.b16 %v642
        %v682 = vunpack.c.l.b16 %v643
        %v683 = vunpack.c.l.b16 %v644
        %v684 = vunpack.c.l.b16 %v645
        %v685 = vunpack.c.l.b16 %v646
        %v686 = vunpack.c.l.b16 %v647
        %v687 = vunpack.c.l.b16 %v648
        %v688 = vunpack.c.l.b16 %v649
        %v689 = vunpack.c.l.b16 %v650
        %v690 = vunpack.c.l.b16 %v651
        %v691 = vunpack.c.l.b16 %v652
        %v692 = vunpack.c.l.b16 %v653
        %v693 = vpack.c.b16 %v678, %v677
        %v694 = vpack.c.b16 %v680, %v679
        %v695 = vpack.c.b16 %v682, %v681
        %v696 = vpack.c.b16 %v684, %v683
        %v697 = vpack.c.b16 %v686, %v685
        %v698 = vpack.c.b16 %v688, %v687
        %v699 = vpack.c.b16 %v690, %v689
        %v700 = vpack.c.b16 %v692, %v691
        %709 = vmatprep.subr.bf16.mxu0 0
        %710 = vmatpush1.bf16.msra.mxu0 %v693
        %711 = vmatprep.subr.bf16.mxu0 0
        %712 = vmatpush1.bf16.msra.mxu0 %v694
        %713 = vmatprep.subr.bf16.mxu0 0
        %714 = vmatpush1.bf16.msra.mxu0 %v695
        %715 = vmatprep.subr.bf16.mxu0 0
        %716 = vmatpush1.bf16.msra.mxu0 %v696
        %717 = vmatprep.subr.bf16.mxu0 0
        %718 = vmatpush1.bf16.msra.mxu0 %v697
        %719 = vmatprep.subr.bf16.mxu0 0
        %720 = vmatpush1.bf16.msra.mxu0 %v698
        %721 = vmatprep.subr.bf16.mxu0 0
        %722 = vmatpush1.bf16.msra.mxu0 %v699
        %723 = vmatprep.subr.bf16.mxu0 0
        %724 = vmatpush1.bf16.msra.mxu0 %v700
        %725 = vmatprep.subr.bf16.mxu0 0
        %726 = vmatpush1.bf16.msra.mxu0 0
        %727 = vmatprep.subr.bf16.mxu0 0
        %728 = vmatpush1.bf16.msra.mxu0 0
        %729 = vmatprep.subr.bf16.mxu0 0
        %730 = vmatpush1.bf16.msra.mxu0 0
        %731 = vmatprep.subr.bf16.mxu0 0
        %732 = vmatpush1.bf16.msra.mxu0 0
        %733 = vmatprep.subr.bf16.mxu0 0
        %734 = vmatpush1.bf16.msra.mxu0 0
        %735 = vmatprep.subr.bf16.mxu0 0
        %736 = vmatpush1.bf16.msra.mxu0 0
        %737 = vmatprep.subr.bf16.mxu0 0
        %738 = vmatpush1.bf16.msra.mxu0 0
        %739 = vmatprep.subr.bf16.mxu0 0
        %740 = vmatpush1.bf16.msra.mxu0 0
        %741 = vmatprep.mubr.bf16.mxu0 0
        %742 = vmatmul.mubr.bf16.gmra.mrb[0].mxu0 %v622
        %v743 = vpop.f32.mrb[0].mxu0
        %v744 = vadd.f32 %v659, %v743
        %v745 = vpop.f32.mrb[0].mxu0
        %v746 = vpop.f32.mrb[0].mxu0
        %v747 = vadd.f32 %v659, %v746
        %v748 = vpop.f32.mrb[0].mxu0
        %749 = vmatprep.mubr.bf16.mxu0 0
        %750 = vmatmul.mubr.bf16.gmra.mrb[0].mxu0 %v623
        %v751 = vpop.f32.mrb[0].mxu0
        %v752 = vadd.f32 %v659, %v751
        %v753 = vpop.f32.mrb[0].mxu0
        %v754 = vpop.f32.mrb[0].mxu0
        %v755 = vadd.f32 %v659, %v754
        %v756 = vpop.f32.mrb[0].mxu0
        %757 = vmatprep.mubr.bf16.mxu0 0
        %758 = vmatmul.mubr.bf16.gmra.mrb[0].mxu0 %v624
        %v759 = vpop.f32.mrb[0].mxu0
        %v760 = vadd.f32 %v659, %v759
        %v761 = vpop.f32.mrb[0].mxu0
        %v762 = vpop.f32.mrb[0].mxu0
        %v763 = vadd.f32 %v659, %v762
        %v764 = vpop.f32.mrb[0].mxu0
        %765 = vmatprep.mubr.bf16.mxu0 0
        %766 = vmatmul.mubr.bf16.gmra.mrb[0].mxu0 %v625
        %v767 = vpop.f32.mrb[0].mxu0
        %v768 = vadd.f32 %v659, %v767
        %v769 = vpop.f32.mrb[0].mxu0
        %v770 = vpop.f32.mrb[0].mxu0
        %v771 = vadd.f32 %v659, %v770
        %v772 = vpop.f32.mrb[0].mxu0
        %773 = vmatprep.mubr.bf16.mxu0 0
        %774 = vmatmul.mubr.bf16.gmra.mrb[0].mxu0 %v626
        %v775 = vpop.f32.mrb[0].mxu0
        %v776 = vadd.f32 %v659, %v775
        %v777 = vpop.f32.mrb[0].mxu0
        %v778 = vpop.f32.mrb[0].mxu0
        %v779 = vadd.f32 %v659, %v778
        %v780 = vpop.f32.mrb[0].mxu0
        %781 = vmatprep.mubr.bf16.mxu0 0
        %782 = vmatmul.mubr.bf16.gmra.mrb[0].mxu0 %v627
        %v783 = vpop.f32.mrb[0].mxu0
        %v784 = vadd.f32 %v659, %v783
        %v785 = vpop.f32.mrb[0].mxu0
        %v786 = vpop.f32.mrb[0].mxu0
        %v787 = vadd.f32 %v659, %v786
        %v788 = vpop.f32.mrb[0].mxu0
        %789 = vmatprep.mubr.bf16.mxu0 0
        %790 = vmatmul.mubr.bf16.gmra.mrb[0].mxu0 %v628
        %v791 = vpop.f32.mrb[0].mxu0
        %v792 = vadd.f32 %v659, %v791
        %v793 = vpop.f32.mrb[0].mxu0
        %v794 = vpop.f32.mrb[0].mxu0
        %v795 = vadd.f32 %v659, %v794
        %v796 = vpop.f32.mrb[0].mxu0
        %797 = vmatprep.mubr.bf16.mxu0 0
        %798 = vmatmul.mubr.bf16.gmra.mrb[0].mxu0 %v629
        %v799 = vpop.f32.mrb[0].mxu0
        %v800 = vadd.f32 %v659, %v799
        %v801 = vpop.f32.mrb[0].mxu0
        %v802 = vpop.f32.mrb[0].mxu0
        %v803 = vadd.f32 %v659, %v802
        %v804 = vpop.f32.mrb[0].mxu0
        %805 = vmatprep.mubr.bf16.mxu0 0
        %806 = vmatmul.mubr.bf16.gmra.mrb[0].mxu0 %v630
        %v807 = vpop.f32.mrb[0].mxu0
        %v808 = vadd.f32 %v659, %v807
        %v809 = vpop.f32.mrb[0].mxu0
        %v810 = vpop.f32.mrb[0].mxu0
        %v811 = vadd.f32 %v659, %v810
        %v812 = vpop.f32.mrb[0].mxu0
        %813 = vmatprep.mubr.bf16.mxu0 0
        %814 = vmatmul.mubr.bf16.gmra.mrb[0].mxu0 %v631
        %v815 = vpop.f32.mrb[0].mxu0
        %v816 = vadd.f32 %v659, %v815
        %v817 = vpop.f32.mrb[0].mxu0
        %v818 = vpop.f32.mrb[0].mxu0
        %v819 = vadd.f32 %v659, %v818
        %v820 = vpop.f32.mrb[0].mxu0
        %821 = vmatprep.mubr.bf16.mxu0 0
        %822 = vmatmul.mubr.bf16.gmra.mrb[0].mxu0 %v632
        %v823 = vpop.f32.mrb[0].mxu0
        %v824 = vadd.f32 %v659, %v823
        %v825 = vpop.f32.mrb[0].mxu0
        %v826 = vpop.f32.mrb[0].mxu0
        %v827 = vadd.f32 %v659, %v826
        %v828 = vpop.f32.mrb[0].mxu0
        %829 = vmatprep.mubr.bf16.mxu0 0
        %830 = vmatmul.mubr.bf16.gmra.mrb[0].mxu0 %v633
        %v831 = vpop.f32.mrb[0].mxu0
        %v832 = vadd.f32 %v659, %v831
        %v833 = vpop.f32.mrb[0].mxu0
        %v834 = vpop.f32.mrb[0].mxu0
        %v835 = vadd.f32 %v659, %v834
        %v836 = vpop.f32.mrb[0].mxu0
        %837 = vmatprep.mubr.bf16.mxu0 0
        %838 = vmatmul.mubr.bf16.gmra.mrb[0].mxu0 %v634
        %v839 = vpop.f32.mrb[0].mxu0
        %v840 = vadd.f32 %v659, %v839
        %v841 = vpop.f32.mrb[0].mxu0
        %v842 = vpop.f32.mrb[0].mxu0
        %v843 = vadd.f32 %v659, %v842
        %v844 = vpop.f32.mrb[0].mxu0
        %845 = vmatprep.mubr.bf16.mxu0 0
        %846 = vmatmul.mubr.bf16.gmra.mrb[0].mxu0 %v635
        %v847 = vpop.f32.mrb[0].mxu0
        %v848 = vadd.f32 %v659, %v847
        %v849 = vpop.f32.mrb[0].mxu0
        %v850 = vpop.f32.mrb[0].mxu0
        %v851 = vadd.f32 %v659, %v850
        %v852 = vpop.f32.mrb[0].mxu0
        %853 = vmatprep.mubr.bf16.mxu0 0
        %854 = vmatmul.mubr.bf16.gmra.mrb[0].mxu0 %v636
        %v855 = vpop.f32.mrb[0].mxu0
        %v856 = vadd.f32 %v659, %v855
        %v857 = vpop.f32.mrb[0].mxu0
        %v858 = vpop.f32.mrb[0].mxu0
        %v859 = vadd.f32 %v659, %v858
        %v860 = vpop.f32.mrb[0].mxu0
        %861 = vmatprep.mubr.bf16.mxu0 0
        %862 = vmatmul.mubr.bf16.gmra.mrb[0].mxu0 %v637
        %v863 = vpop.f32.mrb[0].mxu0
        %v864 = vadd.f32 %v659, %v863
        %v865 = vpop.f32.mrb[0].mxu0
        %v866 = vpop.f32.mrb[0].mxu0
        %v867 = vadd.f32 %v659, %v866
        %v868 = vpop.f32.mrb[0].mxu0
        %869 = vdwg.mxu0
        %vm870 = vcmp.gt.f32.partialorder %v744, 0.0
        %vm871 = vcmp.gt.f32.partialorder %v747, 0.0
        %vm872 = vcmp.gt.f32.partialorder %v752, 0.0
        %vm873 = vcmp.gt.f32.partialorder %v755, 0.0
        %vm874 = vcmp.gt.f32.partialorder %v760, 0.0
        %vm875 = vcmp.gt.f32.partialorder %v763, 0.0
        %vm876 = vcmp.gt.f32.partialorder %v768, 0.0
        %vm877 = vcmp.gt.f32.partialorder %v771, 0.0
        %vm878 = vcmp.gt.f32.partialorder %v776, 0.0
        %vm879 = vcmp.gt.f32.partialorder %v779, 0.0
        %vm880 = vcmp.gt.f32.partialorder %v784, 0.0
        %vm881 = vcmp.gt.f32.partialorder %v787, 0.0
        %vm882 = vcmp.gt.f32.partialorder %v792, 0.0
        %vm883 = vcmp.gt.f32.partialorder %v795, 0.0
        %vm884 = vcmp.gt.f32.partialorder %v800, 0.0
        %vm885 = vcmp.gt.f32.partialorder %v803, 0.0
        %vm886 = vcmp.gt.f32.partialorder %v808, 0.0
        %vm887 = vcmp.gt.f32.partialorder %v811, 0.0
        %vm888 = vcmp.gt.f32.partialorder %v816, 0.0
        %vm889 = vcmp.gt.f32.partialorder %v819, 0.0
        %vm890 = vcmp.gt.f32.partialorder %v824, 0.0
        %vm891 = vcmp.gt.f32.partialorder %v827, 0.0
        %vm892 = vcmp.gt.f32.partialorder %v832, 0.0
        %vm893 = vcmp.gt.f32.partialorder %v835, 0.0
        %vm894 = vcmp.gt.f32.partialorder %v840, 0.0
        %vm895 = vcmp.gt.f32.partialorder %v843, 0.0
        %vm896 = vcmp.gt.f32.partialorder %v848, 0.0
        %vm897 = vcmp.gt.f32.partialorder %v851, 0.0
        %vm898 = vcmp.gt.f32.partialorder %v856, 0.0
        %vm899 = vcmp.gt.f32.partialorder %v859, 0.0
        %vm900 = vcmp.gt.f32.partialorder %v864, 0.0
        %vm901 = vcmp.gt.f32.partialorder %v867, 0.0
        %v902 = vmul.f32 %v744, 0.01
        %v903 = vmul.f32 %v747, 0.01
        %v904 = vmul.f32 %v752, 0.01
        %v905 = vmul.f32 %v755, 0.01
        %v906 = vmul.f32 %v760, 0.01
        %v907 = vmul.f32 %v763, 0.01
        %v908 = vmul.f32 %v768, 0.01
        %v909 = vmul.f32 %v771, 0.01
        %v910 = vmul.f32 %v776, 0.01
        %v911 = vmul.f32 %v779, 0.01
        %v912 = vmul.f32 %v784, 0.01
        %v913 = vmul.f32 %v787, 0.01
        %v914 = vmul.f32 %v792, 0.01
        %v915 = vmul.f32 %v795, 0.01
        %v916 = vmul.f32 %v800, 0.01
        %v917 = vmul.f32 %v803, 0.01
        %v918 = vmul.f32 %v808, 0.01
        %v919 = vmul.f32 %v811, 0.01
        %v920 = vmul.f32 %v816, 0.01
        %v921 = vmul.f32 %v819, 0.01
        %v922 = vmul.f32 %v824, 0.01
        %v923 = vmul.f32 %v827, 0.01
        %v924 = vmul.f32 %v832, 0.01
        %v925 = vmul.f32 %v835, 0.01
        %v926 = vmul.f32 %v840, 0.01
        %v927 = vmul.f32 %v843, 0.01
        %v928 = vmul.f32 %v848, 0.01
        %v929 = vmul.f32 %v851, 0.01
        %v930 = vmul.f32 %v856, 0.01
        %v931 = vmul.f32 %v859, 0.01
        %v932 = vmul.f32 %v864, 0.01
        %v933 = vmul.f32 %v867, 0.01
        %v934 = vsel %vm870, %v744, %v902
        %v935 = vsel %vm871, %v747, %v903
        %v936 = vsel %vm872, %v752, %v904
        %v937 = vsel %vm873, %v755, %v905
        %v938 = vsel %vm874, %v760, %v906
        %v939 = vsel %vm875, %v763, %v907
        %v940 = vsel %vm876, %v768, %v908
        %v941 = vsel %vm877, %v771, %v909
        %v942 = vsel %vm878, %v776, %v910
        %v943 = vsel %vm879, %v779, %v911
        %v944 = vsel %vm880, %v784, %v912
        %v945 = vsel %vm881, %v787, %v913
        %v946 = vsel %vm882, %v792, %v914
        %v947 = vsel %vm883, %v795, %v915
        %v948 = vsel %vm884, %v800, %v916
        %v949 = vsel %vm885, %v803, %v917
        %v950 = vsel %vm886, %v808, %v918
        %v951 = vsel %vm887, %v811, %v919
        %v952 = vsel %vm888, %v816, %v920
        %v953 = vsel %vm889, %v819, %v921
        %v954 = vsel %vm890, %v824, %v922
        %v955 = vsel %vm891, %v827, %v923
        %v956 = vsel %vm892, %v832, %v924
        %v957 = vsel %vm893, %v835, %v925
        %v958 = vsel %vm894, %v840, %v926
        %v959 = vsel %vm895, %v843, %v927
        %v960 = vsel %vm896, %v848, %v928
        %v961 = vsel %vm897, %v851, %v929
        %v962 = vsel %vm898, %v856, %v930
        %v963 = vsel %vm899, %v859, %v931
        %v964 = vsel %vm900, %v864, %v932
        %v965 = vsel %vm901, %v867, %v933
        %v966 = vpack.c.bf16 %v935, %v934
        %v967 = vpack.c.bf16 %v937, %v936
        %v968 = vpack.c.bf16 %v939, %v938
        %v969 = vpack.c.bf16 %v941, %v940
        %v970 = vpack.c.bf16 %v943, %v942
        %v971 = vpack.c.bf16 %v945, %v944
        %v972 = vpack.c.bf16 %v947, %v946
        %v973 = vpack.c.bf16 %v949, %v948
        %v974 = vpack.c.bf16 %v951, %v950
        %v975 = vpack.c.bf16 %v953, %v952
        %v976 = vpack.c.bf16 %v955, %v954
        %v977 = vpack.c.bf16 %v957, %v956
        %v978 = vpack.c.bf16 %v959, %v958
        %v979 = vpack.c.bf16 %v961, %v960
        %v980 = vpack.c.bf16 %v963, %v962
        %v981 = vpack.c.bf16 %v965, %v964
        %v982 = vld [vmem:[#allocation7] sm:$0xf]
        %v983 = vld [vmem:[#allocation7 + $0x4] sm:$0xf]
        %v984 = vld [vmem:[#allocation7 + $0x8] sm:$0xf]
        %v985 = vld [vmem:[#allocation7 + $0xc] sm:$0xf]
        %v986 = vld [vmem:[#allocation7 + $0x10] sm:$0xf]
        %v987 = vld [vmem:[#allocation7 + $0x14] sm:$0xf]
        %v988 = vld [vmem:[#allocation7 + $0x18] sm:$0xf]
        %v989 = vld [vmem:[#allocation7 + $0x1c] sm:$0xf]
        %v990 = vld [vmem:[#allocation7 + $0x20] sm:$0xf]
        %v991 = vld [vmem:[#allocation7 + $0x24] sm:$0xf]
        %v992 = vld [vmem:[#allocation7 + $0x28] sm:$0xf]
        %v993 = vld [vmem:[#allocation7 + $0x2c] sm:$0xf]
        %v994 = vld [vmem:[#allocation7 + $0x30] sm:$0xf]
        %v995 = vld [vmem:[#allocation7 + $0x34] sm:$0xf]
        %v996 = vld [vmem:[#allocation7 + $0x38] sm:$0xf]
        %v997 = vld [vmem:[#allocation7 + $0x3c] sm:$0xf]
        %v998 = vld [vmem:[%s4] sm:$0x1]
        %v1000 = vlaneseq
        %v1001 = vshrl.u32 %v1000, 7
        %v1002 = vsub.s32 0, %v1001
        %v1003 = vrot.slane %v998, %v1002
        %v1021 = vunpack.c.l.b16 %v982
        %v1022 = vunpack.c.l.b16 %v983
        %v1023 = vunpack.c.l.b16 %v984
        %v1024 = vunpack.c.l.b16 %v985
        %v1025 = vunpack.c.l.b16 %v986
        %v1026 = vunpack.c.l.b16 %v987
        %v1027 = vunpack.c.l.b16 %v988
        %v1028 = vunpack.c.l.b16 %v989
        %v1029 = vunpack.c.l.b16 %v990
        %v1030 = vunpack.c.l.b16 %v991
        %v1031 = vunpack.c.l.b16 %v992
        %v1032 = vunpack.c.l.b16 %v993
        %v1033 = vunpack.c.l.b16 %v994
        %v1034 = vunpack.c.l.b16 %v995
        %v1035 = vunpack.c.l.b16 %v996
        %v1036 = vunpack.c.l.b16 %v997
        %v1037 = vpack.c.b16 %v1022, %v1021
        %v1038 = vpack.c.b16 %v1024, %v1023
        %v1039 = vpack.c.b16 %v1026, %v1025
        %v1040 = vpack.c.b16 %v1028, %v1027
        %v1041 = vpack.c.b16 %v1030, %v1029
        %v1042 = vpack.c.b16 %v1032, %v1031
        %v1043 = vpack.c.b16 %v1034, %v1033
        %v1044 = vpack.c.b16 %v1036, %v1035
        %1053 = vmatprep.subr.bf16.mxu0 0
        %1054 = vmatpush1.bf16.msra.mxu0 %v1037
        %1055 = vmatprep.subr.bf16.mxu0 0
        %1056 = vmatpush1.bf16.msra.mxu0 %v1038
        %1057 = vmatprep.subr.bf16.mxu0 0
        %1058 = vmatpush1.bf16.msra.mxu0 %v1039
        %1059 = vmatprep.subr.bf16.mxu0 0
        %1060 = vmatpush1.bf16.msra.mxu0 %v1040
        %1061 = vmatprep.subr.bf16.mxu0 0
        %1062 = vmatpush1.bf16.msra.mxu0 %v1041
        %1063 = vmatprep.subr.bf16.mxu0 0
        %1064 = vmatpush1.bf16.msra.mxu0 %v1042
        %1065 = vmatprep.subr.bf16.mxu0 0
        %1066 = vmatpush1.bf16.msra.mxu0 %v1043
        %1067 = vmatprep.subr.bf16.mxu0 0
        %1068 = vmatpush1.bf16.msra.mxu0 %v1044
        %1069 = vmatprep.subr.bf16.mxu0 0
        %1070 = vmatpush1.bf16.msra.mxu0 0
        %1071 = vmatprep.subr.bf16.mxu0 0
        %1072 = vmatpush1.bf16.msra.mxu0 0
        %1073 = vmatprep.subr.bf16.mxu0 0
        %1074 = vmatpush1.bf16.msra.mxu0 0
        %1075 = vmatprep.subr.bf16.mxu0 0
        %1076 = vmatpush1.bf16.msra.mxu0 0
        %1077 = vmatprep.subr.bf16.mxu0 0
        %1078 = vmatpush1.bf16.msra.mxu0 0
        %1079 = vmatprep.subr.bf16.mxu0 0
        %1080 = vmatpush1.bf16.msra.mxu0 0
        %1081 = vmatprep.subr.bf16.mxu0 0
        %1082 = vmatpush1.bf16.msra.mxu0 0
        %1083 = vmatprep.subr.bf16.mxu0 0
        %1084 = vmatpush1.bf16.msra.mxu0 0
        %1085 = vmatprep.mubr.bf16.mxu0 0
        %1086 = vmatmul.mubr.bf16.gmra.mrb[0].mxu0 %v966
        %v1087 = vpop.f32.mrb[0].mxu0
        %v1088 = vadd.f32 %v1003, %v1087
        %v1089 = vpop.f32.mrb[0].mxu0
        %v1090 = vpop.f32.mrb[0].mxu0
        %v1091 = vadd.f32 %v1003, %v1090
        %v1092 = vpop.f32.mrb[0].mxu0
        %1093 = vmatprep.mubr.bf16.mxu0 0
        %1094 = vmatmul.mubr.bf16.gmra.mrb[0].mxu0 %v967
        %v1095 = vpop.f32.mrb[0].mxu0
        %v1096 = vadd.f32 %v1003, %v1095
        %v1097 = vpop.f32.mrb[0].mxu0
        %v1098 = vpop.f32.mrb[0].mxu0
        %v1099 = vadd.f32 %v1003, %v1098
        %v1100 = vpop.f32.mrb[0].mxu0
        %1101 = vmatprep.mubr.bf16.mxu0 0
        %1102 = vmatmul.mubr.bf16.gmra.mrb[0].mxu0 %v968
        %v1103 = vpop.f32.mrb[0].mxu0
        %v1104 = vadd.f32 %v1003, %v1103
        %v1105 = vpop.f32.mrb[0].mxu0
        %v1106 = vpop.f32.mrb[0].mxu0
        %v1107 = vadd.f32 %v1003, %v1106
        %v1108 = vpop.f32.mrb[0].mxu0
        %1109 = vmatprep.mubr.bf16.mxu0 0
        %1110 = vmatmul.mubr.bf16.gmra.mrb[0].mxu0 %v969
        %v1111 = vpop.f32.mrb[0].mxu0
        %v1112 = vadd.f32 %v1003, %v1111
        %v1113 = vpop.f32.mrb[0].mxu0
        %v1114 = vpop.f32.mrb[0].mxu0
        %v1115 = vadd.f32 %v1003, %v1114
        %v1116 = vpop.f32.mrb[0].mxu0
        %1117 = vmatprep.mubr.bf16.mxu0 0
        %1118 = vmatmul.mubr.bf16.gmra.mrb[0].mxu0 %v970
        %v1119 = vpop.f32.mrb[0].mxu0
        %v1120 = vadd.f32 %v1003, %v1119
        %v1121 = vpop.f32.mrb[0].mxu0
        %v1122 = vpop.f32.mrb[0].mxu0
        %v1123 = vadd.f32 %v1003, %v1122
        %v1124 = vpop.f32.mrb[0].mxu0
        %1125 = vmatprep.mubr.bf16.mxu0 0
        %1126 = vmatmul.mubr.bf16.gmra.mrb[0].mxu0 %v971
        %v1127 = vpop.f32.mrb[0].mxu0
        %v1128 = vadd.f32 %v1003, %v1127
        %v1129 = vpop.f32.mrb[0].mxu0
        %v1130 = vpop.f32.mrb[0].mxu0
        %v1131 = vadd.f32 %v1003, %v1130
        %v1132 = vpop.f32.mrb[0].mxu0
        %1133 = vmatprep.mubr.bf16.mxu0 0
        %1134 = vmatmul.mubr.bf16.gmra.mrb[0].mxu0 %v972
        %v1135 = vpop.f32.mrb[0].mxu0
        %v1136 = vadd.f32 %v1003, %v1135
        %v1137 = vpop.f32.mrb[0].mxu0
        %v1138 = vpop.f32.mrb[0].mxu0
        %v1139 = vadd.f32 %v1003, %v1138
        %v1140 = vpop.f32.mrb[0].mxu0
        %1141 = vmatprep.mubr.bf16.mxu0 0
        %1142 = vmatmul.mubr.bf16.gmra.mrb[0].mxu0 %v973
        %v1143 = vpop.f32.mrb[0].mxu0
        %v1144 = vadd.f32 %v1003, %v1143
        %v1145 = vpop.f32.mrb[0].mxu0
        %v1146 = vpop.f32.mrb[0].mxu0
        %v1147 = vadd.f32 %v1003, %v1146
        %v1148 = vpop.f32.mrb[0].mxu0
        %1149 = vmatprep.mubr.bf16.mxu0 0
        %1150 = vmatmul.mubr.bf16.gmra.mrb[0].mxu0 %v974
        %v1151 = vpop.f32.mrb[0].mxu0
        %v1152 = vadd.f32 %v1003, %v1151
        %v1153 = vpop.f32.mrb[0].mxu0
        %v1154 = vpop.f32.mrb[0].mxu0
        %v1155 = vadd.f32 %v1003, %v1154
        %v1156 = vpop.f32.mrb[0].mxu0
        %1157 = vmatprep.mubr.bf16.mxu0 0
        %1158 = vmatmul.mubr.bf16.gmra.mrb[0].mxu0 %v975
        %v1159 = vpop.f32.mrb[0].mxu0
        %v1160 = vadd.f32 %v1003, %v1159
        %v1161 = vpop.f32.mrb[0].mxu0
        %v1162 = vpop.f32.mrb[0].mxu0
        %v1163 = vadd.f32 %v1003, %v1162
        %v1164 = vpop.f32.mrb[0].mxu0
        %1165 = vmatprep.mubr.bf16.mxu0 0
        %1166 = vmatmul.mubr.bf16.gmra.mrb[0].mxu0 %v976
        %v1167 = vpop.f32.mrb[0].mxu0
        %v1168 = vadd.f32 %v1003, %v1167
        %v1169 = vpop.f32.mrb[0].mxu0
        %v1170 = vpop.f32.mrb[0].mxu0
        %v1171 = vadd.f32 %v1003, %v1170
        %v1172 = vpop.f32.mrb[0].mxu0
        %1173 = vmatprep.mubr.bf16.mxu0 0
        %1174 = vmatmul.mubr.bf16.gmra.mrb[0].mxu0 %v977
        %v1175 = vpop.f32.mrb[0].mxu0
        %v1176 = vadd.f32 %v1003, %v1175
        %v1177 = vpop.f32.mrb[0].mxu0
        %v1178 = vpop.f32.mrb[0].mxu0
        %v1179 = vadd.f32 %v1003, %v1178
        %v1180 = vpop.f32.mrb[0].mxu0
        %1181 = vmatprep.mubr.bf16.mxu0 0
        %1182 = vmatmul.mubr.bf16.gmra.mrb[0].mxu0 %v978
        %v1183 = vpop.f32.mrb[0].mxu0
        %v1184 = vadd.f32 %v1003, %v1183
        %v1185 = vpop.f32.mrb[0].mxu0
        %v1186 = vpop.f32.mrb[0].mxu0
        %v1187 = vadd.f32 %v1003, %v1186
        %v1188 = vpop.f32.mrb[0].mxu0
        %1189 = vmatprep.mubr.bf16.mxu0 0
        %1190 = vmatmul.mubr.bf16.gmra.mrb[0].mxu0 %v979
        %v1191 = vpop.f32.mrb[0].mxu0
        %v1192 = vadd.f32 %v1003, %v1191
        %v1193 = vpop.f32.mrb[0].mxu0
        %v1194 = vpop.f32.mrb[0].mxu0
        %v1195 = vadd.f32 %v1003, %v1194
        %v1196 = vpop.f32.mrb[0].mxu0
        %1197 = vmatprep.mubr.bf16.mxu0 0
        %1198 = vmatmul.mubr.bf16.gmra.mrb[0].mxu0 %v980
        %v1199 = vpop.f32.mrb[0].mxu0
        %v1200 = vadd.f32 %v1003, %v1199
        %v1201 = vpop.f32.mrb[0].mxu0
        %v1202 = vpop.f32.mrb[0].mxu0
        %v1203 = vadd.f32 %v1003, %v1202
        %v1204 = vpop.f32.mrb[0].mxu0
        %1205 = vmatprep.mubr.bf16.mxu0 0
        %1206 = vmatmul.mubr.bf16.gmra.mrb[0].mxu0 %v981
        %v1207 = vpop.f32.mrb[0].mxu0
        %v1208 = vadd.f32 %v1003, %v1207
        %v1209 = vpop.f32.mrb[0].mxu0
        %v1210 = vpop.f32.mrb[0].mxu0
        %v1211 = vadd.f32 %v1003, %v1210
        %v1212 = vpop.f32.mrb[0].mxu0
        %1213 = vdwg.mxu0
        %vm1214 = vcmp.gt.f32.partialorder %v1088, 0.0
        %vm1215 = vcmp.gt.f32.partialorder %v1091, 0.0
        %vm1216 = vcmp.gt.f32.partialorder %v1096, 0.0
        %vm1217 = vcmp.gt.f32.partialorder %v1099, 0.0
        %vm1218 = vcmp.gt.f32.partialorder %v1104, 0.0
        %vm1219 = vcmp.gt.f32.partialorder %v1107, 0.0
        %vm1220 = vcmp.gt.f32.partialorder %v1112, 0.0
        %vm1221 = vcmp.gt.f32.partialorder %v1115, 0.0
        %vm1222 = vcmp.gt.f32.partialorder %v1120, 0.0
        %vm1223 = vcmp.gt.f32.partialorder %v1123, 0.0
        %vm1224 = vcmp.gt.f32.partialorder %v1128, 0.0
        %vm1225 = vcmp.gt.f32.partialorder %v1131, 0.0
        %vm1226 = vcmp.gt.f32.partialorder %v1136, 0.0
        %vm1227 = vcmp.gt.f32.partialorder %v1139, 0.0
        %vm1228 = vcmp.gt.f32.partialorder %v1144, 0.0
        %vm1229 = vcmp.gt.f32.partialorder %v1147, 0.0
        %vm1230 = vcmp.gt.f32.partialorder %v1152, 0.0
        %vm1231 = vcmp.gt.f32.partialorder %v1155, 0.0
        %vm1232 = vcmp.gt.f32.partialorder %v1160, 0.0
        %vm1233 = vcmp.gt.f32.partialorder %v1163, 0.0
        %vm1234 = vcmp.gt.f32.partialorder %v1168, 0.0
        %vm1235 = vcmp.gt.f32.partialorder %v1171, 0.0
        %vm1236 = vcmp.gt.f32.partialorder %v1176, 0.0
        %vm1237 = vcmp.gt.f32.partialorder %v1179, 0.0
        %vm1238 = vcmp.gt.f32.partialorder %v1184, 0.0
        %vm1239 = vcmp.gt.f32.partialorder %v1187, 0.0
        %vm1240 = vcmp.gt.f32.partialorder %v1192, 0.0
        %vm1241 = vcmp.gt.f32.partialorder %v1195, 0.0
        %vm1242 = vcmp.gt.f32.partialorder %v1200, 0.0
        %vm1243 = vcmp.gt.f32.partialorder %v1203, 0.0
        %vm1244 = vcmp.gt.f32.partialorder %v1208, 0.0
        %vm1245 = vcmp.gt.f32.partialorder %v1211, 0.0
        %v1246 = vmul.f32 %v1088, 0.01
        %v1247 = vmul.f32 %v1091, 0.01
        %v1248 = vmul.f32 %v1096, 0.01
        %v1249 = vmul.f32 %v1099, 0.01
        %v1250 = vmul.f32 %v1104, 0.01
        %v1251 = vmul.f32 %v1107, 0.01
        %v1252 = vmul.f32 %v1112, 0.01
        %v1253 = vmul.f32 %v1115, 0.01
        %v1254 = vmul.f32 %v1120, 0.01
        %v1255 = vmul.f32 %v1123, 0.01
        %v1256 = vmul.f32 %v1128, 0.01
        %v1257 = vmul.f32 %v1131, 0.01
        %v1258 = vmul.f32 %v1136, 0.01
        %v1259 = vmul.f32 %v1139, 0.01
        %v1260 = vmul.f32 %v1144, 0.01
        %v1261 = vmul.f32 %v1147, 0.01
        %v1262 = vmul.f32 %v1152, 0.01
        %v1263 = vmul.f32 %v1155, 0.01
        %v1264 = vmul.f32 %v1160, 0.01
        %v1265 = vmul.f32 %v1163, 0.01
        %v1266 = vmul.f32 %v1168, 0.01
        %v1267 = vmul.f32 %v1171, 0.01
        %v1268 = vmul.f32 %v1176, 0.01
        %v1269 = vmul.f32 %v1179, 0.01
        %v1270 = vmul.f32 %v1184, 0.01
        %v1271 = vmul.f32 %v1187, 0.01
        %v1272 = vmul.f32 %v1192, 0.01
        %v1273 = vmul.f32 %v1195, 0.01
        %v1274 = vmul.f32 %v1200, 0.01
        %v1275 = vmul.f32 %v1203, 0.01
        %v1276 = vmul.f32 %v1208, 0.01
        %v1277 = vmul.f32 %v1211, 0.01
        %v1278 = vsel %vm1214, %v1088, %v1246
        %v1279 = vsel %vm1215, %v1091, %v1247
        %v1280 = vsel %vm1216, %v1096, %v1248
        %v1281 = vsel %vm1217, %v1099, %v1249
        %v1282 = vsel %vm1218, %v1104, %v1250
        %v1283 = vsel %vm1219, %v1107, %v1251
        %v1284 = vsel %vm1220, %v1112, %v1252
        %v1285 = vsel %vm1221, %v1115, %v1253
        %v1286 = vsel %vm1222, %v1120, %v1254
        %v1287 = vsel %vm1223, %v1123, %v1255
        %v1288 = vsel %vm1224, %v1128, %v1256
        %v1289 = vsel %vm1225, %v1131, %v1257
        %v1290 = vsel %vm1226, %v1136, %v1258
        %v1291 = vsel %vm1227, %v1139, %v1259
        %v1292 = vsel %vm1228, %v1144, %v1260
        %v1293 = vsel %vm1229, %v1147, %v1261
        %v1294 = vsel %vm1230, %v1152, %v1262
        %v1295 = vsel %vm1231, %v1155, %v1263
        %v1296 = vsel %vm1232, %v1160, %v1264
        %v1297 = vsel %vm1233, %v1163, %v1265
        %v1298 = vsel %vm1234, %v1168, %v1266
        %v1299 = vsel %vm1235, %v1171, %v1267
        %v1300 = vsel %vm1236, %v1176, %v1268
        %v1301 = vsel %vm1237, %v1179, %v1269
        %v1302 = vsel %vm1238, %v1184, %v1270
        %v1303 = vsel %vm1239, %v1187, %v1271
        %v1304 = vsel %vm1240, %v1192, %v1272
        %v1305 = vsel %vm1241, %v1195, %v1273
        %v1306 = vsel %vm1242, %v1200, %v1274
        %v1307 = vsel %vm1243, %v1203, %v1275
        %v1308 = vsel %vm1244, %v1208, %v1276
        %v1309 = vsel %vm1245, %v1211, %v1277
        %v1310 = vpack.c.bf16 %v1279, %v1278
        %v1311 = vpack.c.bf16 %v1281, %v1280
        %v1312 = vpack.c.bf16 %v1283, %v1282
        %v1313 = vpack.c.bf16 %v1285, %v1284
        %v1314 = vpack.c.bf16 %v1287, %v1286
        %v1315 = vpack.c.bf16 %v1289, %v1288
        %v1316 = vpack.c.bf16 %v1291, %v1290
        %v1317 = vpack.c.bf16 %v1293, %v1292
        %v1318 = vpack.c.bf16 %v1295, %v1294
        %v1319 = vpack.c.bf16 %v1297, %v1296
        %v1320 = vpack.c.bf16 %v1299, %v1298
        %v1321 = vpack.c.bf16 %v1301, %v1300
        %v1322 = vpack.c.bf16 %v1303, %v1302
        %v1323 = vpack.c.bf16 %v1305, %v1304
        %v1324 = vpack.c.bf16 %v1307, %v1306
        %v1325 = vpack.c.bf16 %v1309, %v1308
        %v1326 = vld [vmem:[#allocation8] sm:$0xf]
        %v1327 = vld [vmem:[#allocation8 + $0x4] sm:$0xf]
        %v1328 = vld [vmem:[#allocation8 + $0x8] sm:$0xf]
        %v1329 = vld [vmem:[#allocation8 + $0xc] sm:$0xf]
        %v1330 = vld [vmem:[#allocation8 + $0x10] sm:$0xf]
        %v1331 = vld [vmem:[#allocation8 + $0x14] sm:$0xf]
        %v1332 = vld [vmem:[#allocation8 + $0x18] sm:$0xf]
        %v1333 = vld [vmem:[#allocation8 + $0x1c] sm:$0xf]
        %v1334 = vld [vmem:[#allocation8 + $0x20] sm:$0xf]
        %v1335 = vld [vmem:[#allocation8 + $0x24] sm:$0xf]
        %v1336 = vld [vmem:[#allocation8 + $0x28] sm:$0xf]
        %v1337 = vld [vmem:[#allocation8 + $0x2c] sm:$0xf]
        %v1338 = vld [vmem:[#allocation8 + $0x30] sm:$0xf]
        %v1339 = vld [vmem:[#allocation8 + $0x34] sm:$0xf]
        %v1340 = vld [vmem:[#allocation8 + $0x38] sm:$0xf]
        %v1341 = vld [vmem:[#allocation8 + $0x3c] sm:$0xf]
        %v1342 = vld [vmem:[%s6] sm:$0x1]
        %v1344 = vlaneseq
        %v1345 = vshrl.u32 %v1344, 7
        %v1346 = vsub.s32 0, %v1345
        %v1347 = vrot.slane %v1342, %v1346
        %v1365 = vunpack.c.l.b16 %v1326
        %v1366 = vunpack.c.l.b16 %v1327
        %v1367 = vunpack.c.l.b16 %v1328
        %v1368 = vunpack.c.l.b16 %v1329
        %v1369 = vunpack.c.l.b16 %v1330
        %v1370 = vunpack.c.l.b16 %v1331
        %v1371 = vunpack.c.l.b16 %v1332
        %v1372 = vunpack.c.l.b16 %v1333
        %v1373 = vunpack.c.l.b16 %v1334
        %v1374 = vunpack.c.l.b16 %v1335
        %v1375 = vunpack.c.l.b16 %v1336
        %v1376 = vunpack.c.l.b16 %v1337
        %v1377 = vunpack.c.l.b16 %v1338
        %v1378 = vunpack.c.l.b16 %v1339
        %v1379 = vunpack.c.l.b16 %v1340
        %v1380 = vunpack.c.l.b16 %v1341
        %v1381 = vpack.c.b16 %v1366, %v1365
        %v1382 = vpack.c.b16 %v1368, %v1367
        %v1383 = vpack.c.b16 %v1370, %v1369
        %v1384 = vpack.c.b16 %v1372, %v1371
        %v1385 = vpack.c.b16 %v1374, %v1373
        %v1386 = vpack.c.b16 %v1376, %v1375
        %v1387 = vpack.c.b16 %v1378, %v1377
        %v1388 = vpack.c.b16 %v1380, %v1379
        %1397 = vmatprep.subr.bf16.mxu0 0
        %1398 = vmatpush1.bf16.msra.mxu0 %v1381
        %1399 = vmatprep.subr.bf16.mxu0 0
        %1400 = vmatpush1.bf16.msra.mxu0 %v1382
        %1401 = vmatprep.subr.bf16.mxu0 0
        %1402 = vmatpush1.bf16.msra.mxu0 %v1383
        %1403 = vmatprep.subr.bf16.mxu0 0
        %1404 = vmatpush1.bf16.msra.mxu0 %v1384
        %1405 = vmatprep.subr.bf16.mxu0 0
        %1406 = vmatpush1.bf16.msra.mxu0 %v1385
        %1407 = vmatprep.subr.bf16.mxu0 0
        %1408 = vmatpush1.bf16.msra.mxu0 %v1386
        %1409 = vmatprep.subr.bf16.mxu0 0
        %1410 = vmatpush1.bf16.msra.mxu0 %v1387
        %1411 = vmatprep.subr.bf16.mxu0 0
        %1412 = vmatpush1.bf16.msra.mxu0 %v1388
        %1413 = vmatprep.subr.bf16.mxu0 0
        %1414 = vmatpush1.bf16.msra.mxu0 0
        %1415 = vmatprep.subr.bf16.mxu0 0
        %1416 = vmatpush1.bf16.msra.mxu0 0
        %1417 = vmatprep.subr.bf16.mxu0 0
        %1418 = vmatpush1.bf16.msra.mxu0 0
        %1419 = vmatprep.subr.bf16.mxu0 0
        %1420 = vmatpush1.bf16.msra.mxu0 0
        %1421 = vmatprep.subr.bf16.mxu0 0
        %1422 = vmatpush1.bf16.msra.mxu0 0
        %1423 = vmatprep.subr.bf16.mxu0 0
        %1424 = vmatpush1.bf16.msra.mxu0 0
        %1425 = vmatprep.subr.bf16.mxu0 0
        %1426 = vmatpush1.bf16.msra.mxu0 0
        %1427 = vmatprep.subr.bf16.mxu0 0
        %1428 = vmatpush1.bf16.msra.mxu0 0
        %1429 = vmatprep.mubr.bf16.mxu0 0
        %1430 = vmatmul.mubr.bf16.gmra.mrb[0].mxu0 %v1310
        %v1431 = vpop.f32.mrb[0].mxu0
        %v1432 = vadd.f32 %v1347, %v1431
        %v1433 = vpop.f32.mrb[0].mxu0
        %v1434 = vpop.f32.mrb[0].mxu0
        %v1435 = vadd.f32 %v1347, %v1434
        %v1436 = vpop.f32.mrb[0].mxu0
        %1437 = vmatprep.mubr.bf16.mxu0 0
        %1438 = vmatmul.mubr.bf16.gmra.mrb[0].mxu0 %v1311
        %v1439 = vpop.f32.mrb[0].mxu0
        %v1440 = vadd.f32 %v1347, %v1439
        %v1441 = vpop.f32.mrb[0].mxu0
        %v1442 = vpop.f32.mrb[0].mxu0
        %v1443 = vadd.f32 %v1347, %v1442
        %v1444 = vpop.f32.mrb[0].mxu0
        %1445 = vmatprep.mubr.bf16.mxu0 0
        %1446 = vmatmul.mubr.bf16.gmra.mrb[0].mxu0 %v1312
        %v1447 = vpop.f32.mrb[0].mxu0
        %v1448 = vadd.f32 %v1347, %v1447
        %v1449 = vpop.f32.mrb[0].mxu0
        %v1450 = vpop.f32.mrb[0].mxu0
        %v1451 = vadd.f32 %v1347, %v1450
        %v1452 = vpop.f32.mrb[0].mxu0
        %1453 = vmatprep.mubr.bf16.mxu0 0
        %1454 = vmatmul.mubr.bf16.gmra.mrb[0].mxu0 %v1313
        %v1455 = vpop.f32.mrb[0].mxu0
        %v1456 = vadd.f32 %v1347, %v1455
        %v1457 = vpop.f32.mrb[0].mxu0
        %v1458 = vpop.f32.mrb[0].mxu0
        %v1459 = vadd.f32 %v1347, %v1458
        %v1460 = vpop.f32.mrb[0].mxu0
        %1461 = vmatprep.mubr.bf16.mxu0 0
        %1462 = vmatmul.mubr.bf16.gmra.mrb[0].mxu0 %v1314
        %v1463 = vpop.f32.mrb[0].mxu0
        %v1464 = vadd.f32 %v1347, %v1463
        %v1465 = vpop.f32.mrb[0].mxu0
        %v1466 = vpop.f32.mrb[0].mxu0
        %v1467 = vadd.f32 %v1347, %v1466
        %v1468 = vpop.f32.mrb[0].mxu0
        %1469 = vmatprep.mubr.bf16.mxu0 0
        %1470 = vmatmul.mubr.bf16.gmra.mrb[0].mxu0 %v1315
        %v1471 = vpop.f32.mrb[0].mxu0
        %v1472 = vadd.f32 %v1347, %v1471
        %v1473 = vpop.f32.mrb[0].mxu0
        %v1474 = vpop.f32.mrb[0].mxu0
        %v1475 = vadd.f32 %v1347, %v1474
        %v1476 = vpop.f32.mrb[0].mxu0
        %1477 = vmatprep.mubr.bf16.mxu0 0
        %1478 = vmatmul.mubr.bf16.gmra.mrb[0].mxu0 %v1316
        %v1479 = vpop.f32.mrb[0].mxu0
        %v1480 = vadd.f32 %v1347, %v1479
        %v1481 = vpop.f32.mrb[0].mxu0
        %v1482 = vpop.f32.mrb[0].mxu0
        %v1483 = vadd.f32 %v1347, %v1482
        %v1484 = vpop.f32.mrb[0].mxu0
        %1485 = vmatprep.mubr.bf16.mxu0 0
        %1486 = vmatmul.mubr.bf16.gmra.mrb[0].mxu0 %v1317
        %v1487 = vpop.f32.mrb[0].mxu0
        %v1488 = vadd.f32 %v1347, %v1487
        %v1489 = vpop.f32.mrb[0].mxu0
        %v1490 = vpop.f32.mrb[0].mxu0
        %v1491 = vadd.f32 %v1347, %v1490
        %v1492 = vpop.f32.mrb[0].mxu0
        %1493 = vmatprep.mubr.bf16.mxu0 0
        %1494 = vmatmul.mubr.bf16.gmra.mrb[0].mxu0 %v1318
        %v1495 = vpop.f32.mrb[0].mxu0
        %v1496 = vadd.f32 %v1347, %v1495
        %v1497 = vpop.f32.mrb[0].mxu0
        %v1498 = vpop.f32.mrb[0].mxu0
        %v1499 = vadd.f32 %v1347, %v1498
        %v1500 = vpop.f32.mrb[0].mxu0
        %1501 = vmatprep.mubr.bf16.mxu0 0
        %1502 = vmatmul.mubr.bf16.gmra.mrb[0].mxu0 %v1319
        %v1503 = vpop.f32.mrb[0].mxu0
        %v1504 = vadd.f32 %v1347, %v1503
        %v1505 = vpop.f32.mrb[0].mxu0
        %v1506 = vpop.f32.mrb[0].mxu0
        %v1507 = vadd.f32 %v1347, %v1506
        %v1508 = vpop.f32.mrb[0].mxu0
        %1509 = vmatprep.mubr.bf16.mxu0 0
        %1510 = vmatmul.mubr.bf16.gmra.mrb[0].mxu0 %v1320
        %v1511 = vpop.f32.mrb[0].mxu0
        %v1512 = vadd.f32 %v1347, %v1511
        %v1513 = vpop.f32.mrb[0].mxu0
        %v1514 = vpop.f32.mrb[0].mxu0
        %v1515 = vadd.f32 %v1347, %v1514
        %v1516 = vpop.f32.mrb[0].mxu0
        %1517 = vmatprep.mubr.bf16.mxu0 0
        %1518 = vmatmul.mubr.bf16.gmra.mrb[0].mxu0 %v1321
        %v1519 = vpop.f32.mrb[0].mxu0
        %v1520 = vadd.f32 %v1347, %v1519
        %v1521 = vpop.f32.mrb[0].mxu0
        %v1522 = vpop.f32.mrb[0].mxu0
        %v1523 = vadd.f32 %v1347, %v1522
        %v1524 = vpop.f32.mrb[0].mxu0
        %1525 = vmatprep.mubr.bf16.mxu0 0
        %1526 = vmatmul.mubr.bf16.gmra.mrb[0].mxu0 %v1322
        %v1527 = vpop.f32.mrb[0].mxu0
        %v1528 = vadd.f32 %v1347, %v1527
        %v1529 = vpop.f32.mrb[0].mxu0
        %v1530 = vpop.f32.mrb[0].mxu0
        %v1531 = vadd.f32 %v1347, %v1530
        %v1532 = vpop.f32.mrb[0].mxu0
        %1533 = vmatprep.mubr.bf16.mxu0 0
        %1534 = vmatmul.mubr.bf16.gmra.mrb[0].mxu0 %v1323
        %v1535 = vpop.f32.mrb[0].mxu0
        %v1536 = vadd.f32 %v1347, %v1535
        %v1537 = vpop.f32.mrb[0].mxu0
        %v1538 = vpop.f32.mrb[0].mxu0
        %v1539 = vadd.f32 %v1347, %v1538
        %v1540 = vpop.f32.mrb[0].mxu0
        %1541 = vmatprep.mubr.bf16.mxu0 0
        %1542 = vmatmul.mubr.bf16.gmra.mrb[0].mxu0 %v1324
        %v1543 = vpop.f32.mrb[0].mxu0
        %v1544 = vadd.f32 %v1347, %v1543
        %v1545 = vpop.f32.mrb[0].mxu0
        %v1546 = vpop.f32.mrb[0].mxu0
        %v1547 = vadd.f32 %v1347, %v1546
        %v1548 = vpop.f32.mrb[0].mxu0
        %1549 = vmatprep.mubr.bf16.mxu0 0
        %1550 = vmatmul.mubr.bf16.gmra.mrb[0].mxu0 %v1325
        %v1551 = vpop.f32.mrb[0].mxu0
        %v1552 = vadd.f32 %v1347, %v1551
        %v1553 = vpop.f32.mrb[0].mxu0
        %v1554 = vpop.f32.mrb[0].mxu0
        %v1555 = vadd.f32 %v1347, %v1554
        %v1556 = vpop.f32.mrb[0].mxu0
        %1557 = vdwg.mxu0
        %v1558 = vpack.c.bf16 %v1435, %v1432
        %v1559 = vpack.c.bf16 %v1443, %v1440
        %v1560 = vpack.c.bf16 %v1451, %v1448
        %v1561 = vpack.c.bf16 %v1459, %v1456
        %v1562 = vpack.c.bf16 %v1467, %v1464
        %v1563 = vpack.c.bf16 %v1475, %v1472
        %v1564 = vpack.c.bf16 %v1483, %v1480
        %v1565 = vpack.c.bf16 %v1491, %v1488
        %v1566 = vpack.c.bf16 %v1499, %v1496
        %v1567 = vpack.c.bf16 %v1507, %v1504
        %v1568 = vpack.c.bf16 %v1515, %v1512
        %v1569 = vpack.c.bf16 %v1523, %v1520
        %v1570 = vpack.c.bf16 %v1531, %v1528
        %v1571 = vpack.c.bf16 %v1539, %v1536
        %v1572 = vpack.c.bf16 %v1547, %v1544
        %v1573 = vpack.c.bf16 %v1555, %v1552
        %v1590 = vunpack.c.l.b16 %v1558
        %v1591 = vunpack.c.h.b16 %v1558
        %v1592 = vunpack.c.l.b16 %v1559
        %v1593 = vunpack.c.h.b16 %v1559
        %v1594 = vunpack.c.l.b16 %v1560
        %v1595 = vunpack.c.h.b16 %v1560
        %v1596 = vunpack.c.l.b16 %v1561
        %v1597 = vunpack.c.h.b16 %v1561
        %v1598 = vunpack.c.l.b16 %v1562
        %v1599 = vunpack.c.h.b16 %v1562
        %v1600 = vunpack.c.l.b16 %v1563
        %v1601 = vunpack.c.h.b16 %v1563
        %v1602 = vunpack.c.l.b16 %v1564
        %v1603 = vunpack.c.h.b16 %v1564
        %v1604 = vunpack.c.l.b16 %v1565
        %v1605 = vunpack.c.h.b16 %v1565
        %v1606 = vunpack.c.l.b16 %v1566
        %v1607 = vunpack.c.h.b16 %v1566
        %v1608 = vunpack.c.l.b16 %v1567
        %v1609 = vunpack.c.h.b16 %v1567
        %v1610 = vunpack.c.l.b16 %v1568
        %v1611 = vunpack.c.h.b16 %v1568
        %v1612 = vunpack.c.l.b16 %v1569
        %v1613 = vunpack.c.h.b16 %v1569
        %v1614 = vunpack.c.l.b16 %v1570
        %v1615 = vunpack.c.h.b16 %v1570
        %v1616 = vunpack.c.l.b16 %v1571
        %v1617 = vunpack.c.h.b16 %v1571
        %v1618 = vunpack.c.l.b16 %v1572
        %v1619 = vunpack.c.h.b16 %v1572
        %v1620 = vunpack.c.l.b16 %v1573
        %v1621 = vunpack.c.h.b16 %v1573
        %v1622 = vpack.c.b16 %v1590, %v1590
        %v1623 = vpack.c.b16 %v1591, %v1591
        %v1624 = vpack.c.b16 %v1592, %v1592
        %v1625 = vpack.c.b16 %v1593, %v1593
        %v1626 = vpack.c.b16 %v1594, %v1594
        %v1627 = vpack.c.b16 %v1595, %v1595
        %v1628 = vpack.c.b16 %v1596, %v1596
        %v1629 = vpack.c.b16 %v1597, %v1597
        %v1630 = vpack.c.b16 %v1598, %v1598
        %v1631 = vpack.c.b16 %v1599, %v1599
        %v1632 = vpack.c.b16 %v1600, %v1600
        %v1633 = vpack.c.b16 %v1601, %v1601
        %v1634 = vpack.c.b16 %v1602, %v1602
        %v1635 = vpack.c.b16 %v1603, %v1603
        %v1636 = vpack.c.b16 %v1604, %v1604
        %v1637 = vpack.c.b16 %v1605, %v1605
        %v1638 = vpack.c.b16 %v1606, %v1606
        %v1639 = vpack.c.b16 %v1607, %v1607
        %v1640 = vpack.c.b16 %v1608, %v1608
        %v1641 = vpack.c.b16 %v1609, %v1609
        %v1642 = vpack.c.b16 %v1610, %v1610
        %v1643 = vpack.c.b16 %v1611, %v1611
        %v1644 = vpack.c.b16 %v1612, %v1612
        %v1645 = vpack.c.b16 %v1613, %v1613
        %v1646 = vpack.c.b16 %v1614, %v1614
        %v1647 = vpack.c.b16 %v1615, %v1615
        %v1648 = vpack.c.b16 %v1616, %v1616
        %v1649 = vpack.c.b16 %v1617, %v1617
        %v1650 = vpack.c.b16 %v1618, %v1618
        %v1651 = vpack.c.b16 %v1619, %v1619
        %v1652 = vpack.c.b16 %v1620, %v1620
        %v1653 = vpack.c.b16 %v1621, %v1621
        %1686 = vst [vmem:[%s586] sm:$0xf] %v1622
        %1687 = vst [vmem:[%s586 + $0x4] sm:$0xf] %v1623
        %1688 = vst [vmem:[%s586 + $0x8] sm:$0xf] %v1624
        %1689 = vst [vmem:[%s586 + $0xc] sm:$0xf] %v1625
        %1690 = vst [vmem:[%s586 + $0x10] sm:$0xf] %v1626
        %1691 = vst [vmem:[%s586 + $0x14] sm:$0xf] %v1627
        %1692 = vst [vmem:[%s586 + $0x18] sm:$0xf] %v1628
        %1693 = vst [vmem:[%s586 + $0x1c] sm:$0xf] %v1629
        %1694 = vst [vmem:[%s586 + $0x20] sm:$0xf] %v1630
        %1695 = vst [vmem:[%s586 + $0x24] sm:$0xf] %v1631
        %1696 = vst [vmem:[%s586 + $0x28] sm:$0xf] %v1632
        %1697 = vst [vmem:[%s586 + $0x2c] sm:$0xf] %v1633
        %1698 = vst [vmem:[%s586 + $0x30] sm:$0xf] %v1634
        %1699 = vst [vmem:[%s586 + $0x34] sm:$0xf] %v1635
        %1700 = vst [vmem:[%s586 + $0x38] sm:$0xf] %v1636
        %1701 = vst [vmem:[%s586 + $0x3c] sm:$0xf] %v1637
        %1702 = vst [vmem:[%s586 + $0x40] sm:$0xf] %v1638
        %1703 = vst [vmem:[%s586 + $0x44] sm:$0xf] %v1639
        %1704 = vst [vmem:[%s586 + $0x48] sm:$0xf] %v1640
        %1705 = vst [vmem:[%s586 + $0x4c] sm:$0xf] %v1641
        %1706 = vst [vmem:[%s586 + $0x50] sm:$0xf] %v1642
        %1707 = vst [vmem:[%s586 + $0x54] sm:$0xf] %v1643
        %1708 = vst [vmem:[%s586 + $0x58] sm:$0xf] %v1644
        %1709 = vst [vmem:[%s586 + $0x5c] sm:$0xf] %v1645
        %1710 = vst [vmem:[%s586 + $0x60] sm:$0xf] %v1646
        %1711 = vst [vmem:[%s586 + $0x64] sm:$0xf] %v1647
        %1712 = vst [vmem:[%s586 + $0x68] sm:$0xf] %v1648
        %1713 = vst [vmem:[%s586 + $0x6c] sm:$0xf] %v1649
        %1714 = vst [vmem:[%s586 + $0x70] sm:$0xf] %v1650
        %1715 = vst [vmem:[%s586 + $0x74] sm:$0xf] %v1651
        %1716 = vst [vmem:[%s586 + $0x78] sm:$0xf] %v1652
        %1717 = vst [vmem:[%s586 + $0x7c] sm:$0xf] %v1653
        %v1718 = vld [vmem:[#allocation10] sm:$0xf]
        %v1719 = vld [vmem:[#allocation10 + $0x4] sm:$0xf]
        %v1720 = vld [vmem:[#allocation10 + $0x8] sm:$0xf]
        %v1721 = vld [vmem:[#allocation10 + $0xc] sm:$0xf]
        %v1722 = vld [vmem:[#allocation10 + $0x10] sm:$0xf]
        %v1723 = vld [vmem:[#allocation10 + $0x14] sm:$0xf]
        %v1724 = vld [vmem:[#allocation10 + $0x18] sm:$0xf]
        %v1725 = vld [vmem:[#allocation10 + $0x1c] sm:$0xf]
        %v1726 = vld [vmem:[#allocation10 + $0x20] sm:$0xf]
        %v1727 = vld [vmem:[#allocation10 + $0x24] sm:$0xf]
        %v1728 = vld [vmem:[#allocation10 + $0x28] sm:$0xf]
        %v1729 = vld [vmem:[#allocation10 + $0x2c] sm:$0xf]
        %v1730 = vld [vmem:[#allocation10 + $0x30] sm:$0xf]
        %v1731 = vld [vmem:[#allocation10 + $0x34] sm:$0xf]
        %v1732 = vld [vmem:[#allocation10 + $0x38] sm:$0xf]
        %v1733 = vld [vmem:[#allocation10 + $0x3c] sm:$0xf]
        %v1734 = vld [vmem:[%s8] sm:$0x1]
        %v1736 = vlaneseq
        %v1737 = vshrl.u32 %v1736, 7
        %v1738 = vsub.s32 0, %v1737
        %v1739 = vrot.slane %v1734, %v1738
        %v1757 = vunpack.c.l.b16 %v1718
        %v1758 = vunpack.c.l.b16 %v1719
        %v1759 = vunpack.c.l.b16 %v1720
        %v1760 = vunpack.c.l.b16 %v1721
        %v1761 = vunpack.c.l.b16 %v1722
        %v1762 = vunpack.c.l.b16 %v1723
        %v1763 = vunpack.c.l.b16 %v1724
        %v1764 = vunpack.c.l.b16 %v1725
        %v1765 = vunpack.c.l.b16 %v1726
        %v1766 = vunpack.c.l.b16 %v1727
        %v1767 = vunpack.c.l.b16 %v1728
        %v1768 = vunpack.c.l.b16 %v1729
        %v1769 = vunpack.c.l.b16 %v1730
        %v1770 = vunpack.c.l.b16 %v1731
        %v1771 = vunpack.c.l.b16 %v1732
        %v1772 = vunpack.c.l.b16 %v1733
        %v1773 = vpack.c.b16 %v1758, %v1757
        %v1774 = vpack.c.b16 %v1760, %v1759
        %v1775 = vpack.c.b16 %v1762, %v1761
        %v1776 = vpack.c.b16 %v1764, %v1763
        %v1777 = vpack.c.b16 %v1766, %v1765
        %v1778 = vpack.c.b16 %v1768, %v1767
        %v1779 = vpack.c.b16 %v1770, %v1769
        %v1780 = vpack.c.b16 %v1772, %v1771
        %1789 = vmatprep.subr.bf16.mxu0 0
        %1790 = vmatpush1.bf16.msra.mxu0 %v1773
        %1791 = vmatprep.subr.bf16.mxu0 0
        %1792 = vmatpush1.bf16.msra.mxu0 %v1774
        %1793 = vmatprep.subr.bf16.mxu0 0
        %1794 = vmatpush1.bf16.msra.mxu0 %v1775
        %1795 = vmatprep.subr.bf16.mxu0 0
        %1796 = vmatpush1.bf16.msra.mxu0 %v1776
        %1797 = vmatprep.subr.bf16.mxu0 0
        %1798 = vmatpush1.bf16.msra.mxu0 %v1777
        %1799 = vmatprep.subr.bf16.mxu0 0
        %1800 = vmatpush1.bf16.msra.mxu0 %v1778
        %1801 = vmatprep.subr.bf16.mxu0 0
        %1802 = vmatpush1.bf16.msra.mxu0 %v1779
        %1803 = vmatprep.subr.bf16.mxu0 0
        %1804 = vmatpush1.bf16.msra.mxu0 %v1780
        %1805 = vmatprep.subr.bf16.mxu0 0
        %1806 = vmatpush1.bf16.msra.mxu0 0
        %1807 = vmatprep.subr.bf16.mxu0 0
        %1808 = vmatpush1.bf16.msra.mxu0 0
        %1809 = vmatprep.subr.bf16.mxu0 0
        %1810 = vmatpush1.bf16.msra.mxu0 0
        %1811 = vmatprep.subr.bf16.mxu0 0
        %1812 = vmatpush1.bf16.msra.mxu0 0
        %1813 = vmatprep.subr.bf16.mxu0 0
        %1814 = vmatpush1.bf16.msra.mxu0 0
        %1815 = vmatprep.subr.bf16.mxu0 0
        %1816 = vmatpush1.bf16.msra.mxu0 0
        %1817 = vmatprep.subr.bf16.mxu0 0
        %1818 = vmatpush1.bf16.msra.mxu0 0
        %1819 = vmatprep.subr.bf16.mxu0 0
        %1820 = vmatpush1.bf16.msra.mxu0 0
        %1821 = vmatprep.mubr.bf16.mxu0 0
        %1822 = vmatmul.mubr.bf16.gmra.mrb[0].mxu0 %v1558
        %v1823 = vpop.f32.mrb[0].mxu0
        %v1824 = vadd.f32 %v1739, %v1823
        %v1825 = vpop.f32.mrb[0].mxu0
        %v1826 = vpop.f32.mrb[0].mxu0
        %v1827 = vadd.f32 %v1739, %v1826
        %v1828 = vpop.f32.mrb[0].mxu0
        %1829 = vmatprep.mubr.bf16.mxu0 0
        %1830 = vmatmul.mubr.bf16.gmra.mrb[0].mxu0 %v1559
        %v1831 = vpop.f32.mrb[0].mxu0
        %v1832 = vadd.f32 %v1739, %v1831
        %v1833 = vpop.f32.mrb[0].mxu0
        %v1834 = vpop.f32.mrb[0].mxu0
        %v1835 = vadd.f32 %v1739, %v1834
        %v1836 = vpop.f32.mrb[0].mxu0
        %1837 = vmatprep.mubr.bf16.mxu0 0
        %1838 = vmatmul.mubr.bf16.gmra.mrb[0].mxu0 %v1560
        %v1839 = vpop.f32.mrb[0].mxu0
        %v1840 = vadd.f32 %v1739, %v1839
        %v1841 = vpop.f32.mrb[0].mxu0
        %v1842 = vpop.f32.mrb[0].mxu0
        %v1843 = vadd.f32 %v1739, %v1842
        %v1844 = vpop.f32.mrb[0].mxu0
        %1845 = vmatprep.mubr.bf16.mxu0 0
        %1846 = vmatmul.mubr.bf16.gmra.mrb[0].mxu0 %v1561
        %v1847 = vpop.f32.mrb[0].mxu0
        %v1848 = vadd.f32 %v1739, %v1847
        %v1849 = vpop.f32.mrb[0].mxu0
        %v1850 = vpop.f32.mrb[0].mxu0
        %v1851 = vadd.f32 %v1739, %v1850
        %v1852 = vpop.f32.mrb[0].mxu0
        %1853 = vmatprep.mubr.bf16.mxu0 0
        %1854 = vmatmul.mubr.bf16.gmra.mrb[0].mxu0 %v1562
        %v1855 = vpop.f32.mrb[0].mxu0
        %v1856 = vadd.f32 %v1739, %v1855
        %v1857 = vpop.f32.mrb[0].mxu0
        %v1858 = vpop.f32.mrb[0].mxu0
        %v1859 = vadd.f32 %v1739, %v1858
        %v1860 = vpop.f32.mrb[0].mxu0
        %1861 = vmatprep.mubr.bf16.mxu0 0
        %1862 = vmatmul.mubr.bf16.gmra.mrb[0].mxu0 %v1563
        %v1863 = vpop.f32.mrb[0].mxu0
        %v1864 = vadd.f32 %v1739, %v1863
        %v1865 = vpop.f32.mrb[0].mxu0
        %v1866 = vpop.f32.mrb[0].mxu0
        %v1867 = vadd.f32 %v1739, %v1866
        %v1868 = vpop.f32.mrb[0].mxu0
        %1869 = vmatprep.mubr.bf16.mxu0 0
        %1870 = vmatmul.mubr.bf16.gmra.mrb[0].mxu0 %v1564
        %v1871 = vpop.f32.mrb[0].mxu0
        %v1872 = vadd.f32 %v1739, %v1871
        %v1873 = vpop.f32.mrb[0].mxu0
        %v1874 = vpop.f32.mrb[0].mxu0
        %v1875 = vadd.f32 %v1739, %v1874
        %v1876 = vpop.f32.mrb[0].mxu0
        %1877 = vmatprep.mubr.bf16.mxu0 0
        %1878 = vmatmul.mubr.bf16.gmra.mrb[0].mxu0 %v1565
        %v1879 = vpop.f32.mrb[0].mxu0
        %v1880 = vadd.f32 %v1739, %v1879
        %v1881 = vpop.f32.mrb[0].mxu0
        %v1882 = vpop.f32.mrb[0].mxu0
        %v1883 = vadd.f32 %v1739, %v1882
        %v1884 = vpop.f32.mrb[0].mxu0
        %1885 = vmatprep.mubr.bf16.mxu0 0
        %1886 = vmatmul.mubr.bf16.gmra.mrb[0].mxu0 %v1566
        %v1887 = vpop.f32.mrb[0].mxu0
        %v1888 = vadd.f32 %v1739, %v1887
        %v1889 = vpop.f32.mrb[0].mxu0
        %v1890 = vpop.f32.mrb[0].mxu0
        %v1891 = vadd.f32 %v1739, %v1890
        %v1892 = vpop.f32.mrb[0].mxu0
        %1893 = vmatprep.mubr.bf16.mxu0 0
        %1894 = vmatmul.mubr.bf16.gmra.mrb[0].mxu0 %v1567
        %v1895 = vpop.f32.mrb[0].mxu0
        %v1896 = vadd.f32 %v1739, %v1895
        %v1897 = vpop.f32.mrb[0].mxu0
        %v1898 = vpop.f32.mrb[0].mxu0
        %v1899 = vadd.f32 %v1739, %v1898
        %v1900 = vpop.f32.mrb[0].mxu0
        %1901 = vmatprep.mubr.bf16.mxu0 0
        %1902 = vmatmul.mubr.bf16.gmra.mrb[0].mxu0 %v1568
        %v1903 = vpop.f32.mrb[0].mxu0
        %v1904 = vadd.f32 %v1739, %v1903
        %v1905 = vpop.f32.mrb[0].mxu0
        %v1906 = vpop.f32.mrb[0].mxu0
        %v1907 = vadd.f32 %v1739, %v1906
        %v1908 = vpop.f32.mrb[0].mxu0
        %1909 = vmatprep.mubr.bf16.mxu0 0
        %1910 = vmatmul.mubr.bf16.gmra.mrb[0].mxu0 %v1569
        %v1911 = vpop.f32.mrb[0].mxu0
        %v1912 = vadd.f32 %v1739, %v1911
        %v1913 = vpop.f32.mrb[0].mxu0
        %v1914 = vpop.f32.mrb[0].mxu0
        %v1915 = vadd.f32 %v1739, %v1914
        %v1916 = vpop.f32.mrb[0].mxu0
        %1917 = vmatprep.mubr.bf16.mxu0 0
        %1918 = vmatmul.mubr.bf16.gmra.mrb[0].mxu0 %v1570
        %v1919 = vpop.f32.mrb[0].mxu0
        %v1920 = vadd.f32 %v1739, %v1919
        %v1921 = vpop.f32.mrb[0].mxu0
        %v1922 = vpop.f32.mrb[0].mxu0
        %v1923 = vadd.f32 %v1739, %v1922
        %v1924 = vpop.f32.mrb[0].mxu0
        %1925 = vmatprep.mubr.bf16.mxu0 0
        %1926 = vmatmul.mubr.bf16.gmra.mrb[0].mxu0 %v1571
        %v1927 = vpop.f32.mrb[0].mxu0
        %v1928 = vadd.f32 %v1739, %v1927
        %v1929 = vpop.f32.mrb[0].mxu0
        %v1930 = vpop.f32.mrb[0].mxu0
        %v1931 = vadd.f32 %v1739, %v1930
        %v1932 = vpop.f32.mrb[0].mxu0
        %1933 = vmatprep.mubr.bf16.mxu0 0
        %1934 = vmatmul.mubr.bf16.gmra.mrb[0].mxu0 %v1572
        %v1935 = vpop.f32.mrb[0].mxu0
        %v1936 = vadd.f32 %v1739, %v1935
        %v1937 = vpop.f32.mrb[0].mxu0
        %v1938 = vpop.f32.mrb[0].mxu0
        %v1939 = vadd.f32 %v1739, %v1938
        %v1940 = vpop.f32.mrb[0].mxu0
        %1941 = vmatprep.mubr.bf16.mxu0 0
        %1942 = vmatmul.mubr.bf16.gmra.mrb[0].mxu0 %v1573
        %v1943 = vpop.f32.mrb[0].mxu0
        %v1944 = vadd.f32 %v1739, %v1943
        %v1945 = vpop.f32.mrb[0].mxu0
        %v1946 = vpop.f32.mrb[0].mxu0
        %v1947 = vadd.f32 %v1739, %v1946
        %v1948 = vpop.f32.mrb[0].mxu0
        %1949 = vdwg.mxu0
        %vm1950 = vcmp.gt.f32.partialorder %v1824, 0.0
        %vm1951 = vcmp.gt.f32.partialorder %v1827, 0.0
        %vm1952 = vcmp.gt.f32.partialorder %v1832, 0.0
        %vm1953 = vcmp.gt.f32.partialorder %v1835, 0.0
        %vm1954 = vcmp.gt.f32.partialorder %v1840, 0.0
        %vm1955 = vcmp.gt.f32.partialorder %v1843, 0.0
        %vm1956 = vcmp.gt.f32.partialorder %v1848, 0.0
        %vm1957 = vcmp.gt.f32.partialorder %v1851, 0.0
        %vm1958 = vcmp.gt.f32.partialorder %v1856, 0.0
        %vm1959 = vcmp.gt.f32.partialorder %v1859, 0.0
        %vm1960 = vcmp.gt.f32.partialorder %v1864, 0.0
        %vm1961 = vcmp.gt.f32.partialorder %v1867, 0.0
        %vm1962 = vcmp.gt.f32.partialorder %v1872, 0.0
        %vm1963 = vcmp.gt.f32.partialorder %v1875, 0.0
        %vm1964 = vcmp.gt.f32.partialorder %v1880, 0.0
        %vm1965 = vcmp.gt.f32.partialorder %v1883, 0.0
        %vm1966 = vcmp.gt.f32.partialorder %v1888, 0.0
        %vm1967 = vcmp.gt.f32.partialorder %v1891, 0.0
        %vm1968 = vcmp.gt.f32.partialorder %v1896, 0.0
        %vm1969 = vcmp.gt.f32.partialorder %v1899, 0.0
        %vm1970 = vcmp.gt.f32.partialorder %v1904, 0.0
        %vm1971 = vcmp.gt.f32.partialorder %v1907, 0.0
        %vm1972 = vcmp.gt.f32.partialorder %v1912, 0.0
        %vm1973 = vcmp.gt.f32.partialorder %v1915, 0.0
        %vm1974 = vcmp.gt.f32.partialorder %v1920, 0.0
        %vm1975 = vcmp.gt.f32.partialorder %v1923, 0.0
        %vm1976 = vcmp.gt.f32.partialorder %v1928, 0.0
        %vm1977 = vcmp.gt.f32.partialorder %v1931, 0.0
        %vm1978 = vcmp.gt.f32.partialorder %v1936, 0.0
        %vm1979 = vcmp.gt.f32.partialorder %v1939, 0.0
        %vm1980 = vcmp.gt.f32.partialorder %v1944, 0.0
        %vm1981 = vcmp.gt.f32.partialorder %v1947, 0.0
        %v1982 = vmul.f32 %v1824, 0.01
        %v1983 = vmul.f32 %v1827, 0.01
        %v1984 = vmul.f32 %v1832, 0.01
        %v1985 = vmul.f32 %v1835, 0.01
        %v1986 = vmul.f32 %v1840, 0.01
        %v1987 = vmul.f32 %v1843, 0.01
        %v1988 = vmul.f32 %v1848, 0.01
        %v1989 = vmul.f32 %v1851, 0.01
        %v1990 = vmul.f32 %v1856, 0.01
        %v1991 = vmul.f32 %v1859, 0.01
        %v1992 = vmul.f32 %v1864, 0.01
        %v1993 = vmul.f32 %v1867, 0.01
        %v1994 = vmul.f32 %v1872, 0.01
        %v1995 = vmul.f32 %v1875, 0.01
        %v1996 = vmul.f32 %v1880, 0.01
        %v1997 = vmul.f32 %v1883, 0.01
        %v1998 = vmul.f32 %v1888, 0.01
        %v1999 = vmul.f32 %v1891, 0.01
        %v2000 = vmul.f32 %v1896, 0.01
        %v2001 = vmul.f32 %v1899, 0.01
        %v2002 = vmul.f32 %v1904, 0.01
        %v2003 = vmul.f32 %v1907, 0.01
        %v2004 = vmul.f32 %v1912, 0.01
        %v2005 = vmul.f32 %v1915, 0.01
        %v2006 = vmul.f32 %v1920, 0.01
        %v2007 = vmul.f32 %v1923, 0.01
        %v2008 = vmul.f32 %v1928, 0.01
        %v2009 = vmul.f32 %v1931, 0.01
        %v2010 = vmul.f32 %v1936, 0.01
        %v2011 = vmul.f32 %v1939, 0.01
        %v2012 = vmul.f32 %v1944, 0.01
        %v2013 = vmul.f32 %v1947, 0.01
        %v2014 = vsel %vm1950, %v1824, %v1982
        %v2015 = vsel %vm1951, %v1827, %v1983
        %v2016 = vsel %vm1952, %v1832, %v1984
        %v2017 = vsel %vm1953, %v1835, %v1985
        %v2018 = vsel %vm1954, %v1840, %v1986
        %v2019 = vsel %vm1955, %v1843, %v1987
        %v2020 = vsel %vm1956, %v1848, %v1988
        %v2021 = vsel %vm1957, %v1851, %v1989
        %v2022 = vsel %vm1958, %v1856, %v1990
        %v2023 = vsel %vm1959, %v1859, %v1991
        %v2024 = vsel %vm1960, %v1864, %v1992
        %v2025 = vsel %vm1961, %v1867, %v1993
        %v2026 = vsel %vm1962, %v1872, %v1994
        %v2027 = vsel %vm1963, %v1875, %v1995
        %v2028 = vsel %vm1964, %v1880, %v1996
        %v2029 = vsel %vm1965, %v1883, %v1997
        %v2030 = vsel %vm1966, %v1888, %v1998
        %v2031 = vsel %vm1967, %v1891, %v1999
        %v2032 = vsel %vm1968, %v1896, %v2000
        %v2033 = vsel %vm1969, %v1899, %v2001
        %v2034 = vsel %vm1970, %v1904, %v2002
        %v2035 = vsel %vm1971, %v1907, %v2003
        %v2036 = vsel %vm1972, %v1912, %v2004
        %v2037 = vsel %vm1973, %v1915, %v2005
        %v2038 = vsel %vm1974, %v1920, %v2006
        %v2039 = vsel %vm1975, %v1923, %v2007
        %v2040 = vsel %vm1976, %v1928, %v2008
        %v2041 = vsel %vm1977, %v1931, %v2009
        %v2042 = vsel %vm1978, %v1936, %v2010
        %v2043 = vsel %vm1979, %v1939, %v2011
        %v2044 = vsel %vm1980, %v1944, %v2012
        %v2045 = vsel %vm1981, %v1947, %v2013
        %v2046 = vpack.c.bf16 %v2015, %v2014
        %v2047 = vpack.c.bf16 %v2017, %v2016
        %v2048 = vpack.c.bf16 %v2019, %v2018
        %v2049 = vpack.c.bf16 %v2021, %v2020
        %v2050 = vpack.c.bf16 %v2023, %v2022
        %v2051 = vpack.c.bf16 %v2025, %v2024
        %v2052 = vpack.c.bf16 %v2027, %v2026
        %v2053 = vpack.c.bf16 %v2029, %v2028
        %v2054 = vpack.c.bf16 %v2031, %v2030
        %v2055 = vpack.c.bf16 %v2033, %v2032
        %v2056 = vpack.c.bf16 %v2035, %v2034
        %v2057 = vpack.c.bf16 %v2037, %v2036
        %v2058 = vpack.c.bf16 %v2039, %v2038
        %v2059 = vpack.c.bf16 %v2041, %v2040
        %v2060 = vpack.c.bf16 %v2043, %v2042
        %v2061 = vpack.c.bf16 %v2045, %v2044
        %v2062 = vld [vmem:[#allocation11] sm:$0xf]
        %v2063 = vld [vmem:[#allocation11 + $0x4] sm:$0xf]
        %v2064 = vld [vmem:[#allocation11 + $0x8] sm:$0xf]
        %v2065 = vld [vmem:[#allocation11 + $0xc] sm:$0xf]
        %v2066 = vld [vmem:[#allocation11 + $0x10] sm:$0xf]
        %v2067 = vld [vmem:[#allocation11 + $0x14] sm:$0xf]
        %v2068 = vld [vmem:[#allocation11 + $0x18] sm:$0xf]
        %v2069 = vld [vmem:[#allocation11 + $0x1c] sm:$0xf]
        %v2070 = vld [vmem:[#allocation11 + $0x20] sm:$0xf]
        %v2071 = vld [vmem:[#allocation11 + $0x24] sm:$0xf]
        %v2072 = vld [vmem:[#allocation11 + $0x28] sm:$0xf]
        %v2073 = vld [vmem:[#allocation11 + $0x2c] sm:$0xf]
        %v2074 = vld [vmem:[#allocation11 + $0x30] sm:$0xf]
        %v2075 = vld [vmem:[#allocation11 + $0x34] sm:$0xf]
        %v2076 = vld [vmem:[#allocation11 + $0x38] sm:$0xf]
        %v2077 = vld [vmem:[#allocation11 + $0x3c] sm:$0xf]
        %v2078 = vld [vmem:[%s10] sm:$0x1]
        %v2080 = vlaneseq
        %v2081 = vshrl.u32 %v2080, 7
        %v2082 = vsub.s32 0, %v2081
        %v2083 = vrot.slane %v2078, %v2082
        %v2101 = vunpack.c.l.b16 %v2062
        %v2102 = vunpack.c.l.b16 %v2063
        %v2103 = vunpack.c.l.b16 %v2064
        %v2104 = vunpack.c.l.b16 %v2065
        %v2105 = vunpack.c.l.b16 %v2066
        %v2106 = vunpack.c.l.b16 %v2067
        %v2107 = vunpack.c.l.b16 %v2068
        %v2108 = vunpack.c.l.b16 %v2069
        %v2109 = vunpack.c.l.b16 %v2070
        %v2110 = vunpack.c.l.b16 %v2071
        %v2111 = vunpack.c.l.b16 %v2072
        %v2112 = vunpack.c.l.b16 %v2073
        %v2113 = vunpack.c.l.b16 %v2074
        %v2114 = vunpack.c.l.b16 %v2075
        %v2115 = vunpack.c.l.b16 %v2076
        %v2116 = vunpack.c.l.b16 %v2077
        %v2117 = vpack.c.b16 %v2102, %v2101
        %v2118 = vpack.c.b16 %v2104, %v2103
        %v2119 = vpack.c.b16 %v2106, %v2105
        %v2120 = vpack.c.b16 %v2108, %v2107
        %v2121 = vpack.c.b16 %v2110, %v2109
        %v2122 = vpack.c.b16 %v2112, %v2111
        %v2123 = vpack.c.b16 %v2114, %v2113
        %v2124 = vpack.c.b16 %v2116, %v2115
        %2133 = vmatprep.subr.bf16.mxu0 0
        %2134 = vmatpush1.bf16.msra.mxu0 %v2117
        %2135 = vmatprep.subr.bf16.mxu0 0
        %2136 = vmatpush1.bf16.msra.mxu0 %v2118
        %2137 = vmatprep.subr.bf16.mxu0 0
        %2138 = vmatpush1.bf16.msra.mxu0 %v2119
        %2139 = vmatprep.subr.bf16.mxu0 0
        %2140 = vmatpush1.bf16.msra.mxu0 %v2120
        %2141 = vmatprep.subr.bf16.mxu0 0
        %2142 = vmatpush1.bf16.msra.mxu0 %v2121
        %2143 = vmatprep.subr.bf16.mxu0 0
        %2144 = vmatpush1.bf16.msra.mxu0 %v2122
        %2145 = vmatprep.subr.bf16.mxu0 0
        %2146 = vmatpush1.bf16.msra.mxu0 %v2123
        %2147 = vmatprep.subr.bf16.mxu0 0
        %2148 = vmatpush1.bf16.msra.mxu0 %v2124
        %2149 = vmatprep.subr.bf16.mxu0 0
        %2150 = vmatpush1.bf16.msra.mxu0 0
        %2151 = vmatprep.subr.bf16.mxu0 0
        %2152 = vmatpush1.bf16.msra.mxu0 0
        %2153 = vmatprep.subr.bf16.mxu0 0
        %2154 = vmatpush1.bf16.msra.mxu0 0
        %2155 = vmatprep.subr.bf16.mxu0 0
        %2156 = vmatpush1.bf16.msra.mxu0 0
        %2157 = vmatprep.subr.bf16.mxu0 0
        %2158 = vmatpush1.bf16.msra.mxu0 0
        %2159 = vmatprep.subr.bf16.mxu0 0
        %2160 = vmatpush1.bf16.msra.mxu0 0
        %2161 = vmatprep.subr.bf16.mxu0 0
        %2162 = vmatpush1.bf16.msra.mxu0 0
        %2163 = vmatprep.subr.bf16.mxu0 0
        %2164 = vmatpush1.bf16.msra.mxu0 0
        %2165 = vmatprep.mubr.bf16.mxu0 0
        %2166 = vmatmul.mubr.bf16.gmra.mrb[0].mxu0 %v2046
        %v2167 = vpop.f32.mrb[0].mxu0
        %v2168 = vadd.f32 %v2083, %v2167
        %v2169 = vpop.f32.mrb[0].mxu0
        %v2170 = vpop.f32.mrb[0].mxu0
        %v2171 = vadd.f32 %v2083, %v2170
        %v2172 = vpop.f32.mrb[0].mxu0
        %2173 = vmatprep.mubr.bf16.mxu0 0
        %2174 = vmatmul.mubr.bf16.gmra.mrb[0].mxu0 %v2047
        %v2175 = vpop.f32.mrb[0].mxu0
        %v2176 = vadd.f32 %v2083, %v2175
        %v2177 = vpop.f32.mrb[0].mxu0
        %v2178 = vpop.f32.mrb[0].mxu0
        %v2179 = vadd.f32 %v2083, %v2178
        %v2180 = vpop.f32.mrb[0].mxu0
        %2181 = vmatprep.mubr.bf16.mxu0 0
        %2182 = vmatmul.mubr.bf16.gmra.mrb[0].mxu0 %v2048
        %v2183 = vpop.f32.mrb[0].mxu0
        %v2184 = vadd.f32 %v2083, %v2183
        %v2185 = vpop.f32.mrb[0].mxu0
        %v2186 = vpop.f32.mrb[0].mxu0
        %v2187 = vadd.f32 %v2083, %v2186
        %v2188 = vpop.f32.mrb[0].mxu0
        %2189 = vmatprep.mubr.bf16.mxu0 0
        %2190 = vmatmul.mubr.bf16.gmra.mrb[0].mxu0 %v2049
        %v2191 = vpop.f32.mrb[0].mxu0
        %v2192 = vadd.f32 %v2083, %v2191
        %v2193 = vpop.f32.mrb[0].mxu0
        %v2194 = vpop.f32.mrb[0].mxu0
        %v2195 = vadd.f32 %v2083, %v2194
        %v2196 = vpop.f32.mrb[0].mxu0
        %2197 = vmatprep.mubr.bf16.mxu0 0
        %2198 = vmatmul.mubr.bf16.gmra.mrb[0].mxu0 %v2050
        %v2199 = vpop.f32.mrb[0].mxu0
        %v2200 = vadd.f32 %v2083, %v2199
        %v2201 = vpop.f32.mrb[0].mxu0
        %v2202 = vpop.f32.mrb[0].mxu0
        %v2203 = vadd.f32 %v2083, %v2202
        %v2204 = vpop.f32.mrb[0].mxu0
        %2205 = vmatprep.mubr.bf16.mxu0 0
        %2206 = vmatmul.mubr.bf16.gmra.mrb[0].mxu0 %v2051
        %v2207 = vpop.f32.mrb[0].mxu0
        %v2208 = vadd.f32 %v2083, %v2207
        %v2209 = vpop.f32.mrb[0].mxu0
        %v2210 = vpop.f32.mrb[0].mxu0
        %v2211 = vadd.f32 %v2083, %v2210
        %v2212 = vpop.f32.mrb[0].mxu0
        %2213 = vmatprep.mubr.bf16.mxu0 0
        %2214 = vmatmul.mubr.bf16.gmra.mrb[0].mxu0 %v2052
        %v2215 = vpop.f32.mrb[0].mxu0
        %v2216 = vadd.f32 %v2083, %v2215
        %v2217 = vpop.f32.mrb[0].mxu0
        %v2218 = vpop.f32.mrb[0].mxu0
        %v2219 = vadd.f32 %v2083, %v2218
        %v2220 = vpop.f32.mrb[0].mxu0
        %2221 = vmatprep.mubr.bf16.mxu0 0
        %2222 = vmatmul.mubr.bf16.gmra.mrb[0].mxu0 %v2053
        %v2223 = vpop.f32.mrb[0].mxu0
        %v2224 = vadd.f32 %v2083, %v2223
        %v2225 = vpop.f32.mrb[0].mxu0
        %v2226 = vpop.f32.mrb[0].mxu0
        %v2227 = vadd.f32 %v2083, %v2226
        %v2228 = vpop.f32.mrb[0].mxu0
        %2229 = vmatprep.mubr.bf16.mxu0 0
        %2230 = vmatmul.mubr.bf16.gmra.mrb[0].mxu0 %v2054
        %v2231 = vpop.f32.mrb[0].mxu0
        %v2232 = vadd.f32 %v2083, %v2231
        %v2233 = vpop.f32.mrb[0].mxu0
        %v2234 = vpop.f32.mrb[0].mxu0
        %v2235 = vadd.f32 %v2083, %v2234
        %v2236 = vpop.f32.mrb[0].mxu0
        %2237 = vmatprep.mubr.bf16.mxu0 0
        %2238 = vmatmul.mubr.bf16.gmra.mrb[0].mxu0 %v2055
        %v2239 = vpop.f32.mrb[0].mxu0
        %v2240 = vadd.f32 %v2083, %v2239
        %v2241 = vpop.f32.mrb[0].mxu0
        %v2242 = vpop.f32.mrb[0].mxu0
        %v2243 = vadd.f32 %v2083, %v2242
        %v2244 = vpop.f32.mrb[0].mxu0
        %2245 = vmatprep.mubr.bf16.mxu0 0
        %2246 = vmatmul.mubr.bf16.gmra.mrb[0].mxu0 %v2056
        %v2247 = vpop.f32.mrb[0].mxu0
        %v2248 = vadd.f32 %v2083, %v2247
        %v2249 = vpop.f32.mrb[0].mxu0
        %v2250 = vpop.f32.mrb[0].mxu0
        %v2251 = vadd.f32 %v2083, %v2250
        %v2252 = vpop.f32.mrb[0].mxu0
        %2253 = vmatprep.mubr.bf16.mxu0 0
        %2254 = vmatmul.mubr.bf16.gmra.mrb[0].mxu0 %v2057
        %v2255 = vpop.f32.mrb[0].mxu0
        %v2256 = vadd.f32 %v2083, %v2255
        %v2257 = vpop.f32.mrb[0].mxu0
        %v2258 = vpop.f32.mrb[0].mxu0
        %v2259 = vadd.f32 %v2083, %v2258
        %v2260 = vpop.f32.mrb[0].mxu0
        %2261 = vmatprep.mubr.bf16.mxu0 0
        %2262 = vmatmul.mubr.bf16.gmra.mrb[0].mxu0 %v2058
        %v2263 = vpop.f32.mrb[0].mxu0
        %v2264 = vadd.f32 %v2083, %v2263
        %v2265 = vpop.f32.mrb[0].mxu0
        %v2266 = vpop.f32.mrb[0].mxu0
        %v2267 = vadd.f32 %v2083, %v2266
        %v2268 = vpop.f32.mrb[0].mxu0
        %2269 = vmatprep.mubr.bf16.mxu0 0
        %2270 = vmatmul.mubr.bf16.gmra.mrb[0].mxu0 %v2059
        %v2271 = vpop.f32.mrb[0].mxu0
        %v2272 = vadd.f32 %v2083, %v2271
        %v2273 = vpop.f32.mrb[0].mxu0
        %v2274 = vpop.f32.mrb[0].mxu0
        %v2275 = vadd.f32 %v2083, %v2274
        %v2276 = vpop.f32.mrb[0].mxu0
        %2277 = vmatprep.mubr.bf16.mxu0 0
        %2278 = vmatmul.mubr.bf16.gmra.mrb[0].mxu0 %v2060
        %v2279 = vpop.f32.mrb[0].mxu0
        %v2280 = vadd.f32 %v2083, %v2279
        %v2281 = vpop.f32.mrb[0].mxu0
        %v2282 = vpop.f32.mrb[0].mxu0
        %v2283 = vadd.f32 %v2083, %v2282
        %v2284 = vpop.f32.mrb[0].mxu0
        %2285 = vmatprep.mubr.bf16.mxu0 0
        %2286 = vmatmul.mubr.bf16.gmra.mrb[0].mxu0 %v2061
        %v2287 = vpop.f32.mrb[0].mxu0
        %v2288 = vadd.f32 %v2083, %v2287
        %v2289 = vpop.f32.mrb[0].mxu0
        %v2290 = vpop.f32.mrb[0].mxu0
        %v2291 = vadd.f32 %v2083, %v2290
        %v2292 = vpop.f32.mrb[0].mxu0
        %2293 = vdwg.mxu0
        %vm2294 = vcmp.gt.f32.partialorder %v2168, 0.0
        %vm2295 = vcmp.gt.f32.partialorder %v2171, 0.0
        %vm2296 = vcmp.gt.f32.partialorder %v2176, 0.0
        %vm2297 = vcmp.gt.f32.partialorder %v2179, 0.0
        %vm2298 = vcmp.gt.f32.partialorder %v2184, 0.0
        %vm2299 = vcmp.gt.f32.partialorder %v2187, 0.0
        %vm2300 = vcmp.gt.f32.partialorder %v2192, 0.0
        %vm2301 = vcmp.gt.f32.partialorder %v2195, 0.0
        %vm2302 = vcmp.gt.f32.partialorder %v2200, 0.0
        %vm2303 = vcmp.gt.f32.partialorder %v2203, 0.0
        %vm2304 = vcmp.gt.f32.partialorder %v2208, 0.0
        %vm2305 = vcmp.gt.f32.partialorder %v2211, 0.0
        %vm2306 = vcmp.gt.f32.partialorder %v2216, 0.0
        %vm2307 = vcmp.gt.f32.partialorder %v2219, 0.0
        %vm2308 = vcmp.gt.f32.partialorder %v2224, 0.0
        %vm2309 = vcmp.gt.f32.partialorder %v2227, 0.0
        %vm2310 = vcmp.gt.f32.partialorder %v2232, 0.0
        %vm2311 = vcmp.gt.f32.partialorder %v2235, 0.0
        %vm2312 = vcmp.gt.f32.partialorder %v2240, 0.0
        %vm2313 = vcmp.gt.f32.partialorder %v2243, 0.0
        %vm2314 = vcmp.gt.f32.partialorder %v2248, 0.0
        %vm2315 = vcmp.gt.f32.partialorder %v2251, 0.0
        %vm2316 = vcmp.gt.f32.partialorder %v2256, 0.0
        %vm2317 = vcmp.gt.f32.partialorder %v2259, 0.0
        %vm2318 = vcmp.gt.f32.partialorder %v2264, 0.0
        %vm2319 = vcmp.gt.f32.partialorder %v2267, 0.0
        %vm2320 = vcmp.gt.f32.partialorder %v2272, 0.0
        %vm2321 = vcmp.gt.f32.partialorder %v2275, 0.0
        %vm2322 = vcmp.gt.f32.partialorder %v2280, 0.0
        %vm2323 = vcmp.gt.f32.partialorder %v2283, 0.0
        %vm2324 = vcmp.gt.f32.partialorder %v2288, 0.0
        %vm2325 = vcmp.gt.f32.partialorder %v2291, 0.0
        %v2326 = vmul.f32 %v2168, 0.01
        %v2327 = vmul.f32 %v2171, 0.01
        %v2328 = vmul.f32 %v2176, 0.01
        %v2329 = vmul.f32 %v2179, 0.01
        %v2330 = vmul.f32 %v2184, 0.01
        %v2331 = vmul.f32 %v2187, 0.01
        %v2332 = vmul.f32 %v2192, 0.01
        %v2333 = vmul.f32 %v2195, 0.01
        %v2334 = vmul.f32 %v2200, 0.01
        %v2335 = vmul.f32 %v2203, 0.01
        %v2336 = vmul.f32 %v2208, 0.01
        %v2337 = vmul.f32 %v2211, 0.01
        %v2338 = vmul.f32 %v2216, 0.01
        %v2339 = vmul.f32 %v2219, 0.01
        %v2340 = vmul.f32 %v2224, 0.01
        %v2341 = vmul.f32 %v2227, 0.01
        %v2342 = vmul.f32 %v2232, 0.01
        %v2343 = vmul.f32 %v2235, 0.01
        %v2344 = vmul.f32 %v2240, 0.01
        %v2345 = vmul.f32 %v2243, 0.01
        %v2346 = vmul.f32 %v2248, 0.01
        %v2347 = vmul.f32 %v2251, 0.01
        %v2348 = vmul.f32 %v2256, 0.01
        %v2349 = vmul.f32 %v2259, 0.01
        %v2350 = vmul.f32 %v2264, 0.01
        %v2351 = vmul.f32 %v2267, 0.01
        %v2352 = vmul.f32 %v2272, 0.01
        %v2353 = vmul.f32 %v2275, 0.01
        %v2354 = vmul.f32 %v2280, 0.01
        %v2355 = vmul.f32 %v2283, 0.01
        %v2356 = vmul.f32 %v2288, 0.01
        %v2357 = vmul.f32 %v2291, 0.01
        %v2358 = vsel %vm2294, %v2168, %v2326
        %v2359 = vsel %vm2295, %v2171, %v2327
        %v2360 = vsel %vm2296, %v2176, %v2328
        %v2361 = vsel %vm2297, %v2179, %v2329
        %v2362 = vsel %vm2298, %v2184, %v2330
        %v2363 = vsel %vm2299, %v2187, %v2331
        %v2364 = vsel %vm2300, %v2192, %v2332
        %v2365 = vsel %vm2301, %v2195, %v2333
        %v2366 = vsel %vm2302, %v2200, %v2334
        %v2367 = vsel %vm2303, %v2203, %v2335
        %v2368 = vsel %vm2304, %v2208, %v2336
        %v2369 = vsel %vm2305, %v2211, %v2337
        %v2370 = vsel %vm2306, %v2216, %v2338
        %v2371 = vsel %vm2307, %v2219, %v2339
        %v2372 = vsel %vm2308, %v2224, %v2340
        %v2373 = vsel %vm2309, %v2227, %v2341
        %v2374 = vsel %vm2310, %v2232, %v2342
        %v2375 = vsel %vm2311, %v2235, %v2343
        %v2376 = vsel %vm2312, %v2240, %v2344
        %v2377 = vsel %vm2313, %v2243, %v2345
        %v2378 = vsel %vm2314, %v2248, %v2346
        %v2379 = vsel %vm2315, %v2251, %v2347
        %v2380 = vsel %vm2316, %v2256, %v2348
        %v2381 = vsel %vm2317, %v2259, %v2349
        %v2382 = vsel %vm2318, %v2264, %v2350
        %v2383 = vsel %vm2319, %v2267, %v2351
        %v2384 = vsel %vm2320, %v2272, %v2352
        %v2385 = vsel %vm2321, %v2275, %v2353
        %v2386 = vsel %vm2322, %v2280, %v2354
        %v2387 = vsel %vm2323, %v2283, %v2355
        %v2388 = vsel %vm2324, %v2288, %v2356
        %v2389 = vsel %vm2325, %v2291, %v2357
        %v2390 = vpack.c.bf16 %v2359, %v2358
        %v2391 = vpack.c.bf16 %v2361, %v2360
        %v2392 = vpack.c.bf16 %v2363, %v2362
        %v2393 = vpack.c.bf16 %v2365, %v2364
        %v2394 = vpack.c.bf16 %v2367, %v2366
        %v2395 = vpack.c.bf16 %v2369, %v2368
        %v2396 = vpack.c.bf16 %v2371, %v2370
        %v2397 = vpack.c.bf16 %v2373, %v2372
        %v2398 = vpack.c.bf16 %v2375, %v2374
        %v2399 = vpack.c.bf16 %v2377, %v2376
        %v2400 = vpack.c.bf16 %v2379, %v2378
        %v2401 = vpack.c.bf16 %v2381, %v2380
        %v2402 = vpack.c.bf16 %v2383, %v2382
        %v2403 = vpack.c.bf16 %v2385, %v2384
        %v2404 = vpack.c.bf16 %v2387, %v2386
        %v2405 = vpack.c.bf16 %v2389, %v2388
        %v2406 = vld [vmem:[#allocation13] sm:$0xf]
        %v2407 = vld [vmem:[#allocation13 + $0x4] sm:$0xf]
        %v2408 = vld [vmem:[#allocation13 + $0x8] sm:$0xf]
        %v2409 = vld [vmem:[#allocation13 + $0xc] sm:$0xf]
        %v2410 = vld [vmem:[#allocation13 + $0x10] sm:$0xf]
        %v2411 = vld [vmem:[#allocation13 + $0x14] sm:$0xf]
        %v2412 = vld [vmem:[#allocation13 + $0x18] sm:$0xf]
        %v2413 = vld [vmem:[#allocation13 + $0x1c] sm:$0xf]
        %v2414 = vld [vmem:[#allocation13 + $0x20] sm:$0xf]
        %v2415 = vld [vmem:[#allocation13 + $0x24] sm:$0xf]
        %v2416 = vld [vmem:[#allocation13 + $0x28] sm:$0xf]
        %v2417 = vld [vmem:[#allocation13 + $0x2c] sm:$0xf]
        %v2418 = vld [vmem:[#allocation13 + $0x30] sm:$0xf]
        %v2419 = vld [vmem:[#allocation13 + $0x34] sm:$0xf]
        %v2420 = vld [vmem:[#allocation13 + $0x38] sm:$0xf]
        %v2421 = vld [vmem:[#allocation13 + $0x3c] sm:$0xf]
        %v2422 = vld [vmem:[%s12] sm:$0x1]
        %v2424 = vlaneseq
        %v2425 = vshrl.u32 %v2424, 7
        %v2426 = vsub.s32 0, %v2425
        %v2427 = vrot.slane %v2422, %v2426
        %v2445 = vunpack.c.l.b16 %v2406
        %v2446 = vunpack.c.l.b16 %v2407
        %v2447 = vunpack.c.l.b16 %v2408
        %v2448 = vunpack.c.l.b16 %v2409
        %v2449 = vunpack.c.l.b16 %v2410
        %v2450 = vunpack.c.l.b16 %v2411
        %v2451 = vunpack.c.l.b16 %v2412
        %v2452 = vunpack.c.l.b16 %v2413
        %v2453 = vunpack.c.l.b16 %v2414
        %v2454 = vunpack.c.l.b16 %v2415
        %v2455 = vunpack.c.l.b16 %v2416
        %v2456 = vunpack.c.l.b16 %v2417
        %v2457 = vunpack.c.l.b16 %v2418
        %v2458 = vunpack.c.l.b16 %v2419
        %v2459 = vunpack.c.l.b16 %v2420
        %v2460 = vunpack.c.l.b16 %v2421
        %v2461 = vpack.c.b16 %v2446, %v2445
        %v2462 = vpack.c.b16 %v2448, %v2447
        %v2463 = vpack.c.b16 %v2450, %v2449
        %v2464 = vpack.c.b16 %v2452, %v2451
        %v2465 = vpack.c.b16 %v2454, %v2453
        %v2466 = vpack.c.b16 %v2456, %v2455
        %v2467 = vpack.c.b16 %v2458, %v2457
        %v2468 = vpack.c.b16 %v2460, %v2459
        %2477 = vmatprep.subr.bf16.mxu0 0
        %2478 = vmatpush1.bf16.msra.mxu0 %v2461
        %2479 = vmatprep.subr.bf16.mxu0 0
        %2480 = vmatpush1.bf16.msra.mxu0 %v2462
        %2481 = vmatprep.subr.bf16.mxu0 0
        %2482 = vmatpush1.bf16.msra.mxu0 %v2463
        %2483 = vmatprep.subr.bf16.mxu0 0
        %2484 = vmatpush1.bf16.msra.mxu0 %v2464
        %2485 = vmatprep.subr.bf16.mxu0 0
        %2486 = vmatpush1.bf16.msra.mxu0 %v2465
        %2487 = vmatprep.subr.bf16.mxu0 0
        %2488 = vmatpush1.bf16.msra.mxu0 %v2466
        %2489 = vmatprep.subr.bf16.mxu0 0
        %2490 = vmatpush1.bf16.msra.mxu0 %v2467
        %2491 = vmatprep.subr.bf16.mxu0 0
        %2492 = vmatpush1.bf16.msra.mxu0 %v2468
        %2493 = vmatprep.subr.bf16.mxu0 0
        %2494 = vmatpush1.bf16.msra.mxu0 0
        %2495 = vmatprep.subr.bf16.mxu0 0
        %2496 = vmatpush1.bf16.msra.mxu0 0
        %2497 = vmatprep.subr.bf16.mxu0 0
        %2498 = vmatpush1.bf16.msra.mxu0 0
        %2499 = vmatprep.subr.bf16.mxu0 0
        %2500 = vmatpush1.bf16.msra.mxu0 0
        %2501 = vmatprep.subr.bf16.mxu0 0
        %2502 = vmatpush1.bf16.msra.mxu0 0
        %2503 = vmatprep.subr.bf16.mxu0 0
        %2504 = vmatpush1.bf16.msra.mxu0 0
        %2505 = vmatprep.subr.bf16.mxu0 0
        %2506 = vmatpush1.bf16.msra.mxu0 0
        %2507 = vmatprep.subr.bf16.mxu0 0
        %2508 = vmatpush1.bf16.msra.mxu0 0
        %2509 = vmatprep.mubr.bf16.mxu0 0
        %2510 = vmatmul.mubr.bf16.gmra.mrb[0].mxu0 %v2390
        %v2511 = vpop.f32.mrb[0].mxu0
        %v2512 = vadd.f32 %v2427, %v2511
        %v2513 = vpop.f32.mrb[0].mxu0
        %v2514 = vpop.f32.mrb[0].mxu0
        %v2515 = vadd.f32 %v2427, %v2514
        %v2516 = vpop.f32.mrb[0].mxu0
        %2517 = vmatprep.mubr.bf16.mxu0 0
        %2518 = vmatmul.mubr.bf16.gmra.mrb[0].mxu0 %v2391
        %v2519 = vpop.f32.mrb[0].mxu0
        %v2520 = vadd.f32 %v2427, %v2519
        %v2521 = vpop.f32.mrb[0].mxu0
        %v2522 = vpop.f32.mrb[0].mxu0
        %v2523 = vadd.f32 %v2427, %v2522
        %v2524 = vpop.f32.mrb[0].mxu0
        %2525 = vmatprep.mubr.bf16.mxu0 0
        %2526 = vmatmul.mubr.bf16.gmra.mrb[0].mxu0 %v2392
        %v2527 = vpop.f32.mrb[0].mxu0
        %v2528 = vadd.f32 %v2427, %v2527
        %v2529 = vpop.f32.mrb[0].mxu0
        %v2530 = vpop.f32.mrb[0].mxu0
        %v2531 = vadd.f32 %v2427, %v2530
        %v2532 = vpop.f32.mrb[0].mxu0
        %2533 = vmatprep.mubr.bf16.mxu0 0
        %2534 = vmatmul.mubr.bf16.gmra.mrb[0].mxu0 %v2393
        %v2535 = vpop.f32.mrb[0].mxu0
        %v2536 = vadd.f32 %v2427, %v2535
        %v2537 = vpop.f32.mrb[0].mxu0
        %v2538 = vpop.f32.mrb[0].mxu0
        %v2539 = vadd.f32 %v2427, %v2538
        %v2540 = vpop.f32.mrb[0].mxu0
        %2541 = vmatprep.mubr.bf16.mxu0 0
        %2542 = vmatmul.mubr.bf16.gmra.mrb[0].mxu0 %v2394
        %v2543 = vpop.f32.mrb[0].mxu0
        %v2544 = vadd.f32 %v2427, %v2543
        %v2545 = vpop.f32.mrb[0].mxu0
        %v2546 = vpop.f32.mrb[0].mxu0
        %v2547 = vadd.f32 %v2427, %v2546
        %v2548 = vpop.f32.mrb[0].mxu0
        %2549 = vmatprep.mubr.bf16.mxu0 0
        %2550 = vmatmul.mubr.bf16.gmra.mrb[0].mxu0 %v2395
        %v2551 = vpop.f32.mrb[0].mxu0
        %v2552 = vadd.f32 %v2427, %v2551
        %v2553 = vpop.f32.mrb[0].mxu0
        %v2554 = vpop.f32.mrb[0].mxu0
        %v2555 = vadd.f32 %v2427, %v2554
        %v2556 = vpop.f32.mrb[0].mxu0
        %2557 = vmatprep.mubr.bf16.mxu0 0
        %2558 = vmatmul.mubr.bf16.gmra.mrb[0].mxu0 %v2396
        %v2559 = vpop.f32.mrb[0].mxu0
        %v2560 = vadd.f32 %v2427, %v2559
        %v2561 = vpop.f32.mrb[0].mxu0
        %v2562 = vpop.f32.mrb[0].mxu0
        %v2563 = vadd.f32 %v2427, %v2562
        %v2564 = vpop.f32.mrb[0].mxu0
        %2565 = vmatprep.mubr.bf16.mxu0 0
        %2566 = vmatmul.mubr.bf16.gmra.mrb[0].mxu0 %v2397
        %v2567 = vpop.f32.mrb[0].mxu0
        %v2568 = vadd.f32 %v2427, %v2567
        %v2569 = vpop.f32.mrb[0].mxu0
        %v2570 = vpop.f32.mrb[0].mxu0
        %v2571 = vadd.f32 %v2427, %v2570
        %v2572 = vpop.f32.mrb[0].mxu0
        %2573 = vmatprep.mubr.bf16.mxu0 0
        %2574 = vmatmul.mubr.bf16.gmra.mrb[0].mxu0 %v2398
        %v2575 = vpop.f32.mrb[0].mxu0
        %v2576 = vadd.f32 %v2427, %v2575
        %v2577 = vpop.f32.mrb[0].mxu0
        %v2578 = vpop.f32.mrb[0].mxu0
        %v2579 = vadd.f32 %v2427, %v2578
        %v2580 = vpop.f32.mrb[0].mxu0
        %2581 = vmatprep.mubr.bf16.mxu0 0
        %2582 = vmatmul.mubr.bf16.gmra.mrb[0].mxu0 %v2399
        %v2583 = vpop.f32.mrb[0].mxu0
        %v2584 = vadd.f32 %v2427, %v2583
        %v2585 = vpop.f32.mrb[0].mxu0
        %v2586 = vpop.f32.mrb[0].mxu0
        %v2587 = vadd.f32 %v2427, %v2586
        %v2588 = vpop.f32.mrb[0].mxu0
        %2589 = vmatprep.mubr.bf16.mxu0 0
        %2590 = vmatmul.mubr.bf16.gmra.mrb[0].mxu0 %v2400
        %v2591 = vpop.f32.mrb[0].mxu0
        %v2592 = vadd.f32 %v2427, %v2591
        %v2593 = vpop.f32.mrb[0].mxu0
        %v2594 = vpop.f32.mrb[0].mxu0
        %v2595 = vadd.f32 %v2427, %v2594
        %v2596 = vpop.f32.mrb[0].mxu0
        %2597 = vmatprep.mubr.bf16.mxu0 0
        %2598 = vmatmul.mubr.bf16.gmra.mrb[0].mxu0 %v2401
        %v2599 = vpop.f32.mrb[0].mxu0
        %v2600 = vadd.f32 %v2427, %v2599
        %v2601 = vpop.f32.mrb[0].mxu0
        %v2602 = vpop.f32.mrb[0].mxu0
        %v2603 = vadd.f32 %v2427, %v2602
        %v2604 = vpop.f32.mrb[0].mxu0
        %2605 = vmatprep.mubr.bf16.mxu0 0
        %2606 = vmatmul.mubr.bf16.gmra.mrb[0].mxu0 %v2402
        %v2607 = vpop.f32.mrb[0].mxu0
        %v2608 = vadd.f32 %v2427, %v2607
        %v2609 = vpop.f32.mrb[0].mxu0
        %v2610 = vpop.f32.mrb[0].mxu0
        %v2611 = vadd.f32 %v2427, %v2610
        %v2612 = vpop.f32.mrb[0].mxu0
        %2613 = vmatprep.mubr.bf16.mxu0 0
        %2614 = vmatmul.mubr.bf16.gmra.mrb[0].mxu0 %v2403
        %v2615 = vpop.f32.mrb[0].mxu0
        %v2616 = vadd.f32 %v2427, %v2615
        %v2617 = vpop.f32.mrb[0].mxu0
        %v2618 = vpop.f32.mrb[0].mxu0
        %v2619 = vadd.f32 %v2427, %v2618
        %v2620 = vpop.f32.mrb[0].mxu0
        %2621 = vmatprep.mubr.bf16.mxu0 0
        %2622 = vmatmul.mubr.bf16.gmra.mrb[0].mxu0 %v2404
        %v2623 = vpop.f32.mrb[0].mxu0
        %v2624 = vadd.f32 %v2427, %v2623
        %v2625 = vpop.f32.mrb[0].mxu0
        %v2626 = vpop.f32.mrb[0].mxu0
        %v2627 = vadd.f32 %v2427, %v2626
        %v2628 = vpop.f32.mrb[0].mxu0
        %2629 = vmatprep.mubr.bf16.mxu0 0
        %2630 = vmatmul.mubr.bf16.gmra.mrb[0].mxu0 %v2405
        %v2631 = vpop.f32.mrb[0].mxu0
        %v2632 = vadd.f32 %v2427, %v2631
        %v2633 = vpop.f32.mrb[0].mxu0
        %v2634 = vpop.f32.mrb[0].mxu0
        %v2635 = vadd.f32 %v2427, %v2634
        %v2636 = vpop.f32.mrb[0].mxu0
        %2637 = vdwg.mxu0
        %v2638 = vpack.c.bf16 %v2515, %v2512
        %v2639 = vpack.c.bf16 %v2523, %v2520
        %v2640 = vpack.c.bf16 %v2531, %v2528
        %v2641 = vpack.c.bf16 %v2539, %v2536
        %v2642 = vpack.c.bf16 %v2547, %v2544
        %v2643 = vpack.c.bf16 %v2555, %v2552
        %v2644 = vpack.c.bf16 %v2563, %v2560
        %v2645 = vpack.c.bf16 %v2571, %v2568
        %v2646 = vpack.c.bf16 %v2579, %v2576
        %v2647 = vpack.c.bf16 %v2587, %v2584
        %v2648 = vpack.c.bf16 %v2595, %v2592
        %v2649 = vpack.c.bf16 %v2603, %v2600
        %v2650 = vpack.c.bf16 %v2611, %v2608
        %v2651 = vpack.c.bf16 %v2619, %v2616
        %v2652 = vpack.c.bf16 %v2627, %v2624
        %v2653 = vpack.c.bf16 %v2635, %v2632
        %v2670 = vunpack.c.l.b16 %v2638
        %v2671 = vunpack.c.h.b16 %v2638
        %v2672 = vunpack.c.l.b16 %v2639
        %v2673 = vunpack.c.h.b16 %v2639
        %v2674 = vunpack.c.l.b16 %v2640
        %v2675 = vunpack.c.h.b16 %v2640
        %v2676 = vunpack.c.l.b16 %v2641
        %v2677 = vunpack.c.h.b16 %v2641
        %v2678 = vunpack.c.l.b16 %v2642
        %v2679 = vunpack.c.h.b16 %v2642
        %v2680 = vunpack.c.l.b16 %v2643
        %v2681 = vunpack.c.h.b16 %v2643
        %v2682 = vunpack.c.l.b16 %v2644
        %v2683 = vunpack.c.h.b16 %v2644
        %v2684 = vunpack.c.l.b16 %v2645
        %v2685 = vunpack.c.h.b16 %v2645
        %v2686 = vunpack.c.l.b16 %v2646
        %v2687 = vunpack.c.h.b16 %v2646
        %v2688 = vunpack.c.l.b16 %v2647
        %v2689 = vunpack.c.h.b16 %v2647
        %v2690 = vunpack.c.l.b16 %v2648
        %v2691 = vunpack.c.h.b16 %v2648
        %v2692 = vunpack.c.l.b16 %v2649
        %v2693 = vunpack.c.h.b16 %v2649
        %v2694 = vunpack.c.l.b16 %v2650
        %v2695 = vunpack.c.h.b16 %v2650
        %v2696 = vunpack.c.l.b16 %v2651
        %v2697 = vunpack.c.h.b16 %v2651
        %v2698 = vunpack.c.l.b16 %v2652
        %v2699 = vunpack.c.h.b16 %v2652
        %v2700 = vunpack.c.l.b16 %v2653
        %v2701 = vunpack.c.h.b16 %v2653
        %v2702 = vpack.c.b16 %v2670, %v2670
        %v2703 = vpack.c.b16 %v2671, %v2671
        %v2704 = vpack.c.b16 %v2672, %v2672
        %v2705 = vpack.c.b16 %v2673, %v2673
        %v2706 = vpack.c.b16 %v2674, %v2674
        %v2707 = vpack.c.b16 %v2675, %v2675
        %v2708 = vpack.c.b16 %v2676, %v2676
        %v2709 = vpack.c.b16 %v2677, %v2677
        %v2710 = vpack.c.b16 %v2678, %v2678
        %v2711 = vpack.c.b16 %v2679, %v2679
        %v2712 = vpack.c.b16 %v2680, %v2680
        %v2713 = vpack.c.b16 %v2681, %v2681
        %v2714 = vpack.c.b16 %v2682, %v2682
        %v2715 = vpack.c.b16 %v2683, %v2683
        %v2716 = vpack.c.b16 %v2684, %v2684
        %v2717 = vpack.c.b16 %v2685, %v2685
        %v2718 = vpack.c.b16 %v2686, %v2686
        %v2719 = vpack.c.b16 %v2687, %v2687
        %v2720 = vpack.c.b16 %v2688, %v2688
        %v2721 = vpack.c.b16 %v2689, %v2689
        %v2722 = vpack.c.b16 %v2690, %v2690
        %v2723 = vpack.c.b16 %v2691, %v2691
        %v2724 = vpack.c.b16 %v2692, %v2692
        %v2725 = vpack.c.b16 %v2693, %v2693
        %v2726 = vpack.c.b16 %v2694, %v2694
        %v2727 = vpack.c.b16 %v2695, %v2695
        %v2728 = vpack.c.b16 %v2696, %v2696
        %v2729 = vpack.c.b16 %v2697, %v2697
        %v2730 = vpack.c.b16 %v2698, %v2698
        %v2731 = vpack.c.b16 %v2699, %v2699
        %v2732 = vpack.c.b16 %v2700, %v2700
        %v2733 = vpack.c.b16 %v2701, %v2701
        %2766 = vst [vmem:[%s580] sm:$0xf] %v2702
        %2767 = vst [vmem:[%s580 + $0x4] sm:$0xf] %v2703
        %2768 = vst [vmem:[%s580 + $0x8] sm:$0xf] %v2704
        %2769 = vst [vmem:[%s580 + $0xc] sm:$0xf] %v2705
        %2770 = vst [vmem:[%s580 + $0x10] sm:$0xf] %v2706
        %2771 = vst [vmem:[%s580 + $0x14] sm:$0xf] %v2707
        %2772 = vst [vmem:[%s580 + $0x18] sm:$0xf] %v2708
        %2773 = vst [vmem:[%s580 + $0x1c] sm:$0xf] %v2709
        %2774 = vst [vmem:[%s580 + $0x20] sm:$0xf] %v2710
        %2775 = vst [vmem:[%s580 + $0x24] sm:$0xf] %v2711
        %2776 = vst [vmem:[%s580 + $0x28] sm:$0xf] %v2712
        %2777 = vst [vmem:[%s580 + $0x2c] sm:$0xf] %v2713
        %2778 = vst [vmem:[%s580 + $0x30] sm:$0xf] %v2714
        %2779 = vst [vmem:[%s580 + $0x34] sm:$0xf] %v2715
        %2780 = vst [vmem:[%s580 + $0x38] sm:$0xf] %v2716
        %2781 = vst [vmem:[%s580 + $0x3c] sm:$0xf] %v2717
        %2782 = vst [vmem:[%s580 + $0x40] sm:$0xf] %v2718
        %2783 = vst [vmem:[%s580 + $0x44] sm:$0xf] %v2719
        %2784 = vst [vmem:[%s580 + $0x48] sm:$0xf] %v2720
        %2785 = vst [vmem:[%s580 + $0x4c] sm:$0xf] %v2721
        %2786 = vst [vmem:[%s580 + $0x50] sm:$0xf] %v2722
        %2787 = vst [vmem:[%s580 + $0x54] sm:$0xf] %v2723
        %2788 = vst [vmem:[%s580 + $0x58] sm:$0xf] %v2724
        %2789 = vst [vmem:[%s580 + $0x5c] sm:$0xf] %v2725
        %2790 = vst [vmem:[%s580 + $0x60] sm:$0xf] %v2726
        %2791 = vst [vmem:[%s580 + $0x64] sm:$0xf] %v2727
        %2792 = vst [vmem:[%s580 + $0x68] sm:$0xf] %v2728
        %2793 = vst [vmem:[%s580 + $0x6c] sm:$0xf] %v2729
        %2794 = vst [vmem:[%s580 + $0x70] sm:$0xf] %v2730
        %2795 = vst [vmem:[%s580 + $0x74] sm:$0xf] %v2731
        %2796 = vst [vmem:[%s580 + $0x78] sm:$0xf] %v2732
        %2797 = vst [vmem:[%s580 + $0x7c] sm:$0xf] %v2733
        %s2798 = smul.u32 32, %s35
        %p2799 = scmp.lt.s32.totalorder %s2798, 63
        %s2800 = scalar_select %p2799, %s2798, 63
        %s2801 = smul.addr %s2800, 4
        %s2802 = scalar_lea.vmem %s13, %s2801
        %s2803 = sand.u32 %s347, 1
        %s2804 = scalar_lea.sflag [#allocation4], %s2803
        %s2805 = sand.u32 %s347, 1
        %s2806 = smul.addr %s2805, 128
        %s2807 = scalar_lea.vmem [#allocation14], %s2806
        // Predicated region
        $region101: #{_forward_impl.1} parent=71 // pred_check
          %p2808 = pneg %p331
        $region102: #{_forward_impl.1} parent=71 // pred_check_branch
          %2810 = sbr.rel (%p2808) target = $region104
        $region103: #{_forward_impl.1} parent=71 // pred_region
          %s2811 = smul.u32 32, %s35
        $region104: #{_forward_impl.1} parent=71 // pred_fallthru
          _
        // Predicated region
        $region105: #{_forward_impl.1} parent=71 // pred_check
          %p2812 = pneg %p357
        $region106: #{_forward_impl.1} parent=71 // pred_check_branch
          %2814 = sbr.rel (%p2812) target = $region108
        $region107: #{_forward_impl.1} parent=71 // pred_region
          %s2815 = smul.u32 32, %s35
          %s2817 = ssub.s32 2048, 2048
          %2818 = vsyncadd %s2804, %s2817
          %s2819 = smul.addr %s2815, 64
          %s2820 = scalar_lea.hbm %s14, %s2819
          %s2821 = sshll.u32 %s2807, 4
          %s2822 = int_to_ptr.vmem [resolvable:$true] %s2821
          %2827 = dma.vmem_to_hbm [thread:$0]  %s2822, 2048, %s2820, %s2804, 64, 64, 4
        $region108: #{_forward_impl.1} parent=71 // pred_fallthru
          _
      $region72: #{_forward_impl.1} parent=5 // pred_fallthru
        _
      %p2828 = scmp.le.s32.totalorder 2, %s30
      // Predicated region
      $region109: #{_forward_impl.1} parent=5 // pred_check
        %p2829 = pneg %p2828
      $region110: #{_forward_impl.1} parent=5 // pred_check_branch
        %2831 = sbr.rel (%p2829) target = $region112
      $region111: #{_forward_impl.1} parent=5 // pred_region
        %s2832 = ssub.s32 %s30, 2
        // Predicated region
        $region113: #{_forward_impl.1} parent=111 // pred_check
          %p2833 = pneg %p337
        $region114: #{_forward_impl.1} parent=111 // pred_check_branch
          %2835 = sbr.rel (%p2833) target = $region116
        $region115: #{_forward_impl.1} parent=111 // pred_region
          %s2836 = smul.u32 32, %s36
          %p2837 = scmp.lt.s32.totalorder %s2836, 63
          %s2838 = scalar_select %p2837, %s2836, 63
          %s2839 = smul.addr %s2838, 4
          %s2840 = scalar_lea.vmem %s13, %s2839
        $region116: #{_forward_impl.1} parent=111 // pred_fallthru
          _
        // Predicated region
        $region117: #{_forward_impl.1} parent=111 // pred_check
          %p2841 = pneg %p363
        $region118: #{_forward_impl.1} parent=111 // pred_check_branch
          %2843 = sbr.rel (%p2841) target = $region120
        $region119: #{_forward_impl.1} parent=111 // pred_region
          %s2844 = sand.u32 %s348, 1
          %s2845 = scalar_lea.sflag [#allocation4], %s2844
          %s2846 = sand.u32 %s348, 1
          %s2847 = smul.addr %s2846, 128
          %s2848 = scalar_lea.vmem [#allocation14], %s2847
          %2849 = dma.done %s2845, 2048
        $region120: #{_forward_impl.1} parent=111 // pred_fallthru
          _
      $region112: #{_forward_impl.1} parent=5 // pred_fallthru
        _
    $region6: #{_forward_impl.1} parent=1 // loop_footer
      %s34 = sadd.s32 1, %s30
    $region7: #{_forward_impl.1} parent=1 // loop_footer_branch
      %29 = sbr.rel target = $region3
    $region8: #{_forward_impl.1} parent=1 // loop_exit
      _
    %2850 = vsyncpa [#allocation3], 1
    %s2851 = scalar_lea.sflag [#allocation3], 1
    %2852 = vsyncpa %s2851, 1
    %2853 = vsyncpa [#allocation6], 1
    %2854 = vsyncpa [#allocation9], 1
    %2855 = vsyncpa [#allocation12], 1
    %2856 = vsyncpa [#allocation4], 1
    %s2857 = scalar_lea.sflag [#allocation4], 1
    %2858 = vsyncpa %s2857, 1

// kernel: _forward_impl.1
$region0: #{_forward_impl.1}
  #allocation0 [shape = 'u32[]', space=smem, size = 0x4, offset = 0x4, fixed_abs, tag = 'smem constant byte address 0x4 - core index']
  #allocation1 [shape = 'u32[144,128]{1,0:T(1,128)}', space=vmem, size = 0x12000, scoped, tag = 'internal scratch']
  %s0 = inlined_call_operand.hbm [shape: f32[512,128], index: 0, kind: input, shape index: {}]
  %s1 = inlined_call_operand.hbm [shape: bf16[128,128], index: 1, kind: input, shape index: {}]
  %s2 = inlined_call_operand.vmem [shape: f32[1,128], index: 2, kind: input, shape index: {}]
  %s3 = inlined_call_operand.hbm [shape: bf16[128,128], index: 3, kind: input, shape index: {}]
  %s4 = inlined_call_operand.vmem [shape: f32[1,128], index: 4, kind: input, shape index: {}]
  %s5 = inlined_call_operand.hbm [shape: bf16[128,128], index: 5, kind: input, shape index: {}]
  %s6 = inlined_call_operand.vmem [shape: f32[1,128], index: 6, kind: input, shape index: {}]
  %s7 = inlined_call_operand.hbm [shape: bf16[128,128], index: 7, kind: input, shape index: {}]
  %s8 = inlined_call_operand.vmem [shape: f32[1,128], index: 8, kind: input, shape index: {}]
  %s9 = inlined_call_operand.hbm [shape: bf16[128,128], index: 9, kind: input, shape index: {}]
  %s10 = inlined_call_operand.vmem [shape: f32[1,128], index: 10, kind: input, shape index: {}]
  %s11 = inlined_call_operand.hbm [shape: bf16[128,128], index: 11, kind: input, shape index: {}]
  %s12 = inlined_call_operand.vmem [shape: f32[1,128], index: 12, kind: input, shape index: {}]
  %s13 = inlined_call_operand.vmem [shape: bf16[512,128], index: 13, kind: output, shape index: {0}]
  %s14 = inlined_call_operand.hbm [shape: bf16[512,128], index: 14, kind: output, shape index: {1}]
  %15 = xla_tuple %s13, %s14
  %s16 = sld [smem:[#allocation0]]
  $region121: #{_forward_impl.1} parent=0
    _
  %s18 = ssub.s32 1, %s16
  %s19 = scalar_select 0, %s18, %s16
  $region1: #{_forward_impl.1} parent=0
    #allocation2 [shape = 'u8[262144]{0}', space=vmem, size = 0x40000, scoped, tag = 'input window, operand 0']
    #allocation3 [shape = 's32[2]{0}', space=sflag, size = 0x8, scoped, tag = 'scoped memory for _forward_impl.1']
    #allocation4 [shape = 's32[2]{0}', space=sflag, size = 0x8, scoped, tag = 'scoped memory for _forward_impl.1']
    #allocation5 [shape = 'u8[32768]{0}', space=vmem, size = 0x8000, scoped, tag = 'input window, operand 1, single buffered']
    #allocation6 [shape = 's32[1]{0}', space=sflag, size = 0x4, scoped, tag = 'scoped memory for _forward_impl.1']
    #allocation7 [shape = 'u8[32768]{0}', space=vmem, size = 0x8000, scoped, tag = 'input window, operand 3, single buffered']
    #allocation8 [shape = 'u8[32768]{0}', space=vmem, size = 0x8000, scoped, tag = 'input window, operand 5, single buffered']
    #allocation9 [shape = 's32[1]{0}', space=sflag, size = 0x4, scoped, tag = 'scoped memory for _forward_impl.1']
    #allocation10 [shape = 'u8[32768]{0}', space=vmem, size = 0x8000, scoped, tag = 'input window, operand 7, single buffered']
    #allocation11 [shape = 'u8[32768]{0}', space=vmem, size = 0x8000, scoped, tag = 'input window, operand 9, single buffered']
    #allocation12 [shape = 's32[1]{0}', space=sflag, size = 0x4, scoped, tag = 'scoped memory for _forward_impl.1']
    #allocation13 [shape = 'u8[32768]{0}', space=vmem, size = 0x8000, scoped, tag = 'input window, operand 11, single buffered']
    #allocation14 [shape = 'u8[131072]{0}', space=vmem, size = 0x20000, scoped, tag = 'output window, operand 1']
    %20 = vsyncpa [#allocation3], 0
    %s21 = scalar_lea.sflag [#allocation3], 1
    %22 = vsyncpa %s21, 0
    %23 = vsyncpa [#allocation6], 0
    %24 = vsyncpa [#allocation9], 0
    %25 = vsyncpa [#allocation12], 0
    %26 = vsyncpa [#allocation4], 0
    %s27 = scalar_lea.sflag [#allocation4], 1
    %28 = vsyncpa %s27, 0
    loop: start=0, step=1, limit=4
    $region2: #{_forward_impl.1} parent=1 // loop_pre_header
      _
    $region3: #{_forward_impl.1} parent=1 // loop_header
      %s30 = sphi 0, %s34
      %p31 = scmp.ge.s32.totalorder %s30, 4
      %s40 = sphi 0, %s42
      %s43 = sphi 0, %s40
      %s44 = sphi 0, %s43
      %s60 = sphi 0, %s44
      %s64 = sphi 0, %s64
      %s66 = sphi 0, %s64
      %s67 = sphi 0, %s66
      %s81 = sphi 0, %s67
      %s85 = sphi 0, %s85
      %s87 = sphi 0, %s85
      %s88 = sphi 0, %s87
      %s102 = sphi 0, %s88
      %s106 = sphi 0, %s106
      %s108 = sphi 0, %s106
      %s109 = sphi 0, %s108
      %s123 = sphi 0, %s109
      %s127 = sphi 0, %s127
      %s129 = sphi 0, %s127
      %s130 = sphi 0, %s129
      %s144 = sphi 0, %s130
      %s148 = sphi 0, %s148
      %s150 = sphi 0, %s148
      %s151 = sphi 0, %s150
      %s165 = sphi 0, %s151
      %s169 = sphi 0, %s169
      %s171 = sphi 0, %s169
      %s172 = sphi 0, %s171
      %s186 = sphi 0, %s172
      %s190 = sphi 0, %s190
      %s192 = sphi 0, %s190
      %s193 = sphi 0, %s192
      %s207 = sphi 0, %s193
      %s211 = sphi 0, %s211
      %s213 = sphi 0, %s211
      %s214 = sphi 0, %s213
      %s228 = sphi 0, %s214
      %s232 = sphi 0, %s232
      %s234 = sphi 0, %s232
      %s235 = sphi 0, %s234
      %s249 = sphi 0, %s235
      %s253 = sphi 0, %s253
      %s255 = sphi 0, %s253
      %s256 = sphi 0, %s255
      %s270 = sphi 0, %s256
      %s274 = sphi 0, %s274
      %s276 = sphi 0, %s274
      %s277 = sphi 0, %s276
      %s291 = sphi 0, %s277
      %s295 = sphi 0, %s295
      %s297 = sphi 0, %s295
      %s298 = sphi 0, %s297
      %s312 = sphi 0, %s298
      %s318 = sphi 0, %s320
      %s321 = sphi 0, %s318
      %s322 = sphi 0, %s321
      %s338 = sphi 0, %s322
      %s344 = sphi 0, %s346
      %s347 = sphi 0, %s344
      %s348 = sphi 0, %s347
      %s364 = sphi 0, %s348
    $region4: #{_forward_impl.1} parent=1 // loop_header_branch
      %33 = sbr.rel (%p31) target = $region8
    $region5: #{_forward_impl.1} parent=1 // loop_body
      %s35 = ssub.s32 %s30, 1
      %s36 = ssub.s32 %s30, 2
      %s37 = sadd.s32 %s30, 1
      %s38 = ssub.s32 %s30, %s37
      %p39 = scmp.eq.s32.totalorder %s38, 0
      %s41 = sadd.s32 %s40, 1
      %s42 = scalar_select %p39, %s40, %s41
      %p45 = pneg %p39
      %p46 = scmp.eq.s32.totalorder %s30, 1
      %p47 = por %p45, %p46
      %p48 = scmp.ne.s32.totalorder %s40, %s43
      %p49 = scmp.eq.s32.totalorder %s30, 0
      %p50 = por %p48, %p49
      %p51 = scmp.ne.s32.totalorder %s40, %s43
      %p52 = scmp.eq.s32.totalorder %s35, 1
      %p53 = por %p51, %p52
      %p54 = scmp.ne.s32.totalorder %s43, %s44
      %p55 = scmp.eq.s32.totalorder %s35, 0
      %p56 = por %p54, %p55
      %p57 = scmp.ne.s32.totalorder %s43, %s44
      %p58 = scmp.eq.s32.totalorder %s36, 1
      %p59 = por %p57, %p58
      %p61 = scmp.ne.s32.totalorder %s44, %s60
      %p62 = scmp.eq.s32.totalorder %s36, 0
      %p63 = por %p61, %p62
      %s65 = sadd.s32 %s64, 1
      %p68 = scmp.eq.s32.totalorder %s30, 1
      %p69 = scmp.ne.s32.totalorder %s64, %s66
      %p70 = scmp.eq.s32.totalorder %s30, 0
      %p71 = por %p69, %p70
      %p72 = scmp.ne.s32.totalorder %s64, %s66
      %p73 = scmp.eq.s32.totalorder %s35, 1
      %p74 = por %p72, %p73
      %p75 = scmp.ne.s32.totalorder %s66, %s67
      %p76 = scmp.eq.s32.totalorder %s35, 0
      %p77 = por %p75, %p76
      %p78 = scmp.ne.s32.totalorder %s66, %s67
      %p79 = scmp.eq.s32.totalorder %s36, 1
      %p80 = por %p78, %p79
      %p82 = scmp.ne.s32.totalorder %s67, %s81
      %p83 = scmp.eq.s32.totalorder %s36, 0
      %p84 = por %p82, %p83
      %s86 = sadd.s32 %s85, 1
      %p89 = scmp.eq.s32.totalorder %s30, 1
      %p90 = scmp.ne.s32.totalorder %s85, %s87
      %p91 = scmp.eq.s32.totalorder %s30, 0
      %p92 = por %p90, %p91
      %p93 = scmp.ne.s32.totalorder %s85, %s87
      %p94 = scmp.eq.s32.totalorder %s35, 1
      %p95 = por %p93, %p94
      %p96 = scmp.ne.s32.totalorder %s87, %s88
      %p97 = scmp.eq.s32.totalorder %s35, 0
      %p98 = por %p96, %p97
      %p99 = scmp.ne.s32.totalorder %s87, %s88
      %p100 = scmp.eq.s32.totalorder %s36, 1
      %p101 = por %p99, %p100
      %p103 = scmp.ne.s32.totalorder %s88, %s102
      %p104 = scmp.eq.s32.totalorder %s36, 0
      %p105 = por %p103, %p104
      %s107 = sadd.s32 %s106, 1
      %p110 = scmp.eq.s32.totalorder %s30, 1
      %p111 = scmp.ne.s32.totalorder %s106, %s108
      %p112 = scmp.eq.s32.totalorder %s30, 0
      %p113 = por %p111, %p112
      %p114 = scmp.ne.s32.totalorder %s106, %s108
      %p115 = scmp.eq.s32.totalorder %s35, 1
      %p116 = por %p114, %p115
      %p117 = scmp.ne.s32.totalorder %s108, %s109
      %p118 = scmp.eq.s32.totalorder %s35, 0
      %p119 = por %p117, %p118
      %p120 = scmp.ne.s32.totalorder %s108, %s109
      %p121 = scmp.eq.s32.totalorder %s36, 1
      %p122 = por %p120, %p121
      %p124 = scmp.ne.s32.totalorder %s109, %s123
      %p125 = scmp.eq.s32.totalorder %s36, 0
      %p126 = por %p124, %p125
      %s128 = sadd.s32 %s127, 1
      %p131 = scmp.eq.s32.totalorder %s30, 1
      %p132 = scmp.ne.s32.totalorder %s127, %s129
      %p133 = scmp.eq.s32.totalorder %s30, 0
      %p134 = por %p132, %p133
      %p135 = scmp.ne.s32.totalorder %s127, %s129
      %p136 = scmp.eq.s32.totalorder %s35, 1
      %p137 = por %p135, %p136
      %p138 = scmp.ne.s32.totalorder %s129, %s130
      %p139 = scmp.eq.s32.totalorder %s35, 0
      %p140 = por %p138, %p139
      %p141 = scmp.ne.s32.totalorder %s129, %s130
      %p142 = scmp.eq.s32.totalorder %s36, 1
      %p143 = por %p141, %p142
      %p145 = scmp.ne.s32.totalorder %s130, %s144
      %p146 = scmp.eq.s32.totalorder %s36, 0
      %p147 = por %p145, %p146
      %s149 = sadd.s32 %s148, 1
      %p152 = scmp.eq.s32.totalorder %s30, 1
      %p153 = scmp.ne.s32.totalorder %s148, %s150
      %p154 = scmp.eq.s32.totalorder %s30, 0
      %p155 = por %p153, %p154
      %p156 = scmp.ne.s32.totalorder %s148, %s150
      %p157 = scmp.eq.s32.totalorder %s35, 1
      %p158 = por %p156, %p157
      %p159 = scmp.ne.s32.totalorder %s150, %s151
      %p160 = scmp.eq.s32.totalorder %s35, 0
      %p161 = por %p159, %p160
      %p162 = scmp.ne.s32.totalorder %s150, %s151
      %p163 = scmp.eq.s32.totalorder %s36, 1
      %p164 = por %p162, %p163
      %p166 = scmp.ne.s32.totalorder %s151, %s165
      %p167 = scmp.eq.s32.totalorder %s36, 0
      %p168 = por %p166, %p167
      %s170 = sadd.s32 %s169, 1
      %p173 = scmp.eq.s32.totalorder %s30, 1
      %p174 = scmp.ne.s32.totalorder %s169, %s171
      %p175 = scmp.eq.s32.totalorder %s30, 0
      %p176 = por %p174, %p175
      %p177 = scmp.ne.s32.totalorder %s169, %s171
      %p178 = scmp.eq.s32.totalorder %s35, 1
      %p179 = por %p177, %p178
      %p180 = scmp.ne.s32.totalorder %s171, %s172
      %p181 = scmp.eq.s32.totalorder %s35, 0
      %p182 = por %p180, %p181
      %p183 = scmp.ne.s32.totalorder %s171, %s172
      %p184 = scmp.eq.s32.totalorder %s36, 1
      %p185 = por %p183, %p184
      %p187 = scmp.ne.s32.totalorder %s172, %s186
      %p188 = scmp.eq.s32.totalorder %s36, 0
      %p189 = por %p187, %p188
      %s191 = sadd.s32 %s190, 1
      %p194 = scmp.eq.s32.totalorder %s30, 1
      %p195 = scmp.ne.s32.totalorder %s190, %s192
      %p196 = scmp.eq.s32.totalorder %s30, 0
      %p197 = por %p195, %p196
      %p198 = scmp.ne.s32.totalorder %s190, %s192
      %p199 = scmp.eq.s32.totalorder %s35, 1
      %p200 = por %p198, %p199
      %p201 = scmp.ne.s32.totalorder %s192, %s193
      %p202 = scmp.eq.s32.totalorder %s35, 0
      %p203 = por %p201, %p202
      %p204 = scmp.ne.s32.totalorder %s192, %s193
      %p205 = scmp.eq.s32.totalorder %s36, 1
      %p206 = por %p204, %p205
      %p208 = scmp.ne.s32.totalorder %s193, %s207
      %p209 = scmp.eq.s32.totalorder %s36, 0
      %p210 = por %p208, %p209
      %s212 = sadd.s32 %s211, 1
      %p215 = scmp.eq.s32.totalorder %s30, 1
      %p216 = scmp.ne.s32.totalorder %s211, %s213
      %p217 = scmp.eq.s32.totalorder %s30, 0
      %p218 = por %p216, %p217
      %p219 = scmp.ne.s32.totalorder %s211, %s213
      %p220 = scmp.eq.s32.totalorder %s35, 1
      %p221 = por %p219, %p220
      %p222 = scmp.ne.s32.totalorder %s213, %s214
      %p223 = scmp.eq.s32.totalorder %s35, 0
      %p224 = por %p222, %p223
      %p225 = scmp.ne.s32.totalorder %s213, %s214
      %p226 = scmp.eq.s32.totalorder %s36, 1
      %p227 = por %p225, %p226
      %p229 = scmp.ne.s32.totalorder %s214, %s228
      %p230 = scmp.eq.s32.totalorder %s36, 0
      %p231 = por %p229, %p230
      %s233 = sadd.s32 %s232, 1
      %p236 = scmp.eq.s32.totalorder %s30, 1
      %p237 = scmp.ne.s32.totalorder %s232, %s234
      %p238 = scmp.eq.s32.totalorder %s30, 0
      %p239 = por %p237, %p238
      %p240 = scmp.ne.s32.totalorder %s232, %s234
      %p241 = scmp.eq.s32.totalorder %s35, 1
      %p242 = por %p240, %p241
      %p243 = scmp.ne.s32.totalorder %s234, %s235
      %p244 = scmp.eq.s32.totalorder %s35, 0
      %p245 = por %p243, %p244
      %p246 = scmp.ne.s32.totalorder %s234, %s235
      %p247 = scmp.eq.s32.totalorder %s36, 1
      %p248 = por %p246, %p247
      %p250 = scmp.ne.s32.totalorder %s235, %s249
      %p251 = scmp.eq.s32.totalorder %s36, 0
      %p252 = por %p250, %p251
      %s254 = sadd.s32 %s253, 1
      %p257 = scmp.eq.s32.totalorder %s30, 1
      %p258 = scmp.ne.s32.totalorder %s253, %s255
      %p259 = scmp.eq.s32.totalorder %s30, 0
      %p260 = por %p258, %p259
      %p261 = scmp.ne.s32.totalorder %s253, %s255
      %p262 = scmp.eq.s32.totalorder %s35, 1
      %p263 = por %p261, %p262
      %p264 = scmp.ne.s32.totalorder %s255, %s256
      %p265 = scmp.eq.s32.totalorder %s35, 0
      %p266 = por %p264, %p265
      %p267 = scmp.ne.s32.totalorder %s255, %s256
      %p268 = scmp.eq.s32.totalorder %s36, 1
      %p269 = por %p267, %p268
      %p271 = scmp.ne.s32.totalorder %s256, %s270
      %p272 = scmp.eq.s32.totalorder %s36, 0
      %p273 = por %p271, %p272
      %s275 = sadd.s32 %s274, 1
      %p278 = scmp.eq.s32.totalorder %s30, 1
      %p279 = scmp.ne.s32.totalorder %s274, %s276
      %p280 = scmp.eq.s32.totalorder %s30, 0
      %p281 = por %p279, %p280
      %p282 = scmp.ne.s32.totalorder %s274, %s276
      %p283 = scmp.eq.s32.totalorder %s35, 1
      %p284 = por %p282, %p283
      %p285 = scmp.ne.s32.totalorder %s276, %s277
      %p286 = scmp.eq.s32.totalorder %s35, 0
      %p287 = por %p285, %p286
      %p288 = scmp.ne.s32.totalorder %s276, %s277
      %p289 = scmp.eq.s32.totalorder %s36, 1
      %p290 = por %p288, %p289
      %p292 = scmp.ne.s32.totalorder %s277, %s291
      %p293 = scmp.eq.s32.totalorder %s36, 0
      %p294 = por %p292, %p293
      %s296 = sadd.s32 %s295, 1
      %p299 = scmp.eq.s32.totalorder %s30, 1
      %p300 = scmp.ne.s32.totalorder %s295, %s297
      %p301 = scmp.eq.s32.totalorder %s30, 0
      %p302 = por %p300, %p301
      %p303 = scmp.ne.s32.totalorder %s295, %s297
      %p304 = scmp.eq.s32.totalorder %s35, 1
      %p305 = por %p303, %p304
      %p306 = scmp.ne.s32.totalorder %s297, %s298
      %p307 = scmp.eq.s32.totalorder %s35, 0
      %p308 = por %p306, %p307
      %p309 = scmp.ne.s32.totalorder %s297, %s298
      %p310 = scmp.eq.s32.totalorder %s36, 1
      %p311 = por %p309, %p310
      %p313 = scmp.ne.s32.totalorder %s298, %s312
      %p314 = scmp.eq.s32.totalorder %s36, 0
      %p315 = por %p313, %p314
      %s316 = ssub.s32 %s30, %s37
      %p317 = scmp.eq.s32.totalorder %s316, 0
      %s319 = sadd.s32 %s318, 1
      %s320 = scalar_select %p317, %s318, %s319
      %p323 = pneg %p317
      %p324 = scmp.eq.s32.totalorder %s30, 1
      %p325 = por %p323, %p324
      %p326 = scmp.ne.s32.totalorder %s318, %s321
      %p327 = scmp.eq.s32.totalorder %s30, 0
      %p328 = por %p326, %p327
      %p329 = scmp.ne.s32.totalorder %s318, %s321
      %p330 = scmp.eq.s32.totalorder %s35, 1
      %p331 = por %p329, %p330
      %p332 = scmp.ne.s32.totalorder %s321, %s322
      %p333 = scmp.eq.s32.totalorder %s35, 0
      %p334 = por %p332, %p333
      %p335 = scmp.ne.s32.totalorder %s321, %s322
      %p336 = scmp.eq.s32.totalorder %s36, 1
      %p337 = por %p335, %p336
      %p339 = scmp.ne.s32.totalorder %s322, %s338
      %p340 = scmp.eq.s32.totalorder %s36, 0
      %p341 = por %p339, %p340
      %s342 = ssub.s32 %s30, %s37
      %p343 = scmp.eq.s32.totalorder %s342, 0
      %s345 = sadd.s32 %s344, 1
      %s346 = scalar_select %p343, %s344, %s345
      %p349 = pneg %p343
      %p350 = scmp.eq.s32.totalorder %s30, 1
      %p351 = por %p349, %p350
      %p352 = scmp.ne.s32.totalorder %s344, %s347
      %p353 = scmp.eq.s32.totalorder %s30, 0
      %p354 = por %p352, %p353
      %p355 = scmp.ne.s32.totalorder %s344, %s347
      %p356 = scmp.eq.s32.totalorder %s35, 1
      %p357 = por %p355, %p356
      %p358 = scmp.ne.s32.totalorder %s347, %s348
      %p359 = scmp.eq.s32.totalorder %s35, 0
      %p360 = por %p358, %p359
      %p361 = scmp.ne.s32.totalorder %s347, %s348
      %p362 = scmp.eq.s32.totalorder %s36, 1
      %p363 = por %p361, %p362
      %p365 = scmp.ne.s32.totalorder %s348, %s364
      %p366 = scmp.eq.s32.totalorder %s36, 0
      %p367 = por %p365, %p366
      %p368 = scmp.le.s32.totalorder 1, %s30
      %p369 = scmp.lt.s32.totalorder %s30, 3
      %p370 = pnand %p368, %p369
      %p371 = pneg %p370
      // Predicated region
      $region9: #{_forward_impl.1} parent=5 // pred_check
        _
      $region10: #{_forward_impl.1} parent=5 // pred_check_branch
        %373 = sbr.rel (%p370) target = $region12
      $region11: #{_forward_impl.1} parent=5 // pred_region
        %s374 = ssub.s32 %s30, 1
        // Predicated region
        $region13: #{_forward_impl.1} parent=11 // pred_check
          %p375 = pneg %p77
        $region14: #{_forward_impl.1} parent=11 // pred_check_branch
          %377 = sbr.rel (%p375) target = $region16
        $region15: #{_forward_impl.1} parent=11 // pred_region
          %s379 = ssub.s32 1024, 1024
          %380 = vsyncadd [#allocation6], %s379
          %s381 = sshll.u32 [#allocation5], 4
          %s382 = int_to_ptr.vmem [resolvable:$true] %s381
          %387 = dma.hbm_to_vmem [thread:$0]  %s1, 1024, %s382, [#allocation6], 64, 64, 4
        $region16: #{_forward_impl.1} parent=11 // pred_fallthru
          _
        // Predicated region
        $region17: #{_forward_impl.1} parent=11 // pred_check
          %p388 = pneg %p98
        $region18: #{_forward_impl.1} parent=11 // pred_check_branch
          %390 = sbr.rel (%p388) target = $region20
        $region19: #{_forward_impl.1} parent=11 // pred_region
          _
        $region20: #{_forward_impl.1} parent=11 // pred_fallthru
          _
        // Predicated region
        $region21: #{_forward_impl.1} parent=11 // pred_check
          %p391 = pneg %p119
        $region22: #{_forward_impl.1} parent=11 // pred_check_branch
          %393 = sbr.rel (%p391) target = $region24
        $region23: #{_forward_impl.1} parent=11 // pred_region
          %s395 = ssub.s32 1024, 1024
          %396 = vsyncadd [#allocation6], %s395
          %s397 = sshll.u32 [#allocation7], 4
          %s398 = int_to_ptr.vmem [resolvable:$true] %s397
          %403 = dma.hbm_to_vmem [thread:$0]  %s3, 1024, %s398, [#allocation6], 64, 64, 4
        $region24: #{_forward_impl.1} parent=11 // pred_fallthru
          _
        // Predicated region
        $region25: #{_forward_impl.1} parent=11 // pred_check
          %p404 = pneg %p140
        $region26: #{_forward_impl.1} parent=11 // pred_check_branch
          %406 = sbr.rel (%p404) target = $region28
        $region27: #{_forward_impl.1} parent=11 // pred_region
          _
        $region28: #{_forward_impl.1} parent=11 // pred_fallthru
          _
        // Predicated region
        $region29: #{_forward_impl.1} parent=11 // pred_check
          %p407 = pneg %p161
        $region30: #{_forward_impl.1} parent=11 // pred_check_branch
          %409 = sbr.rel (%p407) target = $region32
        $region31: #{_forward_impl.1} parent=11 // pred_region
          %s411 = ssub.s32 1024, 1024
          %412 = vsyncadd [#allocation9], %s411
          %s413 = sshll.u32 [#allocation8], 4
          %s414 = int_to_ptr.vmem [resolvable:$true] %s413
          %419 = dma.hbm_to_vmem [thread:$0]  %s5, 1024, %s414, [#allocation9], 64, 64, 4
        $region32: #{_forward_impl.1} parent=11 // pred_fallthru
          _
        // Predicated region
        $region33: #{_forward_impl.1} parent=11 // pred_check
          %p420 = pneg %p182
        $region34: #{_forward_impl.1} parent=11 // pred_check_branch
          %422 = sbr.rel (%p420) target = $region36
        $region35: #{_forward_impl.1} parent=11 // pred_region
          _
        $region36: #{_forward_impl.1} parent=11 // pred_fallthru
          _
        // Predicated region
        $region37: #{_forward_impl.1} parent=11 // pred_check
          %p423 = pneg %p203
        $region38: #{_forward_impl.1} parent=11 // pred_check_branch
          %425 = sbr.rel (%p423) target = $region40
        $region39: #{_forward_impl.1} parent=11 // pred_region
          %s427 = ssub.s32 1024, 1024
          %428 = vsyncadd [#allocation9], %s427
          %s429 = sshll.u32 [#allocation10], 4
          %s430 = int_to_ptr.vmem [resolvable:$true] %s429
          %435 = dma.hbm_to_vmem [thread:$0]  %s7, 1024, %s430, [#allocation9], 64, 64, 4
        $region40: #{_forward_impl.1} parent=11 // pred_fallthru
          _
        // Predicated region
        $region41: #{_forward_impl.1} parent=11 // pred_check
          %p436 = pneg %p224
        $region42: #{_forward_impl.1} parent=11 // pred_check_branch
          %438 = sbr.rel (%p436) target = $region44
        $region43: #{_forward_impl.1} parent=11 // pred_region
          _
        $region44: #{_forward_impl.1} parent=11 // pred_fallthru
          _
        // Predicated region
        $region45: #{_forward_impl.1} parent=11 // pred_check
          %p439 = pneg %p245
        $region46: #{_forward_impl.1} parent=11 // pred_check_branch
          %441 = sbr.rel (%p439) target = $region48
        $region47: #{_forward_impl.1} parent=11 // pred_region
          %s443 = ssub.s32 1024, 1024
          %444 = vsyncadd [#allocation12], %s443
          %s445 = sshll.u32 [#allocation11], 4
          %s446 = int_to_ptr.vmem [resolvable:$true] %s445
          %451 = dma.hbm_to_vmem [thread:$0]  %s9, 1024, %s446, [#allocation12], 64, 64, 4
        $region48: #{_forward_impl.1} parent=11 // pred_fallthru
          _
        // Predicated region
        $region49: #{_forward_impl.1} parent=11 // pred_check
          %p452 = pneg %p266
        $region50: #{_forward_impl.1} parent=11 // pred_check_branch
          %454 = sbr.rel (%p452) target = $region52
        $region51: #{_forward_impl.1} parent=11 // pred_region
          _
        $region52: #{_forward_impl.1} parent=11 // pred_fallthru
          _
        // Predicated region
        $region53: #{_forward_impl.1} parent=11 // pred_check
          %p455 = pneg %p287
        $region54: #{_forward_impl.1} parent=11 // pred_check_branch
          %457 = sbr.rel (%p455) target = $region56
        $region55: #{_forward_impl.1} parent=11 // pred_region
          %s459 = ssub.s32 1024, 1024
          %460 = vsyncadd [#allocation12], %s459
          %s461 = sshll.u32 [#allocation13], 4
          %s462 = int_to_ptr.vmem [resolvable:$true] %s461
          %467 = dma.hbm_to_vmem [thread:$0]  %s11, 1024, %s462, [#allocation12], 64, 64, 4
        $region56: #{_forward_impl.1} parent=11 // pred_fallthru
          _
        // Predicated region
        $region57: #{_forward_impl.1} parent=11 // pred_check
          %p468 = pneg %p308
        $region58: #{_forward_impl.1} parent=11 // pred_check_branch
          %470 = sbr.rel (%p468) target = $region60
        $region59: #{_forward_impl.1} parent=11 // pred_region
          _
        $region60: #{_forward_impl.1} parent=11 // pred_fallthru
          _
      $region12: #{_forward_impl.1} parent=5 // pred_fallthru
        _
      %p471 = scmp.lt.s32.totalorder %s30, 2
      // Predicated region
      $region61: #{_forward_impl.1} parent=5 // pred_check
        %p472 = pneg %p471
      $region62: #{_forward_impl.1} parent=5 // pred_check_branch
        %474 = sbr.rel (%p472) target = $region64
      $region63: #{_forward_impl.1} parent=5 // pred_region
        // Predicated region
        $region65: #{_forward_impl.1} parent=63 // pred_check
          %p475 = pneg %p50
        $region66: #{_forward_impl.1} parent=63 // pred_check_branch
          %477 = sbr.rel (%p475) target = $region68
        $region67: #{_forward_impl.1} parent=63 // pred_region
          %s478 = sand.u32 %s40, 1
          %s479 = scalar_lea.sflag [#allocation3], %s478
          %s480 = sand.u32 %s40, 1
          %s481 = smul.addr %s480, 256
          %s482 = scalar_lea.vmem [#allocation2], %s481
          %s483 = smul.u32 32, %s30
          %s485 = ssub.s32 4096, 4096
          %486 = vsyncadd %s479, %s485
          %s487 = smul.addr %s483, 128
          %s488 = scalar_lea.hbm %s0, %s487
          %s489 = sshll.u32 %s482, 4
          %s490 = int_to_ptr.vmem [resolvable:$true] %s489
          %495 = dma.hbm_to_vmem [thread:$0]  %s488, 4096, %s490, %s479, 128, 128, 8
        $region68: #{_forward_impl.1} parent=63 // pred_fallthru
          _
      $region64: #{_forward_impl.1} parent=5 // pred_fallthru
        _
      %p496 = scmp.le.s32.totalorder 1, %s30
      %p497 = scmp.lt.s32.totalorder %s30, 3
      %p498 = pnand %p496, %p497
      %p499 = pneg %p498
      // Predicated region
      $region69: #{_forward_impl.1} parent=5 // pred_check
        _
      $region70: #{_forward_impl.1} parent=5 // pred_check_branch
        %501 = sbr.rel (%p498) target = $region72
      $region71: #{_forward_impl.1} parent=5 // pred_region
        %s502 = ssub.s32 %s30, 1
        %s503 = sand.u32 %s43, 1
        %s504 = scalar_lea.sflag [#allocation3], %s503
        %s505 = sand.u32 %s43, 1
        %s506 = smul.addr %s505, 256
        %s507 = scalar_lea.vmem [#allocation2], %s506
        // Predicated region
        $region73: #{_forward_impl.1} parent=71 // pred_check
          %p508 = pneg %p56
        $region74: #{_forward_impl.1} parent=71 // pred_check_branch
          %510 = sbr.rel (%p508) target = $region76
        $region75: #{_forward_impl.1} parent=71 // pred_region
          %511 = dma.done %s504, 4096
        $region76: #{_forward_impl.1} parent=71 // pred_fallthru
          _
        // Predicated region
        $region77: #{_forward_impl.1} parent=71 // pred_check
          %p512 = pneg %p77
        $region78: #{_forward_impl.1} parent=71 // pred_check_branch
          %514 = sbr.rel (%p512) target = $region80
        $region79: #{_forward_impl.1} parent=71 // pred_region
          %515 = dma.done [#allocation6], 1024
        $region80: #{_forward_impl.1} parent=71 // pred_fallthru
          _
        // Predicated region
        $region81: #{_forward_impl.1} parent=71 // pred_check
          %p516 = pneg %p119
        $region82: #{_forward_impl.1} parent=71 // pred_check_branch
          %518 = sbr.rel (%p516) target = $region84
        $region83: #{_forward_impl.1} parent=71 // pred_region
          %519 = dma.done [#allocation6], 1024
        $region84: #{_forward_impl.1} parent=71 // pred_fallthru
          _
        // Predicated region
        $region85: #{_forward_impl.1} parent=71 // pred_check
          %p520 = pneg %p161
        $region86: #{_forward_impl.1} parent=71 // pred_check_branch
          %522 = sbr.rel (%p520) target = $region88
        $region87: #{_forward_impl.1} parent=71 // pred_region
          %523 = dma.done [#allocation9], 1024
        $region88: #{_forward_impl.1} parent=71 // pred_fallthru
          _
        // Predicated region
        $region89: #{_forward_impl.1} parent=71 // pred_check
          %p524 = pneg %p203
        $region90: #{_forward_impl.1} parent=71 // pred_check_branch
          %526 = sbr.rel (%p524) target = $region92
        $region91: #{_forward_impl.1} parent=71 // pred_region
          %527 = dma.done [#allocation9], 1024
        $region92: #{_forward_impl.1} parent=71 // pred_fallthru
          _
        // Predicated region
        $region93: #{_forward_impl.1} parent=71 // pred_check
          %p528 = pneg %p245
        $region94: #{_forward_impl.1} parent=71 // pred_check_branch
          %530 = sbr.rel (%p528) target = $region96
        $region95: #{_forward_impl.1} parent=71 // pred_region
          %531 = dma.done [#allocation12], 1024
        $region96: #{_forward_impl.1} parent=71 // pred_fallthru
          _
        // Predicated region
        $region97: #{_forward_impl.1} parent=71 // pred_check
          %p532 = pneg %p287
        $region98: #{_forward_impl.1} parent=71 // pred_check_branch
          %534 = sbr.rel (%p532) target = $region100
        $region99: #{_forward_impl.1} parent=71 // pred_region
          %535 = dma.done [#allocation12], 1024
        $region100: #{_forward_impl.1} parent=71 // pred_fallthru
          _
        %s536 = sand.u32 %s43, 1
        %s537 = scalar_lea.sflag [#allocation3], %s536
        %s538 = sand.u32 %s43, 1
        %s539 = smul.addr %s538, 256
        %s540 = scalar_lea.vmem [#allocation2], %s539
        %p541 = pneg %p56
        %p542 = pneg %p53
        %p543 = pneg %p77
        %p544 = pneg %p74
        %p545 = pneg %p98
        %p546 = pneg %p95
        %p547 = pneg %p119
        %p548 = pneg %p116
        %p549 = pneg %p140
        %p550 = pneg %p137
        %p551 = pneg %p161
        %p552 = pneg %p158
        %p553 = pneg %p182
        %p554 = pneg %p179
        %p555 = pneg %p203
        %p556 = pneg %p200
        %p557 = pneg %p224
        %p558 = pneg %p221
        %p559 = pneg %p245
        %p560 = pneg %p242
        %p561 = pneg %p266
        %p562 = pneg %p263
        %p563 = pneg %p287
        %p564 = pneg %p284
        %p565 = pneg %p308
        %p566 = pneg %p305
        %p567 = pneg %p334
        %p568 = pneg %p331
        %s569 = smul.u32 32, %s35
        %p570 = scmp.lt.s32.totalorder %s569, 63
        %s571 = scalar_select %p570, %s569, 63
        %s572 = smul.addr %s571, 4
        %s573 = scalar_lea.vmem %s13, %s572
        %p574 = pneg %p360
        %p575 = pneg %p357
        %s576 = sand.u32 %s347, 1
        %s577 = scalar_lea.sflag [#allocation4], %s576
        %s578 = sand.u32 %s347, 1
        %s579 = smul.addr %s578, 128
        %s580 = scalar_lea.vmem [#allocation14], %s579
        %s581 = smul.u32 32, %s35
        %s582 = smul.u32 32, %s35
        %p583 = scmp.lt.s32.totalorder %s582, 63
        %s584 = scalar_select %p583, %s582, 63
        %s585 = smul.addr %s584, 4
        %s586 = scalar_lea.vmem %s13, %s585
        %s587 = smul.u32 32, %s35
        %s588 = smul.u32 32, %s35
        %v590 = vld [vmem:[%s507] sm:$0xff]
        %v591 = vld [vmem:[%s507 + $0x8] sm:$0xff]
        %v592 = vld [vmem:[%s507 + $0x10] sm:$0xff]
        %v593 = vld [vmem:[%s507 + $0x18] sm:$0xff]
        %v594 = vld [vmem:[%s507 + $0x20] sm:$0xff]
        %v595 = vld [vmem:[%s507 + $0x28] sm:$0xff]
        %v596 = vld [vmem:[%s507 + $0x30] sm:$0xff]
        %v597 = vld [vmem:[%s507 + $0x38] sm:$0xff]
        %v598 = vld [vmem:[%s507 + $0x40] sm:$0xff]
        %v599 = vld [vmem:[%s507 + $0x48] sm:$0xff]
        %v600 = vld [vmem:[%s507 + $0x50] sm:$0xff]
        %v601 = vld [vmem:[%s507 + $0x58] sm:$0xff]
        %v602 = vld [vmem:[%s507 + $0x60] sm:$0xff]
        %v603 = vld [vmem:[%s507 + $0x68] sm:$0xff]
        %v604 = vld [vmem:[%s507 + $0x70] sm:$0xff]
        %v605 = vld [vmem:[%s507 + $0x78] sm:$0xff]
        %v606 = vld [vmem:[%s507 + $0x80] sm:$0xff]
        %v607 = vld [vmem:[%s507 + $0x88] sm:$0xff]
        %v608 = vld [vmem:[%s507 + $0x90] sm:$0xff]
        %v609 = vld [vmem:[%s507 + $0x98] sm:$0xff]
        %v610 = vld [vmem:[%s507 + $0xa0] sm:$0xff]
        %v611 = vld [vmem:[%s507 + $0xa8] sm:$0xff]
        %v612 = vld [vmem:[%s507 + $0xb0] sm:$0xff]
        %v613 = vld [vmem:[%s507 + $0xb8] sm:$0xff]
        %v614 = vld [vmem:[%s507 + $0xc0] sm:$0xff]
        %v615 = vld [vmem:[%s507 + $0xc8] sm:$0xff]
        %v616 = vld [vmem:[%s507 + $0xd0] sm:$0xff]
        %v617 = vld [vmem:[%s507 + $0xd8] sm:$0xff]
        %v618 = vld [vmem:[%s507 + $0xe0] sm:$0xff]
        %v619 = vld [vmem:[%s507 + $0xe8] sm:$0xff]
        %v620 = vld [vmem:[%s507 + $0xf0] sm:$0xff]
        %v621 = vld [vmem:[%s507 + $0xf8] sm:$0xff]
        %v622 = vpack.c.bf16 %v591, %v590
        %v623 = vpack.c.bf16 %v593, %v592
        %v624 = vpack.c.bf16 %v595, %v594
        %v625 = vpack.c.bf16 %v597, %v596
        %v626 = vpack.c.bf16 %v599, %v598
        %v627 = vpack.c.bf16 %v601, %v600
        %v628 = vpack.c.bf16 %v603, %v602
        %v629 = vpack.c.bf16 %v605, %v604
        %v630 = vpack.c.bf16 %v607, %v606
        %v631 = vpack.c.bf16 %v609, %v608
        %v632 = vpack.c.bf16 %v611, %v610
        %v633 = vpack.c.bf16 %v613, %v612
        %v634 = vpack.c.bf16 %v615, %v614
        %v635 = vpack.c.bf16 %v617, %v616
        %v636 = vpack.c.bf16 %v619, %v618
        %v637 = vpack.c.bf16 %v621, %v620
        %v638 = vld [vmem:[#allocation5] sm:$0xf]
        %v639 = vld [vmem:[#allocation5 + $0x4] sm:$0xf]
        %v640 = vld [vmem:[#allocation5 + $0x8] sm:$0xf]
        %v641 = vld [vmem:[#allocation5 + $0xc] sm:$0xf]
        %v642 = vld [vmem:[#allocation5 + $0x10] sm:$0xf]
        %v643 = vld [vmem:[#allocation5 + $0x14] sm:$0xf]
        %v644 = vld [vmem:[#allocation5 + $0x18] sm:$0xf]
        %v645 = vld [vmem:[#allocation5 + $0x1c] sm:$0xf]
        %v646 = vld [vmem:[#allocation5 + $0x20] sm:$0xf]
        %v647 = vld [vmem:[#allocation5 + $0x24] sm:$0xf]
        %v648 = vld [vmem:[#allocation5 + $0x28] sm:$0xf]
        %v649 = vld [vmem:[#allocation5 + $0x2c] sm:$0xf]
        %v650 = vld [vmem:[#allocation5 + $0x30] sm:$0xf]
        %v651 = vld [vmem:[#allocation5 + $0x34] sm:$0xf]
        %v652 = vld [vmem:[#allocation5 + $0x38] sm:$0xf]
        %v653 = vld [vmem:[#allocation5 + $0x3c] sm:$0xf]
        %v654 = vld [vmem:[%s2] sm:$0x1]
        %v656 = vlaneseq
        %v657 = vshrl.u32 %v656, 7
        %v658 = vsub.s32 0, %v657
        %v659 = vrot.slane %v654, %v658
        %v677 = vunpack.c.l.b16 %v638
        %v678 = vunpack.c.l.b16 %v639
        %v679 = vunpack.c.l.b16 %v640
        %v680 = vunpack.c.l.b16 %v641
        %v681 = vunpack.c.l.b16 %v642
        %v682 = vunpack.c.l.b16 %v643
        %v683 = vunpack.c.l.b16 %v644
        %v684 = vunpack.c.l.b16 %v645
        %v685 = vunpack.c.l.b16 %v646
        %v686 = vunpack.c.l.b16 %v647
        %v687 = vunpack.c.l.b16 %v648
        %v688 = vunpack.c.l.b16 %v649
        %v689 = vunpack.c.l.b16 %v650
        %v690 = vunpack.c.l.b16 %v651
        %v691 = vunpack.c.l.b16 %v652
        %v692 = vunpack.c.l.b16 %v653
        %v693 = vpack.c.b16 %v678, %v677
        %v694 = vpack.c.b16 %v680, %v679
        %v695 = vpack.c.b16 %v682, %v681
        %v696 = vpack.c.b16 %v684, %v683
        %v697 = vpack.c.b16 %v686, %v685
        %v698 = vpack.c.b16 %v688, %v687
        %v699 = vpack.c.b16 %v690, %v689
        %v700 = vpack.c.b16 %v692, %v691
        %709 = vmatprep.subr.bf16.mxu0 0
        %710 = vmatpush1.bf16.msra.mxu0 %v693
        %711 = vmatprep.subr.bf16.mxu0 0
        %712 = vmatpush1.bf16.msra.mxu0 %v694
        %713 = vmatprep.subr.bf16.mxu0 0
        %714 = vmatpush1.bf16.msra.mxu0 %v695
        %715 = vmatprep.subr.bf16.mxu0 0
        %716 = vmatpush1.bf16.msra.mxu0 %v696
        %717 = vmatprep.subr.bf16.mxu0 0
        %718 = vmatpush1.bf16.msra.mxu0 %v697
        %719 = vmatprep.subr.bf16.mxu0 0
        %720 = vmatpush1.bf16.msra.mxu0 %v698
        %721 = vmatprep.subr.bf16.mxu0 0
        %722 = vmatpush1.bf16.msra.mxu0 %v699
        %723 = vmatprep.subr.bf16.mxu0 0
        %724 = vmatpush1.bf16.msra.mxu0 %v700
        %725 = vmatprep.subr.bf16.mxu0 0
        %726 = vmatpush1.bf16.msra.mxu0 0
        %727 = vmatprep.subr.bf16.mxu0 0
        %728 = vmatpush1.bf16.msra.mxu0 0
        %729 = vmatprep.subr.bf16.mxu0 0
        %730 = vmatpush1.bf16.msra.mxu0 0
        %731 = vmatprep.subr.bf16.mxu0 0
        %732 = vmatpush1.bf16.msra.mxu0 0
        %733 = vmatprep.subr.bf16.mxu0 0
        %734 = vmatpush1.bf16.msra.mxu0 0
        %735 = vmatprep.subr.bf16.mxu0 0
        %736 = vmatpush1.bf16.msra.mxu0 0
        %737 = vmatprep.subr.bf16.mxu0 0
        %738 = vmatpush1.bf16.msra.mxu0 0
        %739 = vmatprep.subr.bf16.mxu0 0
        %740 = vmatpush1.bf16.msra.mxu0 0
        %741 = vmatprep.mubr.bf16.mxu0 0
        %742 = vmatmul.mubr.bf16.gmra.mrb[0].mxu0 %v622
        %v743 = vpop.f32.mrb[0].mxu0
        %v744 = vadd.f32 %v659, %v743
        %v745 = vpop.f32.mrb[0].mxu0
        %v746 = vpop.f32.mrb[0].mxu0
        %v747 = vadd.f32 %v659, %v746
        %v748 = vpop.f32.mrb[0].mxu0
        %749 = vmatprep.mubr.bf16.mxu0 0
        %750 = vmatmul.mubr.bf16.gmra.mrb[0].mxu0 %v623
        %v751 = vpop.f32.mrb[0].mxu0
        %v752 = vadd.f32 %v659, %v751
        %v753 = vpop.f32.mrb[0].mxu0
        %v754 = vpop.f32.mrb[0].mxu0
        %v755 = vadd.f32 %v659, %v754
        %v756 = vpop.f32.mrb[0].mxu0
        %757 = vmatprep.mubr.bf16.mxu0 0
        %758 = vmatmul.mubr.bf16.gmra.mrb[0].mxu0 %v624
        %v759 = vpop.f32.mrb[0].mxu0
        %v760 = vadd.f32 %v659, %v759
        %v761 = vpop.f32.mrb[0].mxu0
        %v762 = vpop.f32.mrb[0].mxu0
        %v763 = vadd.f32 %v659, %v762
        %v764 = vpop.f32.mrb[0].mxu0
        %765 = vmatprep.mubr.bf16.mxu0 0
        %766 = vmatmul.mubr.bf16.gmra.mrb[0].mxu0 %v625
        %v767 = vpop.f32.mrb[0].mxu0
        %v768 = vadd.f32 %v659, %v767
        %v769 = vpop.f32.mrb[0].mxu0
        %v770 = vpop.f32.mrb[0].mxu0
        %v771 = vadd.f32 %v659, %v770
        %v772 = vpop.f32.mrb[0].mxu0
        %773 = vmatprep.mubr.bf16.mxu0 0
        %774 = vmatmul.mubr.bf16.gmra.mrb[0].mxu0 %v626
        %v775 = vpop.f32.mrb[0].mxu0
        %v776 = vadd.f32 %v659, %v775
        %v777 = vpop.f32.mrb[0].mxu0
        %v778 = vpop.f32.mrb[0].mxu0
        %v779 = vadd.f32 %v659, %v778
        %v780 = vpop.f32.mrb[0].mxu0
        %781 = vmatprep.mubr.bf16.mxu0 0
        %782 = vmatmul.mubr.bf16.gmra.mrb[0].mxu0 %v627
        %v783 = vpop.f32.mrb[0].mxu0
        %v784 = vadd.f32 %v659, %v783
        %v785 = vpop.f32.mrb[0].mxu0
        %v786 = vpop.f32.mrb[0].mxu0
        %v787 = vadd.f32 %v659, %v786
        %v788 = vpop.f32.mrb[0].mxu0
        %789 = vmatprep.mubr.bf16.mxu0 0
        %790 = vmatmul.mubr.bf16.gmra.mrb[0].mxu0 %v628
        %v791 = vpop.f32.mrb[0].mxu0
        %v792 = vadd.f32 %v659, %v791
        %v793 = vpop.f32.mrb[0].mxu0
        %v794 = vpop.f32.mrb[0].mxu0
        %v795 = vadd.f32 %v659, %v794
        %v796 = vpop.f32.mrb[0].mxu0
        %797 = vmatprep.mubr.bf16.mxu0 0
        %798 = vmatmul.mubr.bf16.gmra.mrb[0].mxu0 %v629
        %v799 = vpop.f32.mrb[0].mxu0
        %v800 = vadd.f32 %v659, %v799
        %v801 = vpop.f32.mrb[0].mxu0
        %v802 = vpop.f32.mrb[0].mxu0
        %v803 = vadd.f32 %v659, %v802
        %v804 = vpop.f32.mrb[0].mxu0
        %805 = vmatprep.mubr.bf16.mxu0 0
        %806 = vmatmul.mubr.bf16.gmra.mrb[0].mxu0 %v630
        %v807 = vpop.f32.mrb[0].mxu0
        %v808 = vadd.f32 %v659, %v807
        %v809 = vpop.f32.mrb[0].mxu0
        %v810 = vpop.f32.mrb[0].mxu0
        %v811 = vadd.f32 %v659, %v810
        %v812 = vpop.f32.mrb[0].mxu0
        %813 = vmatprep.mubr.bf16.mxu0 0
        %814 = vmatmul.mubr.bf16.gmra.mrb[0].mxu0 %v631
        %v815 = vpop.f32.mrb[0].mxu0
        %v816 = vadd.f32 %v659, %v815
        %v817 = vpop.f32.mrb[0].mxu0
        %v818 = vpop.f32.mrb[0].mxu0
        %v819 = vadd.f32 %v659, %v818
        %v820 = vpop.f32.mrb[0].mxu0
        %821 = vmatprep.mubr.bf16.mxu0 0
        %822 = vmatmul.mubr.bf16.gmra.mrb[0].mxu0 %v632
        %v823 = vpop.f32.mrb[0].mxu0
        %v824 = vadd.f32 %v659, %v823
        %v825 = vpop.f32.mrb[0].mxu0
        %v826 = vpop.f32.mrb[0].mxu0
        %v827 = vadd.f32 %v659, %v826
        %v828 = vpop.f32.mrb[0].mxu0
        %829 = vmatprep.mubr.bf16.mxu0 0
        %830 = vmatmul.mubr.bf16.gmra.mrb[0].mxu0 %v633
        %v831 = vpop.f32.mrb[0].mxu0
        %v832 = vadd.f32 %v659, %v831
        %v833 = vpop.f32.mrb[0].mxu0
        %v834 = vpop.f32.mrb[0].mxu0
        %v835 = vadd.f32 %v659, %v834
        %v836 = vpop.f32.mrb[0].mxu0
        %837 = vmatprep.mubr.bf16.mxu0 0
        %838 = vmatmul.mubr.bf16.gmra.mrb[0].mxu0 %v634
        %v839 = vpop.f32.mrb[0].mxu0
        %v840 = vadd.f32 %v659, %v839
        %v841 = vpop.f32.mrb[0].mxu0
        %v842 = vpop.f32.mrb[0].mxu0
        %v843 = vadd.f32 %v659, %v842
        %v844 = vpop.f32.mrb[0].mxu0
        %845 = vmatprep.mubr.bf16.mxu0 0
        %846 = vmatmul.mubr.bf16.gmra.mrb[0].mxu0 %v635
        %v847 = vpop.f32.mrb[0].mxu0
        %v848 = vadd.f32 %v659, %v847
        %v849 = vpop.f32.mrb[0].mxu0
        %v850 = vpop.f32.mrb[0].mxu0
        %v851 = vadd.f32 %v659, %v850
        %v852 = vpop.f32.mrb[0].mxu0
        %853 = vmatprep.mubr.bf16.mxu0 0
        %854 = vmatmul.mubr.bf16.gmra.mrb[0].mxu0 %v636
        %v855 = vpop.f32.mrb[0].mxu0
        %v856 = vadd.f32 %v659, %v855
        %v857 = vpop.f32.mrb[0].mxu0
        %v858 = vpop.f32.mrb[0].mxu0
        %v859 = vadd.f32 %v659, %v858
        %v860 = vpop.f32.mrb[0].mxu0
        %861 = vmatprep.mubr.bf16.mxu0 0
        %862 = vmatmul.mubr.bf16.gmra.mrb[0].mxu0 %v637
        %v863 = vpop.f32.mrb[0].mxu0
        %v864 = vadd.f32 %v659, %v863
        %v865 = vpop.f32.mrb[0].mxu0
        %v866 = vpop.f32.mrb[0].mxu0
        %v867 = vadd.f32 %v659, %v866
        %v868 = vpop.f32.mrb[0].mxu0
        %869 = vdwg.mxu0
        %vm870 = vcmp.gt.f32.partialorder %v744, 0.0
        %vm871 = vcmp.gt.f32.partialorder %v747, 0.0
        %vm872 = vcmp.gt.f32.partialorder %v752, 0.0
        %vm873 = vcmp.gt.f32.partialorder %v755, 0.0
        %vm874 = vcmp.gt.f32.partialorder %v760, 0.0
        %vm875 = vcmp.gt.f32.partialorder %v763, 0.0
        %vm876 = vcmp.gt.f32.partialorder %v768, 0.0
        %vm877 = vcmp.gt.f32.partialorder %v771, 0.0
        %vm878 = vcmp.gt.f32.partialorder %v776, 0.0
        %vm879 = vcmp.gt.f32.partialorder %v779, 0.0
        %vm880 = vcmp.gt.f32.partialorder %v784, 0.0
        %vm881 = vcmp.gt.f32.partialorder %v787, 0.0
        %vm882 = vcmp.gt.f32.partialorder %v792, 0.0
        %vm883 = vcmp.gt.f32.partialorder %v795, 0.0
        %vm884 = vcmp.gt.f32.partialorder %v800, 0.0
        %vm885 = vcmp.gt.f32.partialorder %v803, 0.0
        %vm886 = vcmp.gt.f32.partialorder %v808, 0.0
        %vm887 = vcmp.gt.f32.partialorder %v811, 0.0
        %vm888 = vcmp.gt.f32.partialorder %v816, 0.0
        %vm889 = vcmp.gt.f32.partialorder %v819, 0.0
        %vm890 = vcmp.gt.f32.partialorder %v824, 0.0
        %vm891 = vcmp.gt.f32.partialorder %v827, 0.0
        %vm892 = vcmp.gt.f32.partialorder %v832, 0.0
        %vm893 = vcmp.gt.f32.partialorder %v835, 0.0
        %vm894 = vcmp.gt.f32.partialorder %v840, 0.0
        %vm895 = vcmp.gt.f32.partialorder %v843, 0.0
        %vm896 = vcmp.gt.f32.partialorder %v848, 0.0
        %vm897 = vcmp.gt.f32.partialorder %v851, 0.0
        %vm898 = vcmp.gt.f32.partialorder %v856, 0.0
        %vm899 = vcmp.gt.f32.partialorder %v859, 0.0
        %vm900 = vcmp.gt.f32.partialorder %v864, 0.0
        %vm901 = vcmp.gt.f32.partialorder %v867, 0.0
        %v902 = vmul.f32 %v744, 0.01
        %v903 = vmul.f32 %v747, 0.01
        %v904 = vmul.f32 %v752, 0.01
        %v905 = vmul.f32 %v755, 0.01
        %v906 = vmul.f32 %v760, 0.01
        %v907 = vmul.f32 %v763, 0.01
        %v908 = vmul.f32 %v768, 0.01
        %v909 = vmul.f32 %v771, 0.01
        %v910 = vmul.f32 %v776, 0.01
        %v911 = vmul.f32 %v779, 0.01
        %v912 = vmul.f32 %v784, 0.01
        %v913 = vmul.f32 %v787, 0.01
        %v914 = vmul.f32 %v792, 0.01
        %v915 = vmul.f32 %v795, 0.01
        %v916 = vmul.f32 %v800, 0.01
        %v917 = vmul.f32 %v803, 0.01
        %v918 = vmul.f32 %v808, 0.01
        %v919 = vmul.f32 %v811, 0.01
        %v920 = vmul.f32 %v816, 0.01
        %v921 = vmul.f32 %v819, 0.01
        %v922 = vmul.f32 %v824, 0.01
        %v923 = vmul.f32 %v827, 0.01
        %v924 = vmul.f32 %v832, 0.01
        %v925 = vmul.f32 %v835, 0.01
        %v926 = vmul.f32 %v840, 0.01
        %v927 = vmul.f32 %v843, 0.01
        %v928 = vmul.f32 %v848, 0.01
        %v929 = vmul.f32 %v851, 0.01
        %v930 = vmul.f32 %v856, 0.01
        %v931 = vmul.f32 %v859, 0.01
        %v932 = vmul.f32 %v864, 0.01
        %v933 = vmul.f32 %v867, 0.01
        %v934 = vsel %vm870, %v744, %v902
        %v935 = vsel %vm871, %v747, %v903
        %v936 = vsel %vm872, %v752, %v904
        %v937 = vsel %vm873, %v755, %v905
        %v938 = vsel %vm874, %v760, %v906
        %v939 = vsel %vm875, %v763, %v907
        %v940 = vsel %vm876, %v768, %v908
        %v941 = vsel %vm877, %v771, %v909
        %v942 = vsel %vm878, %v776, %v910
        %v943 = vsel %vm879, %v779, %v911
        %v944 = vsel %vm880, %v784, %v912
        %v945 = vsel %vm881, %v787, %v913
        %v946 = vsel %vm882, %v792, %v914
        %v947 = vsel %vm883, %v795, %v915
        %v948 = vsel %vm884, %v800, %v916
        %v949 = vsel %vm885, %v803, %v917
        %v950 = vsel %vm886, %v808, %v918
        %v951 = vsel %vm887, %v811, %v919
        %v952 = vsel %vm888, %v816, %v920
        %v953 = vsel %vm889, %v819, %v921
        %v954 = vsel %vm890, %v824, %v922
        %v955 = vsel %vm891, %v827, %v923
        %v956 = vsel %vm892, %v832, %v924
        %v957 = vsel %vm893, %v835, %v925
        %v958 = vsel %vm894, %v840, %v926
        %v959 = vsel %vm895, %v843, %v927
        %v960 = vsel %vm896, %v848, %v928
        %v961 = vsel %vm897, %v851, %v929
        %v962 = vsel %vm898, %v856, %v930
        %v963 = vsel %vm899, %v859, %v931
        %v964 = vsel %vm900, %v864, %v932
        %v965 = vsel %vm901, %v867, %v933
        %v966 = vpack.c.bf16 %v935, %v934
        %v967 = vpack.c.bf16 %v937, %v936
        %v968 = vpack.c.bf16 %v939, %v938
        %v969 = vpack.c.bf16 %v941, %v940
        %v970 = vpack.c.bf16 %v943, %v942
        %v971 = vpack.c.bf16 %v945, %v944
        %v972 = vpack.c.bf16 %v947, %v946
        %v973 = vpack.c.bf16 %v949, %v948
        %v974 = vpack.c.bf16 %v951, %v950
        %v975 = vpack.c.bf16 %v953, %v952
        %v976 = vpack.c.bf16 %v955, %v954
        %v977 = vpack.c.bf16 %v957, %v956
        %v978 = vpack.c.bf16 %v959, %v958
        %v979 = vpack.c.bf16 %v961, %v960
        %v980 = vpack.c.bf16 %v963, %v962
        %v981 = vpack.c.bf16 %v965, %v964
        %v982 = vld [vmem:[#allocation7] sm:$0xf]
        %v983 = vld [vmem:[#allocation7 + $0x4] sm:$0xf]
        %v984 = vld [vmem:[#allocation7 + $0x8] sm:$0xf]
        %v985 = vld [vmem:[#allocation7 + $0xc] sm:$0xf]
        %v986 = vld [vmem:[#allocation7 + $0x10] sm:$0xf]
        %v987 = vld [vmem:[#allocation7 + $0x14] sm:$0xf]
        %v988 = vld [vmem:[#allocation7 + $0x18] sm:$0xf]
        %v989 = vld [vmem:[#allocation7 + $0x1c] sm:$0xf]
        %v990 = vld [vmem:[#allocation7 + $0x20] sm:$0xf]
        %v991 = vld [vmem:[#allocation7 + $0x24] sm:$0xf]
        %v992 = vld [vmem:[#allocation7 + $0x28] sm:$0xf]
        %v993 = vld [vmem:[#allocation7 + $0x2c] sm:$0xf]
        %v994 = vld [vmem:[#allocation7 + $0x30] sm:$0xf]
        %v995 = vld [vmem:[#allocation7 + $0x34] sm:$0xf]
        %v996 = vld [vmem:[#allocation7 + $0x38] sm:$0xf]
        %v997 = vld [vmem:[#allocation7 + $0x3c] sm:$0xf]
        %v998 = vld [vmem:[%s4] sm:$0x1]
        %v1000 = vlaneseq
        %v1001 = vshrl.u32 %v1000, 7
        %v1002 = vsub.s32 0, %v1001
        %v1003 = vrot.slane %v998, %v1002
        %v1021 = vunpack.c.l.b16 %v982
        %v1022 = vunpack.c.l.b16 %v983
        %v1023 = vunpack.c.l.b16 %v984
        %v1024 = vunpack.c.l.b16 %v985
        %v1025 = vunpack.c.l.b16 %v986
        %v1026 = vunpack.c.l.b16 %v987
        %v1027 = vunpack.c.l.b16 %v988
        %v1028 = vunpack.c.l.b16 %v989
        %v1029 = vunpack.c.l.b16 %v990
        %v1030 = vunpack.c.l.b16 %v991
        %v1031 = vunpack.c.l.b16 %v992
        %v1032 = vunpack.c.l.b16 %v993
        %v1033 = vunpack.c.l.b16 %v994
        %v1034 = vunpack.c.l.b16 %v995
        %v1035 = vunpack.c.l.b16 %v996
        %v1036 = vunpack.c.l.b16 %v997
        %v1037 = vpack.c.b16 %v1022, %v1021
        %v1038 = vpack.c.b16 %v1024, %v1023
        %v1039 = vpack.c.b16 %v1026, %v1025
        %v1040 = vpack.c.b16 %v1028, %v1027
        %v1041 = vpack.c.b16 %v1030, %v1029
        %v1042 = vpack.c.b16 %v1032, %v1031
        %v1043 = vpack.c.b16 %v1034, %v1033
        %v1044 = vpack.c.b16 %v1036, %v1035
        %1053 = vmatprep.subr.bf16.mxu0 0
        %1054 = vmatpush1.bf16.msra.mxu0 %v1037
        %1055 = vmatprep.subr.bf16.mxu0 0
        %1056 = vmatpush1.bf16.msra.mxu0 %v1038
        %1057 = vmatprep.subr.bf16.mxu0 0
        %1058 = vmatpush1.bf16.msra.mxu0 %v1039
        %1059 = vmatprep.subr.bf16.mxu0 0
        %1060 = vmatpush1.bf16.msra.mxu0 %v1040
        %1061 = vmatprep.subr.bf16.mxu0 0
        %1062 = vmatpush1.bf16.msra.mxu0 %v1041
        %1063 = vmatprep.subr.bf16.mxu0 0
        %1064 = vmatpush1.bf16.msra.mxu0 %v1042
        %1065 = vmatprep.subr.bf16.mxu0 0
        %1066 = vmatpush1.bf16.msra.mxu0 %v1043
        %1067 = vmatprep.subr.bf16.mxu0 0
        %1068 = vmatpush1.bf16.msra.mxu0 %v1044
        %1069 = vmatprep.subr.bf16.mxu0 0
        %1070 = vmatpush1.bf16.msra.mxu0 0
        %1071 = vmatprep.subr.bf16.mxu0 0
        %1072 = vmatpush1.bf16.msra.mxu0 0
        %1073 = vmatprep.subr.bf16.mxu0 0
        %1074 = vmatpush1.bf16.msra.mxu0 0
        %1075 = vmatprep.subr.bf16.mxu0 0
        %1076 = vmatpush1.bf16.msra.mxu0 0
        %1077 = vmatprep.subr.bf16.mxu0 0
        %1078 = vmatpush1.bf16.msra.mxu0 0
        %1079 = vmatprep.subr.bf16.mxu0 0
        %1080 = vmatpush1.bf16.msra.mxu0 0
        %1081 = vmatprep.subr.bf16.mxu0 0
        %1082 = vmatpush1.bf16.msra.mxu0 0
        %1083 = vmatprep.subr.bf16.mxu0 0
        %1084 = vmatpush1.bf16.msra.mxu0 0
        %1085 = vmatprep.mubr.bf16.mxu0 0
        %1086 = vmatmul.mubr.bf16.gmra.mrb[0].mxu0 %v966
        %v1087 = vpop.f32.mrb[0].mxu0
        %v1088 = vadd.f32 %v1003, %v1087
        %v1089 = vpop.f32.mrb[0].mxu0
        %v1090 = vpop.f32.mrb[0].mxu0
        %v1091 = vadd.f32 %v1003, %v1090
        %v1092 = vpop.f32.mrb[0].mxu0
        %1093 = vmatprep.mubr.bf16.mxu0 0
        %1094 = vmatmul.mubr.bf16.gmra.mrb[0].mxu0 %v967
        %v1095 = vpop.f32.mrb[0].mxu0
        %v1096 = vadd.f32 %v1003, %v1095
        %v1097 = vpop.f32.mrb[0].mxu0
        %v1098 = vpop.f32.mrb[0].mxu0
        %v1099 = vadd.f32 %v1003, %v1098
        %v1100 = vpop.f32.mrb[0].mxu0
        %1101 = vmatprep.mubr.bf16.mxu0 0
        %1102 = vmatmul.mubr.bf16.gmra.mrb[0].mxu0 %v968
        %v1103 = vpop.f32.mrb[0].mxu0
        %v1104 = vadd.f32 %v1003, %v1103
        %v1105 = vpop.f32.mrb[0].mxu0
        %v1106 = vpop.f32.mrb[0].mxu0
        %v1107 = vadd.f32 %v1003, %v1106
        %v1108 = vpop.f32.mrb[0].mxu0
        %1109 = vmatprep.mubr.bf16.mxu0 0
        %1110 = vmatmul.mubr.bf16.gmra.mrb[0].mxu0 %v969
        %v1111 = vpop.f32.mrb[0].mxu0
        %v1112 = vadd.f32 %v1003, %v1111
        %v1113 = vpop.f32.mrb[0].mxu0
        %v1114 = vpop.f32.mrb[0].mxu0
        %v1115 = vadd.f32 %v1003, %v1114
        %v1116 = vpop.f32.mrb[0].mxu0
        %1117 = vmatprep.mubr.bf16.mxu0 0
        %1118 = vmatmul.mubr.bf16.gmra.mrb[0].mxu0 %v970
        %v1119 = vpop.f32.mrb[0].mxu0
        %v1120 = vadd.f32 %v1003, %v1119
        %v1121 = vpop.f32.mrb[0].mxu0
        %v1122 = vpop.f32.mrb[0].mxu0
        %v1123 = vadd.f32 %v1003, %v1122
        %v1124 = vpop.f32.mrb[0].mxu0
        %1125 = vmatprep.mubr.bf16.mxu0 0
        %1126 = vmatmul.mubr.bf16.gmra.mrb[0].mxu0 %v971
        %v1127 = vpop.f32.mrb[0].mxu0
        %v1128 = vadd.f32 %v1003, %v1127
        %v1129 = vpop.f32.mrb[0].mxu0
        %v1130 = vpop.f32.mrb[0].mxu0
        %v1131 = vadd.f32 %v1003, %v1130
        %v1132 = vpop.f32.mrb[0].mxu0
        %1133 = vmatprep.mubr.bf16.mxu0 0
        %1134 = vmatmul.mubr.bf16.gmra.mrb[0].mxu0 %v972
        %v1135 = vpop.f32.mrb[0].mxu0
        %v1136 = vadd.f32 %v1003, %v1135
        %v1137 = vpop.f32.mrb[0].mxu0
        %v1138 = vpop.f32.mrb[0].mxu0
        %v1139 = vadd.f32 %v1003, %v1138
        %v1140 = vpop.f32.mrb[0].mxu0
        %1141 = vmatprep.mubr.bf16.mxu0 0
        %1142 = vmatmul.mubr.bf16.gmra.mrb[0].mxu0 %v973
        %v1143 = vpop.f32.mrb[0].mxu0
        %v1144 = vadd.f32 %v1003, %v1143
        %v1145 = vpop.f32.mrb[0].mxu0
        %v1146 = vpop.f32.mrb[0].mxu0
        %v1147 = vadd.f32 %v1003, %v1146
        %v1148 = vpop.f32.mrb[0].mxu0
        %1149 = vmatprep.mubr.bf16.mxu0 0
        %1150 = vmatmul.mubr.bf16.gmra.mrb[0].mxu0 %v974
        %v1151 = vpop.f32.mrb[0].mxu0
        %v1152 = vadd.f32 %v1003, %v1151
        %v1153 = vpop.f32.mrb[0].mxu0
        %v1154 = vpop.f32.mrb[0].mxu0
        %v1155 = vadd.f32 %v1003, %v1154
        %v1156 = vpop.f32.mrb[0].mxu0
        %1157 = vmatprep.mubr.bf16.mxu0 0
        %1158 = vmatmul.mubr.bf16.gmra.mrb[0].mxu0 %v975
        %v1159 = vpop.f32.mrb[0].mxu0
        %v1160 = vadd.f32 %v1003, %v1159
        %v1161 = vpop.f32.mrb[0].mxu0
        %v1162 = vpop.f32.mrb[0].mxu0
        %v1163 = vadd.f32 %v1003, %v1162
        %v1164 = vpop.f32.mrb[0].mxu0
        %1165 = vmatprep.mubr.bf16.mxu0 0
        %1166 = vmatmul.mubr.bf16.gmra.mrb[0].mxu0 %v976
        %v1167 = vpop.f32.mrb[0].mxu0
        %v1168 = vadd.f32 %v1003, %v1167
        %v1169 = vpop.f32.mrb[0].mxu0
        %v1170 = vpop.f32.mrb[0].mxu0
        %v1171 = vadd.f32 %v1003, %v1170
        %v1172 = vpop.f32.mrb[0].mxu0
        %1173 = vmatprep.mubr.bf16.mxu0 0
        %1174 = vmatmul.mubr.bf16.gmra.mrb[0].mxu0 %v977
        %v1175 = vpop.f32.mrb[0].mxu0
        %v1176 = vadd.f32 %v1003, %v1175
        %v1177 = vpop.f32.mrb[0].mxu0
        %v1178 = vpop.f32.mrb[0].mxu0
        %v1179 = vadd.f32 %v1003, %v1178
        %v1180 = vpop.f32.mrb[0].mxu0
        %1181 = vmatprep.mubr.bf16.mxu0 0
        %1182 = vmatmul.mubr.bf16.gmra.mrb[0].mxu0 %v978
        %v1183 = vpop.f32.mrb[0].mxu0
        %v1184 = vadd.f32 %v1003, %v1183
        %v1185 = vpop.f32.mrb[0].mxu0
        %v1186 = vpop.f32.mrb[0].mxu0
        %v1187 = vadd.f32 %v1003, %v1186
        %v1188 = vpop.f32.mrb[0].mxu0
        %1189 = vmatprep.mubr.bf16.mxu0 0
        %1190 = vmatmul.mubr.bf16.gmra.mrb[0].mxu0 %v979
        %v1191 = vpop.f32.mrb[0].mxu0
        %v1192 = vadd.f32 %v1003, %v1191
        %v1193 = vpop.f32.mrb[0].mxu0
        %v1194 = vpop.f32.mrb[0].mxu0
        %v1195 = vadd.f32 %v1003, %v1194
        %v1196 = vpop.f32.mrb[0].mxu0
        %1197 = vmatprep.mubr.bf16.mxu0 0
        %1198 = vmatmul.mubr.bf16.gmra.mrb[0].mxu0 %v980
        %v1199 = vpop.f32.mrb[0].mxu0
        %v1200 = vadd.f32 %v1003, %v1199
        %v1201 = vpop.f32.mrb[0].mxu0
        %v1202 = vpop.f32.mrb[0].mxu0
        %v1203 = vadd.f32 %v1003, %v1202
        %v1204 = vpop.f32.mrb[0].mxu0
        %1205 = vmatprep.mubr.bf16.mxu0 0
        %1206 = vmatmul.mubr.bf16.gmra.mrb[0].mxu0 %v981
        %v1207 = vpop.f32.mrb[0].mxu0
        %v1208 = vadd.f32 %v1003, %v1207
        %v1209 = vpop.f32.mrb[0].mxu0
        %v1210 = vpop.f32.mrb[0].mxu0
        %v1211 = vadd.f32 %v1003, %v1210
        %v1212 = vpop.f32.mrb[0].mxu0
        %1213 = vdwg.mxu0
        %vm1214 = vcmp.gt.f32.partialorder %v1088, 0.0
        %vm1215 = vcmp.gt.f32.partialorder %v1091, 0.0
        %vm1216 = vcmp.gt.f32.partialorder %v1096, 0.0
        %vm1217 = vcmp.gt.f32.partialorder %v1099, 0.0
        %vm1218 = vcmp.gt.f32.partialorder %v1104, 0.0
        %vm1219 = vcmp.gt.f32.partialorder %v1107, 0.0
        %vm1220 = vcmp.gt.f32.partialorder %v1112, 0.0
        %vm1221 = vcmp.gt.f32.partialorder %v1115, 0.0
        %vm1222 = vcmp.gt.f32.partialorder %v1120, 0.0
        %vm1223 = vcmp.gt.f32.partialorder %v1123, 0.0
        %vm1224 = vcmp.gt.f32.partialorder %v1128, 0.0
        %vm1225 = vcmp.gt.f32.partialorder %v1131, 0.0
        %vm1226 = vcmp.gt.f32.partialorder %v1136, 0.0
        %vm1227 = vcmp.gt.f32.partialorder %v1139, 0.0
        %vm1228 = vcmp.gt.f32.partialorder %v1144, 0.0
        %vm1229 = vcmp.gt.f32.partialorder %v1147, 0.0
        %vm1230 = vcmp.gt.f32.partialorder %v1152, 0.0
        %vm1231 = vcmp.gt.f32.partialorder %v1155, 0.0
        %vm1232 = vcmp.gt.f32.partialorder %v1160, 0.0
        %vm1233 = vcmp.gt.f32.partialorder %v1163, 0.0
        %vm1234 = vcmp.gt.f32.partialorder %v1168, 0.0
        %vm1235 = vcmp.gt.f32.partialorder %v1171, 0.0
        %vm1236 = vcmp.gt.f32.partialorder %v1176, 0.0
        %vm1237 = vcmp.gt.f32.partialorder %v1179, 0.0
        %vm1238 = vcmp.gt.f32.partialorder %v1184, 0.0
        %vm1239 = vcmp.gt.f32.partialorder %v1187, 0.0
        %vm1240 = vcmp.gt.f32.partialorder %v1192, 0.0
        %vm1241 = vcmp.gt.f32.partialorder %v1195, 0.0
        %vm1242 = vcmp.gt.f32.partialorder %v1200, 0.0
        %vm1243 = vcmp.gt.f32.partialorder %v1203, 0.0
        %vm1244 = vcmp.gt.f32.partialorder %v1208, 0.0
        %vm1245 = vcmp.gt.f32.partialorder %v1211, 0.0
        %v1246 = vmul.f32 %v1088, 0.01
        %v1247 = vmul.f32 %v1091, 0.01
        %v1248 = vmul.f32 %v1096, 0.01
        %v1249 = vmul.f32 %v1099, 0.01
        %v1250 = vmul.f32 %v1104, 0.01
        %v1251 = vmul.f32 %v1107, 0.01
        %v1252 = vmul.f32 %v1112, 0.01
        %v1253 = vmul.f32 %v1115, 0.01
        %v1254 = vmul.f32 %v1120, 0.01
        %v1255 = vmul.f32 %v1123, 0.01
        %v1256 = vmul.f32 %v1128, 0.01
        %v1257 = vmul.f32 %v1131, 0.01
        %v1258 = vmul.f32 %v1136, 0.01
        %v1259 = vmul.f32 %v1139, 0.01
        %v1260 = vmul.f32 %v1144, 0.01
        %v1261 = vmul.f32 %v1147, 0.01
        %v1262 = vmul.f32 %v1152, 0.01
        %v1263 = vmul.f32 %v1155, 0.01
        %v1264 = vmul.f32 %v1160, 0.01
        %v1265 = vmul.f32 %v1163, 0.01
        %v1266 = vmul.f32 %v1168, 0.01
        %v1267 = vmul.f32 %v1171, 0.01
        %v1268 = vmul.f32 %v1176, 0.01
        %v1269 = vmul.f32 %v1179, 0.01
        %v1270 = vmul.f32 %v1184, 0.01
        %v1271 = vmul.f32 %v1187, 0.01
        %v1272 = vmul.f32 %v1192, 0.01
        %v1273 = vmul.f32 %v1195, 0.01
        %v1274 = vmul.f32 %v1200, 0.01
        %v1275 = vmul.f32 %v1203, 0.01
        %v1276 = vmul.f32 %v1208, 0.01
        %v1277 = vmul.f32 %v1211, 0.01
        %v1278 = vsel %vm1214, %v1088, %v1246
        %v1279 = vsel %vm1215, %v1091, %v1247
        %v1280 = vsel %vm1216, %v1096, %v1248
        %v1281 = vsel %vm1217, %v1099, %v1249
        %v1282 = vsel %vm1218, %v1104, %v1250
        %v1283 = vsel %vm1219, %v1107, %v1251
        %v1284 = vsel %vm1220, %v1112, %v1252
        %v1285 = vsel %vm1221, %v1115, %v1253
        %v1286 = vsel %vm1222, %v1120, %v1254
        %v1287 = vsel %vm1223, %v1123, %v1255
        %v1288 = vsel %vm1224, %v1128, %v1256
        %v1289 = vsel %vm1225, %v1131, %v1257
        %v1290 = vsel %vm1226, %v1136, %v1258
        %v1291 = vsel %vm1227, %v1139, %v1259
        %v1292 = vsel %vm1228, %v1144, %v1260
        %v1293 = vsel %vm1229, %v1147, %v1261
        %v1294 = vsel %vm1230, %v1152, %v1262
        %v1295 = vsel %vm1231, %v1155, %v1263
        %v1296 = vsel %vm1232, %v1160, %v1264
        %v1297 = vsel %vm1233, %v1163, %v1265
        %v1298 = vsel %vm1234, %v1168, %v1266
        %v1299 = vsel %vm1235, %v1171, %v1267
        %v1300 = vsel %vm1236, %v1176, %v1268
        %v1301 = vsel %vm1237, %v1179, %v1269
        %v1302 = vsel %vm1238, %v1184, %v1270
        %v1303 = vsel %vm1239, %v1187, %v1271
        %v1304 = vsel %vm1240, %v1192, %v1272
        %v1305 = vsel %vm1241, %v1195, %v1273
        %v1306 = vsel %vm1242, %v1200, %v1274
        %v1307 = vsel %vm1243, %v1203, %v1275
        %v1308 = vsel %vm1244, %v1208, %v1276
        %v1309 = vsel %vm1245, %v1211, %v1277
        %v1310 = vpack.c.bf16 %v1279, %v1278
        %v1311 = vpack.c.bf16 %v1281, %v1280
        %v1312 = vpack.c.bf16 %v1283, %v1282
        %v1313 = vpack.c.bf16 %v1285, %v1284
        %v1314 = vpack.c.bf16 %v1287, %v1286
        %v1315 = vpack.c.bf16 %v1289, %v1288
        %v1316 = vpack.c.bf16 %v1291, %v1290
        %v1317 = vpack.c.bf16 %v1293, %v1292
        %v1318 = vpack.c.bf16 %v1295, %v1294
        %v1319 = vpack.c.bf16 %v1297, %v1296
        %v1320 = vpack.c.bf16 %v1299, %v1298
        %v1321 = vpack.c.bf16 %v1301, %v1300
        %v1322 = vpack.c.bf16 %v1303, %v1302
        %v1323 = vpack.c.bf16 %v1305, %v1304
        %v1324 = vpack.c.bf16 %v1307, %v1306
        %v1325 = vpack.c.bf16 %v1309, %v1308
        %v1326 = vld [vmem:[#allocation8] sm:$0xf]
        %v1327 = vld [vmem:[#allocation8 + $0x4] sm:$0xf]
        %v1328 = vld [vmem:[#allocation8 + $0x8] sm:$0xf]
        %v1329 = vld [vmem:[#allocation8 + $0xc] sm:$0xf]
        %v1330 = vld [vmem:[#allocation8 + $0x10] sm:$0xf]
        %v1331 = vld [vmem:[#allocation8 + $0x14] sm:$0xf]
        %v1332 = vld [vmem:[#allocation8 + $0x18] sm:$0xf]
        %v1333 = vld [vmem:[#allocation8 + $0x1c] sm:$0xf]
        %v1334 = vld [vmem:[#allocation8 + $0x20] sm:$0xf]
        %v1335 = vld [vmem:[#allocation8 + $0x24] sm:$0xf]
        %v1336 = vld [vmem:[#allocation8 + $0x28] sm:$0xf]
        %v1337 = vld [vmem:[#allocation8 + $0x2c] sm:$0xf]
        %v1338 = vld [vmem:[#allocation8 + $0x30] sm:$0xf]
        %v1339 = vld [vmem:[#allocation8 + $0x34] sm:$0xf]
        %v1340 = vld [vmem:[#allocation8 + $0x38] sm:$0xf]
        %v1341 = vld [vmem:[#allocation8 + $0x3c] sm:$0xf]
        %v1342 = vld [vmem:[%s6] sm:$0x1]
        %v1344 = vlaneseq
        %v1345 = vshrl.u32 %v1344, 7
        %v1346 = vsub.s32 0, %v1345
        %v1347 = vrot.slane %v1342, %v1346
        %v1365 = vunpack.c.l.b16 %v1326
        %v1366 = vunpack.c.l.b16 %v1327
        %v1367 = vunpack.c.l.b16 %v1328
        %v1368 = vunpack.c.l.b16 %v1329
        %v1369 = vunpack.c.l.b16 %v1330
        %v1370 = vunpack.c.l.b16 %v1331
        %v1371 = vunpack.c.l.b16 %v1332
        %v1372 = vunpack.c.l.b16 %v1333
        %v1373 = vunpack.c.l.b16 %v1334
        %v1374 = vunpack.c.l.b16 %v1335
        %v1375 = vunpack.c.l.b16 %v1336
        %v1376 = vunpack.c.l.b16 %v1337
        %v1377 = vunpack.c.l.b16 %v1338
        %v1378 = vunpack.c.l.b16 %v1339
        %v1379 = vunpack.c.l.b16 %v1340
        %v1380 = vunpack.c.l.b16 %v1341
        %v1381 = vpack.c.b16 %v1366, %v1365
        %v1382 = vpack.c.b16 %v1368, %v1367
        %v1383 = vpack.c.b16 %v1370, %v1369
        %v1384 = vpack.c.b16 %v1372, %v1371
        %v1385 = vpack.c.b16 %v1374, %v1373
        %v1386 = vpack.c.b16 %v1376, %v1375
        %v1387 = vpack.c.b16 %v1378, %v1377
        %v1388 = vpack.c.b16 %v1380, %v1379
        %1397 = vmatprep.subr.bf16.mxu0 0
        %1398 = vmatpush1.bf16.msra.mxu0 %v1381
        %1399 = vmatprep.subr.bf16.mxu0 0
        %1400 = vmatpush1.bf16.msra.mxu0 %v1382
        %1401 = vmatprep.subr.bf16.mxu0 0
        %1402 = vmatpush1.bf16.msra.mxu0 %v1383
        %1403 = vmatprep.subr.bf16.mxu0 0
        %1404 = vmatpush1.bf16.msra.mxu0 %v1384
        %1405 = vmatprep.subr.bf16.mxu0 0
        %1406 = vmatpush1.bf16.msra.mxu0 %v1385
        %1407 = vmatprep.subr.bf16.mxu0 0
        %1408 = vmatpush1.bf16.msra.mxu0 %v1386
        %1409 = vmatprep.subr.bf16.mxu0 0
        %1410 = vmatpush1.bf16.msra.mxu0 %v1387
        %1411 = vmatprep.subr.bf16.mxu0 0
        %1412 = vmatpush1.bf16.msra.mxu0 %v1388
        %1413 = vmatprep.subr.bf16.mxu0 0
        %1414 = vmatpush1.bf16.msra.mxu0 0
        %1415 = vmatprep.subr.bf16.mxu0 0
        %1416 = vmatpush1.bf16.msra.mxu0 0
        %1417 = vmatprep.subr.bf16.mxu0 0
        %1418 = vmatpush1.bf16.msra.mxu0 0
        %1419 = vmatprep.subr.bf16.mxu0 0
        %1420 = vmatpush1.bf16.msra.mxu0 0
        %1421 = vmatprep.subr.bf16.mxu0 0
        %1422 = vmatpush1.bf16.msra.mxu0 0
        %1423 = vmatprep.subr.bf16.mxu0 0
        %1424 = vmatpush1.bf16.msra.mxu0 0
        %1425 = vmatprep.subr.bf16.mxu0 0
        %1426 = vmatpush1.bf16.msra.mxu0 0
        %1427 = vmatprep.subr.bf16.mxu0 0
        %1428 = vmatpush1.bf16.msra.mxu0 0
        %1429 = vmatprep.mubr.bf16.mxu0 0
        %1430 = vmatmul.mubr.bf16.gmra.mrb[0].mxu0 %v1310
        %v1431 = vpop.f32.mrb[0].mxu0
        %v1432 = vadd.f32 %v1347, %v1431
        %v1433 = vpop.f32.mrb[0].mxu0
        %v1434 = vpop.f32.mrb[0].mxu0
        %v1435 = vadd.f32 %v1347, %v1434
        %v1436 = vpop.f32.mrb[0].mxu0
        %1437 = vmatprep.mubr.bf16.mxu0 0
        %1438 = vmatmul.mubr.bf16.gmra.mrb[0].mxu0 %v1311
        %v1439 = vpop.f32.mrb[0].mxu0
        %v1440 = vadd.f32 %v1347, %v1439
        %v1441 = vpop.f32.mrb[0].mxu0
        %v1442 = vpop.f32.mrb[0].mxu0
        %v1443 = vadd.f32 %v1347, %v1442
        %v1444 = vpop.f32.mrb[0].mxu0
        %1445 = vmatprep.mubr.bf16.mxu0 0
        %1446 = vmatmul.mubr.bf16.gmra.mrb[0].mxu0 %v1312
        %v1447 = vpop.f32.mrb[0].mxu0
        %v1448 = vadd.f32 %v1347, %v1447
        %v1449 = vpop.f32.mrb[0].mxu0
        %v1450 = vpop.f32.mrb[0].mxu0
        %v1451 = vadd.f32 %v1347, %v1450
        %v1452 = vpop.f32.mrb[0].mxu0
        %1453 = vmatprep.mubr.bf16.mxu0 0
        %1454 = vmatmul.mubr.bf16.gmra.mrb[0].mxu0 %v1313
        %v1455 = vpop.f32.mrb[0].mxu0
        %v1456 = vadd.f32 %v1347, %v1455
        %v1457 = vpop.f32.mrb[0].mxu0
        %v1458 = vpop.f32.mrb[0].mxu0
        %v1459 = vadd.f32 %v1347, %v1458
        %v1460 = vpop.f32.mrb[0].mxu0
        %1461 = vmatprep.mubr.bf16.mxu0 0
        %1462 = vmatmul.mubr.bf16.gmra.mrb[0].mxu0 %v1314
        %v1463 = vpop.f32.mrb[0].mxu0
        %v1464 = vadd.f32 %v1347, %v1463
        %v1465 = vpop.f32.mrb[0].mxu0
        %v1466 = vpop.f32.mrb[0].mxu0
        %v1467 = vadd.f32 %v1347, %v1466
        %v1468 = vpop.f32.mrb[0].mxu0
        %1469 = vmatprep.mubr.bf16.mxu0 0
        %1470 = vmatmul.mubr.bf16.gmra.mrb[0].mxu0 %v1315
        %v1471 = vpop.f32.mrb[0].mxu0
        %v1472 = vadd.f32 %v1347, %v1471
        %v1473 = vpop.f32.mrb[0].mxu0
        %v1474 = vpop.f32.mrb[0].mxu0
        %v1475 = vadd.f32 %v1347, %v1474
        %v1476 = vpop.f32.mrb[0].mxu0
        %1477 = vmatprep.mubr.bf16.mxu0 0
        %1478 = vmatmul.mubr.bf16.gmra.mrb[0].mxu0 %v1316
        %v1479 = vpop.f32.mrb[0].mxu0
        %v1480 = vadd.f32 %v1347, %v1479
        %v1481 = vpop.f32.mrb[0].mxu0
        %v1482 = vpop.f32.mrb[0].mxu0
        %v1483 = vadd.f32 %v1347, %v1482
        %v1484 = vpop.f32.mrb[0].mxu0
        %1485 = vmatprep.mubr.bf16.mxu0 0
        %1486 = vmatmul.mubr.bf16.gmra.mrb[0].mxu0 %v1317
        %v1487 = vpop.f32.mrb[0].mxu0
        %v1488 = vadd.f32 %v1347, %v1487
        %v1489 = vpop.f32.mrb[0].mxu0
        %v1490 = vpop.f32.mrb[0].mxu0
        %v1491 = vadd.f32 %v1347, %v1490
        %v1492 = vpop.f32.mrb[0].mxu0
        %1493 = vmatprep.mubr.bf16.mxu0 0
        %1494 = vmatmul.mubr.bf16.gmra.mrb[0].mxu0 %v1318
        %v1495 = vpop.f32.mrb[0].mxu0
        %v1496 = vadd.f32 %v1347, %v1495
        %v1497 = vpop.f32.mrb[0].mxu0
        %v1498 = vpop.f32.mrb[0].mxu0
        %v1499 = vadd.f32 %v1347, %v1498
        %v1500 = vpop.f32.mrb[0].mxu0
        %1501 = vmatprep.mubr.bf16.mxu0 0
        %1502 = vmatmul.mubr.bf16.gmra.mrb[0].mxu0 %v1319
        %v1503 = vpop.f32.mrb[0].mxu0
        %v1504 = vadd.f32 %v1347, %v1503
        %v1505 = vpop.f32.mrb[0].mxu0
        %v1506 = vpop.f32.mrb[0].mxu0
        %v1507 = vadd.f32 %v1347, %v1506
        %v1508 = vpop.f32.mrb[0].mxu0
        %1509 = vmatprep.mubr.bf16.mxu0 0
        %1510 = vmatmul.mubr.bf16.gmra.mrb[0].mxu0 %v1320
        %v1511 = vpop.f32.mrb[0].mxu0
        %v1512 = vadd.f32 %v1347, %v1511
        %v1513 = vpop.f32.mrb[0].mxu0
        %v1514 = vpop.f32.mrb[0].mxu0
        %v1515 = vadd.f32 %v1347, %v1514
        %v1516 = vpop.f32.mrb[0].mxu0
        %1517 = vmatprep.mubr.bf16.mxu0 0
        %1518 = vmatmul.mubr.bf16.gmra.mrb[0].mxu0 %v1321
        %v1519 = vpop.f32.mrb[0].mxu0
        %v1520 = vadd.f32 %v1347, %v1519
        %v1521 = vpop.f32.mrb[0].mxu0
        %v1522 = vpop.f32.mrb[0].mxu0
        %v1523 = vadd.f32 %v1347, %v1522
        %v1524 = vpop.f32.mrb[0].mxu0
        %1525 = vmatprep.mubr.bf16.mxu0 0
        %1526 = vmatmul.mubr.bf16.gmra.mrb[0].mxu0 %v1322
        %v1527 = vpop.f32.mrb[0].mxu0
        %v1528 = vadd.f32 %v1347, %v1527
        %v1529 = vpop.f32.mrb[0].mxu0
        %v1530 = vpop.f32.mrb[0].mxu0
        %v1531 = vadd.f32 %v1347, %v1530
        %v1532 = vpop.f32.mrb[0].mxu0
        %1533 = vmatprep.mubr.bf16.mxu0 0
        %1534 = vmatmul.mubr.bf16.gmra.mrb[0].mxu0 %v1323
        %v1535 = vpop.f32.mrb[0].mxu0
        %v1536 = vadd.f32 %v1347, %v1535
        %v1537 = vpop.f32.mrb[0].mxu0
        %v1538 = vpop.f32.mrb[0].mxu0
        %v1539 = vadd.f32 %v1347, %v1538
        %v1540 = vpop.f32.mrb[0].mxu0
        %1541 = vmatprep.mubr.bf16.mxu0 0
        %1542 = vmatmul.mubr.bf16.gmra.mrb[0].mxu0 %v1324
        %v1543 = vpop.f32.mrb[0].mxu0
        %v1544 = vadd.f32 %v1347, %v1543
        %v1545 = vpop.f32.mrb[0].mxu0
        %v1546 = vpop.f32.mrb[0].mxu0
        %v1547 = vadd.f32 %v1347, %v1546
        %v1548 = vpop.f32.mrb[0].mxu0
        %1549 = vmatprep.mubr.bf16.mxu0 0
        %1550 = vmatmul.mubr.bf16.gmra.mrb[0].mxu0 %v1325
        %v1551 = vpop.f32.mrb[0].mxu0
        %v1552 = vadd.f32 %v1347, %v1551
        %v1553 = vpop.f32.mrb[0].mxu0
        %v1554 = vpop.f32.mrb[0].mxu0
        %v1555 = vadd.f32 %v1347, %v1554
        %v1556 = vpop.f32.mrb[0].mxu0
        %1557 = vdwg.mxu0
        %v1558 = vpack.c.bf16 %v1435, %v1432
        %v1559 = vpack.c.bf16 %v1443, %v1440
        %v1560 = vpack.c.bf16 %v1451, %v1448
        %v1561 = vpack.c.bf16 %v1459, %v1456
        %v1562 = vpack.c.bf16 %v1467, %v1464
        %v1563 = vpack.c.bf16 %v1475, %v1472
        %v1564 = vpack.c.bf16 %v1483, %v1480
        %v1565 = vpack.c.bf16 %v1491, %v1488
        %v1566 = vpack.c.bf16 %v1499, %v1496
        %v1567 = vpack.c.bf16 %v1507, %v1504
        %v1568 = vpack.c.bf16 %v1515, %v1512
        %v1569 = vpack.c.bf16 %v1523, %v1520
        %v1570 = vpack.c.bf16 %v1531, %v1528
        %v1571 = vpack.c.bf16 %v1539, %v1536
        %v1572 = vpack.c.bf16 %v1547, %v1544
        %v1573 = vpack.c.bf16 %v1555, %v1552
        %v1590 = vunpack.c.l.b16 %v1558
        %v1591 = vunpack.c.h.b16 %v1558
        %v1592 = vunpack.c.l.b16 %v1559
        %v1593 = vunpack.c.h.b16 %v1559
        %v1594 = vunpack.c.l.b16 %v1560
        %v1595 = vunpack.c.h.b16 %v1560
        %v1596 = vunpack.c.l.b16 %v1561
        %v1597 = vunpack.c.h.b16 %v1561
        %v1598 = vunpack.c.l.b16 %v1562
        %v1599 = vunpack.c.h.b16 %v1562
        %v1600 = vunpack.c.l.b16 %v1563
        %v1601 = vunpack.c.h.b16 %v1563
        %v1602 = vunpack.c.l.b16 %v1564
        %v1603 = vunpack.c.h.b16 %v1564
        %v1604 = vunpack.c.l.b16 %v1565
        %v1605 = vunpack.c.h.b16 %v1565
        %v1606 = vunpack.c.l.b16 %v1566
        %v1607 = vunpack.c.h.b16 %v1566
        %v1608 = vunpack.c.l.b16 %v1567
        %v1609 = vunpack.c.h.b16 %v1567
        %v1610 = vunpack.c.l.b16 %v1568
        %v1611 = vunpack.c.h.b16 %v1568
        %v1612 = vunpack.c.l.b16 %v1569
        %v1613 = vunpack.c.h.b16 %v1569
        %v1614 = vunpack.c.l.b16 %v1570
        %v1615 = vunpack.c.h.b16 %v1570
        %v1616 = vunpack.c.l.b16 %v1571
        %v1617 = vunpack.c.h.b16 %v1571
        %v1618 = vunpack.c.l.b16 %v1572
        %v1619 = vunpack.c.h.b16 %v1572
        %v1620 = vunpack.c.l.b16 %v1573
        %v1621 = vunpack.c.h.b16 %v1573
        %v1622 = vpack.c.b16 %v1590, %v1590
        %v1623 = vpack.c.b16 %v1591, %v1591
        %v1624 = vpack.c.b16 %v1592, %v1592
        %v1625 = vpack.c.b16 %v1593, %v1593
        %v1626 = vpack.c.b16 %v1594, %v1594
        %v1627 = vpack.c.b16 %v1595, %v1595
        %v1628 = vpack.c.b16 %v1596, %v1596
        %v1629 = vpack.c.b16 %v1597, %v1597
        %v1630 = vpack.c.b16 %v1598, %v1598
        %v1631 = vpack.c.b16 %v1599, %v1599
        %v1632 = vpack.c.b16 %v1600, %v1600
        %v1633 = vpack.c.b16 %v1601, %v1601
        %v1634 = vpack.c.b16 %v1602, %v1602
        %v1635 = vpack.c.b16 %v1603, %v1603
        %v1636 = vpack.c.b16 %v1604, %v1604
        %v1637 = vpack.c.b16 %v1605, %v1605
        %v1638 = vpack.c.b16 %v1606, %v1606
        %v1639 = vpack.c.b16 %v1607, %v1607
        %v1640 = vpack.c.b16 %v1608, %v1608
        %v1641 = vpack.c.b16 %v1609, %v1609
        %v1642 = vpack.c.b16 %v1610, %v1610
        %v1643 = vpack.c.b16 %v1611, %v1611
        %v1644 = vpack.c.b16 %v1612, %v1612
        %v1645 = vpack.c.b16 %v1613, %v1613
        %v1646 = vpack.c.b16 %v1614, %v1614
        %v1647 = vpack.c.b16 %v1615, %v1615
        %v1648 = vpack.c.b16 %v1616, %v1616
        %v1649 = vpack.c.b16 %v1617, %v1617
        %v1650 = vpack.c.b16 %v1618, %v1618
        %v1651 = vpack.c.b16 %v1619, %v1619
        %v1652 = vpack.c.b16 %v1620, %v1620
        %v1653 = vpack.c.b16 %v1621, %v1621
        %1686 = vst [vmem:[%s586] sm:$0xf] %v1622
        %1687 = vst [vmem:[%s586 + $0x4] sm:$0xf] %v1623
        %1688 = vst [vmem:[%s586 + $0x8] sm:$0xf] %v1624
        %1689 = vst [vmem:[%s586 + $0xc] sm:$0xf] %v1625
        %1690 = vst [vmem:[%s586 + $0x10] sm:$0xf] %v1626
        %1691 = vst [vmem:[%s586 + $0x14] sm:$0xf] %v1627
        %1692 = vst [vmem:[%s586 + $0x18] sm:$0xf] %v1628
        %1693 = vst [vmem:[%s586 + $0x1c] sm:$0xf] %v1629
        %1694 = vst [vmem:[%s586 + $0x20] sm:$0xf] %v1630
        %1695 = vst [vmem:[%s586 + $0x24] sm:$0xf] %v1631
        %1696 = vst [vmem:[%s586 + $0x28] sm:$0xf] %v1632
        %1697 = vst [vmem:[%s586 + $0x2c] sm:$0xf] %v1633
        %1698 = vst [vmem:[%s586 + $0x30] sm:$0xf] %v1634
        %1699 = vst [vmem:[%s586 + $0x34] sm:$0xf] %v1635
        %1700 = vst [vmem:[%s586 + $0x38] sm:$0xf] %v1636
        %1701 = vst [vmem:[%s586 + $0x3c] sm:$0xf] %v1637
        %1702 = vst [vmem:[%s586 + $0x40] sm:$0xf] %v1638
        %1703 = vst [vmem:[%s586 + $0x44] sm:$0xf] %v1639
        %1704 = vst [vmem:[%s586 + $0x48] sm:$0xf] %v1640
        %1705 = vst [vmem:[%s586 + $0x4c] sm:$0xf] %v1641
        %1706 = vst [vmem:[%s586 + $0x50] sm:$0xf] %v1642
        %1707 = vst [vmem:[%s586 + $0x54] sm:$0xf] %v1643
        %1708 = vst [vmem:[%s586 + $0x58] sm:$0xf] %v1644
        %1709 = vst [vmem:[%s586 + $0x5c] sm:$0xf] %v1645
        %1710 = vst [vmem:[%s586 + $0x60] sm:$0xf] %v1646
        %1711 = vst [vmem:[%s586 + $0x64] sm:$0xf] %v1647
        %1712 = vst [vmem:[%s586 + $0x68] sm:$0xf] %v1648
        %1713 = vst [vmem:[%s586 + $0x6c] sm:$0xf] %v1649
        %1714 = vst [vmem:[%s586 + $0x70] sm:$0xf] %v1650
        %1715 = vst [vmem:[%s586 + $0x74] sm:$0xf] %v1651
        %1716 = vst [vmem:[%s586 + $0x78] sm:$0xf] %v1652
        %1717 = vst [vmem:[%s586 + $0x7c] sm:$0xf] %v1653
        %v1718 = vld [vmem:[#allocation10] sm:$0xf]
        %v1719 = vld [vmem:[#allocation10 + $0x4] sm:$0xf]
        %v1720 = vld [vmem:[#allocation10 + $0x8] sm:$0xf]
        %v1721 = vld [vmem:[#allocation10 + $0xc] sm:$0xf]
        %v1722 = vld [vmem:[#allocation10 + $0x10] sm:$0xf]
        %v1723 = vld [vmem:[#allocation10 + $0x14] sm:$0xf]
        %v1724 = vld [vmem:[#allocation10 + $0x18] sm:$0xf]
        %v1725 = vld [vmem:[#allocation10 + $0x1c] sm:$0xf]
        %v1726 = vld [vmem:[#allocation10 + $0x20] sm:$0xf]
        %v1727 = vld [vmem:[#allocation10 + $0x24] sm:$0xf]
        %v1728 = vld [vmem:[#allocation10 + $0x28] sm:$0xf]
        %v1729 = vld [vmem:[#allocation10 + $0x2c] sm:$0xf]
        %v1730 = vld [vmem:[#allocation10 + $0x30] sm:$0xf]
        %v1731 = vld [vmem:[#allocation10 + $0x34] sm:$0xf]
        %v1732 = vld [vmem:[#allocation10 + $0x38] sm:$0xf]
        %v1733 = vld [vmem:[#allocation10 + $0x3c] sm:$0xf]
        %v1734 = vld [vmem:[%s8] sm:$0x1]
        %v1736 = vlaneseq
        %v1737 = vshrl.u32 %v1736, 7
        %v1738 = vsub.s32 0, %v1737
        %v1739 = vrot.slane %v1734, %v1738
        %v1757 = vunpack.c.l.b16 %v1718
        %v1758 = vunpack.c.l.b16 %v1719
        %v1759 = vunpack.c.l.b16 %v1720
        %v1760 = vunpack.c.l.b16 %v1721
        %v1761 = vunpack.c.l.b16 %v1722
        %v1762 = vunpack.c.l.b16 %v1723
        %v1763 = vunpack.c.l.b16 %v1724
        %v1764 = vunpack.c.l.b16 %v1725
        %v1765 = vunpack.c.l.b16 %v1726
        %v1766 = vunpack.c.l.b16 %v1727
        %v1767 = vunpack.c.l.b16 %v1728
        %v1768 = vunpack.c.l.b16 %v1729
        %v1769 = vunpack.c.l.b16 %v1730
        %v1770 = vunpack.c.l.b16 %v1731
        %v1771 = vunpack.c.l.b16 %v1732
        %v1772 = vunpack.c.l.b16 %v1733
        %v1773 = vpack.c.b16 %v1758, %v1757
        %v1774 = vpack.c.b16 %v1760, %v1759
        %v1775 = vpack.c.b16 %v1762, %v1761
        %v1776 = vpack.c.b16 %v1764, %v1763
        %v1777 = vpack.c.b16 %v1766, %v1765
        %v1778 = vpack.c.b16 %v1768, %v1767
        %v1779 = vpack.c.b16 %v1770, %v1769
        %v1780 = vpack.c.b16 %v1772, %v1771
        %1789 = vmatprep.subr.bf16.mxu0 0
        %1790 = vmatpush1.bf16.msra.mxu0 %v1773
        %1791 = vmatprep.subr.bf16.mxu0 0
        %1792 = vmatpush1.bf16.msra.mxu0 %v1774
        %1793 = vmatprep.subr.bf16.mxu0 0
        %1794 = vmatpush1.bf16.msra.mxu0 %v1775
        %1795 = vmatprep.subr.bf16.mxu0 0
        %1796 = vmatpush1.bf16.msra.mxu0 %v1776
        %1797 = vmatprep.subr.bf16.mxu0 0
        %1798 = vmatpush1.bf16.msra.mxu0 %v1777
        %1799 = vmatprep.subr.bf16.mxu0 0
        %1800 = vmatpush1.bf16.msra.mxu0 %v1778
        %1801 = vmatprep.subr.bf16.mxu0 0
        %1802 = vmatpush1.bf16.msra.mxu0 %v1779
        %1803 = vmatprep.subr.bf16.mxu0 0
        %1804 = vmatpush1.bf16.msra.mxu0 %v1780
        %1805 = vmatprep.subr.bf16.mxu0 0
        %1806 = vmatpush1.bf16.msra.mxu0 0
        %1807 = vmatprep.subr.bf16.mxu0 0
        %1808 = vmatpush1.bf16.msra.mxu0 0
        %1809 = vmatprep.subr.bf16.mxu0 0
        %1810 = vmatpush1.bf16.msra.mxu0 0
        %1811 = vmatprep.subr.bf16.mxu0 0
        %1812 = vmatpush1.bf16.msra.mxu0 0
        %1813 = vmatprep.subr.bf16.mxu0 0
        %1814 = vmatpush1.bf16.msra.mxu0 0
        %1815 = vmatprep.subr.bf16.mxu0 0
        %1816 = vmatpush1.bf16.msra.mxu0 0
        %1817 = vmatprep.subr.bf16.mxu0 0
        %1818 = vmatpush1.bf16.msra.mxu0 0
        %1819 = vmatprep.subr.bf16.mxu0 0
        %1820 = vmatpush1.bf16.msra.mxu0 0
        %1821 = vmatprep.mubr.bf16.mxu0 0
        %1822 = vmatmul.mubr.bf16.gmra.mrb[0].mxu0 %v1558
        %v1823 = vpop.f32.mrb[0].mxu0
        %v1824 = vadd.f32 %v1739, %v1823
        %v1825 = vpop.f32.mrb[0].mxu0
        %v1826 = vpop.f32.mrb[0].mxu0
        %v1827 = vadd.f32 %v1739, %v1826
        %v1828 = vpop.f32.mrb[0].mxu0
        %1829 = vmatprep.mubr.bf16.mxu0 0
        %1830 = vmatmul.mubr.bf16.gmra.mrb[0].mxu0 %v1559
        %v1831 = vpop.f32.mrb[0].mxu0
        %v1832 = vadd.f32 %v1739, %v1831
        %v1833 = vpop.f32.mrb[0].mxu0
        %v1834 = vpop.f32.mrb[0].mxu0
        %v1835 = vadd.f32 %v1739, %v1834
        %v1836 = vpop.f32.mrb[0].mxu0
        %1837 = vmatprep.mubr.bf16.mxu0 0
        %1838 = vmatmul.mubr.bf16.gmra.mrb[0].mxu0 %v1560
        %v1839 = vpop.f32.mrb[0].mxu0
        %v1840 = vadd.f32 %v1739, %v1839
        %v1841 = vpop.f32.mrb[0].mxu0
        %v1842 = vpop.f32.mrb[0].mxu0
        %v1843 = vadd.f32 %v1739, %v1842
        %v1844 = vpop.f32.mrb[0].mxu0
        %1845 = vmatprep.mubr.bf16.mxu0 0
        %1846 = vmatmul.mubr.bf16.gmra.mrb[0].mxu0 %v1561
        %v1847 = vpop.f32.mrb[0].mxu0
        %v1848 = vadd.f32 %v1739, %v1847
        %v1849 = vpop.f32.mrb[0].mxu0
        %v1850 = vpop.f32.mrb[0].mxu0
        %v1851 = vadd.f32 %v1739, %v1850
        %v1852 = vpop.f32.mrb[0].mxu0
        %1853 = vmatprep.mubr.bf16.mxu0 0
        %1854 = vmatmul.mubr.bf16.gmra.mrb[0].mxu0 %v1562
        %v1855 = vpop.f32.mrb[0].mxu0
        %v1856 = vadd.f32 %v1739, %v1855
        %v1857 = vpop.f32.mrb[0].mxu0
        %v1858 = vpop.f32.mrb[0].mxu0
        %v1859 = vadd.f32 %v1739, %v1858
        %v1860 = vpop.f32.mrb[0].mxu0
        %1861 = vmatprep.mubr.bf16.mxu0 0
        %1862 = vmatmul.mubr.bf16.gmra.mrb[0].mxu0 %v1563
        %v1863 = vpop.f32.mrb[0].mxu0
        %v1864 = vadd.f32 %v1739, %v1863
        %v1865 = vpop.f32.mrb[0].mxu0
        %v1866 = vpop.f32.mrb[0].mxu0
        %v1867 = vadd.f32 %v1739, %v1866
        %v1868 = vpop.f32.mrb[0].mxu0
        %1869 = vmatprep.mubr.bf16.mxu0 0
        %1870 = vmatmul.mubr.bf16.gmra.mrb[0].mxu0 %v1564
        %v1871 = vpop.f32.mrb[0].mxu0
        %v1872 = vadd.f32 %v1739, %v1871
        %v1873 = vpop.f32.mrb[0].mxu0
        %v1874 = vpop.f32.mrb[0].mxu0
        %v1875 = vadd.f32 %v1739, %v1874
        %v1876 = vpop.f32.mrb[0].mxu0
        %1877 = vmatprep.mubr.bf16.mxu0 0
        %1878 = vmatmul.mubr.bf16.gmra.mrb[0].mxu0 %v1565
        %v1879 = vpop.f32.mrb[0].mxu0
        %v1880 = vadd.f32 %v1739, %v1879
        %v1881 = vpop.f32.mrb[0].mxu0
        %v1882 = vpop.f32.mrb[0].mxu0
        %v1883 = vadd.f32 %v1739, %v1882
        %v1884 = vpop.f32.mrb[0].mxu0
        %1885 = vmatprep.mubr.bf16.mxu0 0
        %1886 = vmatmul.mubr.bf16.gmra.mrb[0].mxu0 %v1566
        %v1887 = vpop.f32.mrb[0].mxu0
        %v1888 = vadd.f32 %v1739, %v1887
        %v1889 = vpop.f32.mrb[0].mxu0
        %v1890 = vpop.f32.mrb[0].mxu0
        %v1891 = vadd.f32 %v1739, %v1890
        %v1892 = vpop.f32.mrb[0].mxu0
        %1893 = vmatprep.mubr.bf16.mxu0 0
        %1894 = vmatmul.mubr.bf16.gmra.mrb[0].mxu0 %v1567
        %v1895 = vpop.f32.mrb[0].mxu0
        %v1896 = vadd.f32 %v1739, %v1895
        %v1897 = vpop.f32.mrb[0].mxu0
        %v1898 = vpop.f32.mrb[0].mxu0
        %v1899 = vadd.f32 %v1739, %v1898
        %v1900 = vpop.f32.mrb[0].mxu0
        %1901 = vmatprep.mubr.bf16.mxu0 0
        %1902 = vmatmul.mubr.bf16.gmra.mrb[0].mxu0 %v1568
        %v1903 = vpop.f32.mrb[0].mxu0
        %v1904 = vadd.f32 %v1739, %v1903
        %v1905 = vpop.f32.mrb[0].mxu0
        %v1906 = vpop.f32.mrb[0].mxu0
        %v1907 = vadd.f32 %v1739, %v1906
        %v1908 = vpop.f32.mrb[0].mxu0
        %1909 = vmatprep.mubr.bf16.mxu0 0
        %1910 = vmatmul.mubr.bf16.gmra.mrb[0].mxu0 %v1569
        %v1911 = vpop.f32.mrb[0].mxu0
        %v1912 = vadd.f32 %v1739, %v1911
        %v1913 = vpop.f32.mrb[0].mxu0
        %v1914 = vpop.f32.mrb[0].mxu0
        %v1915 = vadd.f32 %v1739, %v1914
        %v1916 = vpop.f32.mrb[0].mxu0
        %1917 = vmatprep.mubr.bf16.mxu0 0
        %1918 = vmatmul.mubr.bf16.gmra.mrb[0].mxu0 %v1570
        %v1919 = vpop.f32.mrb[0].mxu0
        %v1920 = vadd.f32 %v1739, %v1919
        %v1921 = vpop.f32.mrb[0].mxu0
        %v1922 = vpop.f32.mrb[0].mxu0
        %v1923 = vadd.f32 %v1739, %v1922
        %v1924 = vpop.f32.mrb[0].mxu0
        %1925 = vmatprep.mubr.bf16.mxu0 0
        %1926 = vmatmul.mubr.bf16.gmra.mrb[0].mxu0 %v1571
        %v1927 = vpop.f32.mrb[0].mxu0
        %v1928 = vadd.f32 %v1739, %v1927
        %v1929 = vpop.f32.mrb[0].mxu0
        %v1930 = vpop.f32.mrb[0].mxu0
        %v1931 = vadd.f32 %v1739, %v1930
        %v1932 = vpop.f32.mrb[0].mxu0
        %1933 = vmatprep.mubr.bf16.mxu0 0
        %1934 = vmatmul.mubr.bf16.gmra.mrb[0].mxu0 %v1572
        %v1935 = vpop.f32.mrb[0].mxu0
        %v1936 = vadd.f32 %v1739, %v1935
        %v1937 = vpop.f32.mrb[0].mxu0
        %v1938 = vpop.f32.mrb[0].mxu0
        %v1939 = vadd.f32 %v1739, %v1938
        %v1940 = vpop.f32.mrb[0].mxu0
        %1941 = vmatprep.mubr.bf16.mxu0 0
        %1942 = vmatmul.mubr.bf16.gmra.mrb[0].mxu0 %v1573
        %v1943 = vpop.f32.mrb[0].mxu0
        %v1944 = vadd.f32 %v1739, %v1943
        %v1945 = vpop.f32.mrb[0].mxu0
        %v1946 = vpop.f32.mrb[0].mxu0
        %v1947 = vadd.f32 %v1739, %v1946
        %v1948 = vpop.f32.mrb[0].mxu0
        %1949 = vdwg.mxu0
        %vm1950 = vcmp.gt.f32.partialorder %v1824, 0.0
        %vm1951 = vcmp.gt.f32.partialorder %v1827, 0.0
        %vm1952 = vcmp.gt.f32.partialorder %v1832, 0.0
        %vm1953 = vcmp.gt.f32.partialorder %v1835, 0.0
        %vm1954 = vcmp.gt.f32.partialorder %v1840, 0.0
        %vm1955 = vcmp.gt.f32.partialorder %v1843, 0.0
        %vm1956 = vcmp.gt.f32.partialorder %v1848, 0.0
        %vm1957 = vcmp.gt.f32.partialorder %v1851, 0.0
        %vm1958 = vcmp.gt.f32.partialorder %v1856, 0.0
        %vm1959 = vcmp.gt.f32.partialorder %v1859, 0.0
        %vm1960 = vcmp.gt.f32.partialorder %v1864, 0.0
        %vm1961 = vcmp.gt.f32.partialorder %v1867, 0.0
        %vm1962 = vcmp.gt.f32.partialorder %v1872, 0.0
        %vm1963 = vcmp.gt.f32.partialorder %v1875, 0.0
        %vm1964 = vcmp.gt.f32.partialorder %v1880, 0.0
        %vm1965 = vcmp.gt.f32.partialorder %v1883, 0.0
        %vm1966 = vcmp.gt.f32.partialorder %v1888, 0.0
        %vm1967 = vcmp.gt.f32.partialorder %v1891, 0.0
        %vm1968 = vcmp.gt.f32.partialorder %v1896, 0.0
        %vm1969 = vcmp.gt.f32.partialorder %v1899, 0.0
        %vm1970 = vcmp.gt.f32.partialorder %v1904, 0.0
        %vm1971 = vcmp.gt.f32.partialorder %v1907, 0.0
        %vm1972 = vcmp.gt.f32.partialorder %v1912, 0.0
        %vm1973 = vcmp.gt.f32.partialorder %v1915, 0.0
        %vm1974 = vcmp.gt.f32.partialorder %v1920, 0.0
        %vm1975 = vcmp.gt.f32.partialorder %v1923, 0.0
        %vm1976 = vcmp.gt.f32.partialorder %v1928, 0.0
        %vm1977 = vcmp.gt.f32.partialorder %v1931, 0.0
        %vm1978 = vcmp.gt.f32.partialorder %v1936, 0.0
        %vm1979 = vcmp.gt.f32.partialorder %v1939, 0.0
        %vm1980 = vcmp.gt.f32.partialorder %v1944, 0.0
        %vm1981 = vcmp.gt.f32.partialorder %v1947, 0.0
        %v1982 = vmul.f32 %v1824, 0.01
        %v1983 = vmul.f32 %v1827, 0.01
        %v1984 = vmul.f32 %v1832, 0.01
        %v1985 = vmul.f32 %v1835, 0.01
        %v1986 = vmul.f32 %v1840, 0.01
        %v1987 = vmul.f32 %v1843, 0.01
        %v1988 = vmul.f32 %v1848, 0.01
        %v1989 = vmul.f32 %v1851, 0.01
        %v1990 = vmul.f32 %v1856, 0.01
        %v1991 = vmul.f32 %v1859, 0.01
        %v1992 = vmul.f32 %v1864, 0.01
        %v1993 = vmul.f32 %v1867, 0.01
        %v1994 = vmul.f32 %v1872, 0.01
        %v1995 = vmul.f32 %v1875, 0.01
        %v1996 = vmul.f32 %v1880, 0.01
        %v1997 = vmul.f32 %v1883, 0.01
        %v1998 = vmul.f32 %v1888, 0.01
        %v1999 = vmul.f32 %v1891, 0.01
        %v2000 = vmul.f32 %v1896, 0.01
        %v2001 = vmul.f32 %v1899, 0.01
        %v2002 = vmul.f32 %v1904, 0.01
        %v2003 = vmul.f32 %v1907, 0.01
        %v2004 = vmul.f32 %v1912, 0.01
        %v2005 = vmul.f32 %v1915, 0.01
        %v2006 = vmul.f32 %v1920, 0.01
        %v2007 = vmul.f32 %v1923, 0.01
        %v2008 = vmul.f32 %v1928, 0.01
        %v2009 = vmul.f32 %v1931, 0.01
        %v2010 = vmul.f32 %v1936, 0.01
        %v2011 = vmul.f32 %v1939, 0.01
        %v2012 = vmul.f32 %v1944, 0.01
        %v2013 = vmul.f32 %v1947, 0.01
        %v2014 = vsel %vm1950, %v1824, %v1982
        %v2015 = vsel %vm1951, %v1827, %v1983
        %v2016 = vsel %vm1952, %v1832, %v1984
        %v2017 = vsel %vm1953, %v1835, %v1985
        %v2018 = vsel %vm1954, %v1840, %v1986
        %v2019 = vsel %vm1955, %v1843, %v1987
        %v2020 = vsel %vm1956, %v1848, %v1988
        %v2021 = vsel %vm1957, %v1851, %v1989
        %v2022 = vsel %vm1958, %v1856, %v1990
        %v2023 = vsel %vm1959, %v1859, %v1991
        %v2024 = vsel %vm1960, %v1864, %v1992
        %v2025 = vsel %vm1961, %v1867, %v1993
        %v2026 = vsel %vm1962, %v1872, %v1994
        %v2027 = vsel %vm1963, %v1875, %v1995
        %v2028 = vsel %vm1964, %v1880, %v1996
        %v2029 = vsel %vm1965, %v1883, %v1997
        %v2030 = vsel %vm1966, %v1888, %v1998
        %v2031 = vsel %vm1967, %v1891, %v1999
        %v2032 = vsel %vm1968, %v1896, %v2000
        %v2033 = vsel %vm1969, %v1899, %v2001
        %v2034 = vsel %vm1970, %v1904, %v2002
        %v2035 = vsel %vm1971, %v1907, %v2003
        %v2036 = vsel %vm1972, %v1912, %v2004
        %v2037 = vsel %vm1973, %v1915, %v2005
        %v2038 = vsel %vm1974, %v1920, %v2006
        %v2039 = vsel %vm1975, %v1923, %v2007
        %v2040 = vsel %vm1976, %v1928, %v2008
        %v2041 = vsel %vm1977, %v1931, %v2009
        %v2042 = vsel %vm1978, %v1936, %v2010
        %v2043 = vsel %vm1979, %v1939, %v2011
        %v2044 = vsel %vm1980, %v1944, %v2012
        %v2045 = vsel %vm1981, %v1947, %v2013
        %v2046 = vpack.c.bf16 %v2015, %v2014
        %v2047 = vpack.c.bf16 %v2017, %v2016
        %v2048 = vpack.c.bf16 %v2019, %v2018
        %v2049 = vpack.c.bf16 %v2021, %v2020
        %v2050 = vpack.c.bf16 %v2023, %v2022
        %v2051 = vpack.c.bf16 %v2025, %v2024
        %v2052 = vpack.c.bf16 %v2027, %v2026
        %v2053 = vpack.c.bf16 %v2029, %v2028
        %v2054 = vpack.c.bf16 %v2031, %v2030
        %v2055 = vpack.c.bf16 %v2033, %v2032
        %v2056 = vpack.c.bf16 %v2035, %v2034
        %v2057 = vpack.c.bf16 %v2037, %v2036
        %v2058 = vpack.c.bf16 %v2039, %v2038
        %v2059 = vpack.c.bf16 %v2041, %v2040
        %v2060 = vpack.c.bf16 %v2043, %v2042
        %v2061 = vpack.c.bf16 %v2045, %v2044
        %v2062 = vld [vmem:[#allocation11] sm:$0xf]
        %v2063 = vld [vmem:[#allocation11 + $0x4] sm:$0xf]
        %v2064 = vld [vmem:[#allocation11 + $0x8] sm:$0xf]
        %v2065 = vld [vmem:[#allocation11 + $0xc] sm:$0xf]
        %v2066 = vld [vmem:[#allocation11 + $0x10] sm:$0xf]
        %v2067 = vld [vmem:[#allocation11 + $0x14] sm:$0xf]
        %v2068 = vld [vmem:[#allocation11 + $0x18] sm:$0xf]
        %v2069 = vld [vmem:[#allocation11 + $0x1c] sm:$0xf]
        %v2070 = vld [vmem:[#allocation11 + $0x20] sm:$0xf]
        %v2071 = vld [vmem:[#allocation11 + $0x24] sm:$0xf]
        %v2072 = vld [vmem:[#allocation11 + $0x28] sm:$0xf]
        %v2073 = vld [vmem:[#allocation11 + $0x2c] sm:$0xf]
        %v2074 = vld [vmem:[#allocation11 + $0x30] sm:$0xf]
        %v2075 = vld [vmem:[#allocation11 + $0x34] sm:$0xf]
        %v2076 = vld [vmem:[#allocation11 + $0x38] sm:$0xf]
        %v2077 = vld [vmem:[#allocation11 + $0x3c] sm:$0xf]
        %v2078 = vld [vmem:[%s10] sm:$0x1]
        %v2080 = vlaneseq
        %v2081 = vshrl.u32 %v2080, 7
        %v2082 = vsub.s32 0, %v2081
        %v2083 = vrot.slane %v2078, %v2082
        %v2101 = vunpack.c.l.b16 %v2062
        %v2102 = vunpack.c.l.b16 %v2063
        %v2103 = vunpack.c.l.b16 %v2064
        %v2104 = vunpack.c.l.b16 %v2065
        %v2105 = vunpack.c.l.b16 %v2066
        %v2106 = vunpack.c.l.b16 %v2067
        %v2107 = vunpack.c.l.b16 %v2068
        %v2108 = vunpack.c.l.b16 %v2069
        %v2109 = vunpack.c.l.b16 %v2070
        %v2110 = vunpack.c.l.b16 %v2071
        %v2111 = vunpack.c.l.b16 %v2072
        %v2112 = vunpack.c.l.b16 %v2073
        %v2113 = vunpack.c.l.b16 %v2074
        %v2114 = vunpack.c.l.b16 %v2075
        %v2115 = vunpack.c.l.b16 %v2076
        %v2116 = vunpack.c.l.b16 %v2077
        %v2117 = vpack.c.b16 %v2102, %v2101
        %v2118 = vpack.c.b16 %v2104, %v2103
        %v2119 = vpack.c.b16 %v2106, %v2105
        %v2120 = vpack.c.b16 %v2108, %v2107
        %v2121 = vpack.c.b16 %v2110, %v2109
        %v2122 = vpack.c.b16 %v2112, %v2111
        %v2123 = vpack.c.b16 %v2114, %v2113
        %v2124 = vpack.c.b16 %v2116, %v2115
        %2133 = vmatprep.subr.bf16.mxu0 0
        %2134 = vmatpush1.bf16.msra.mxu0 %v2117
        %2135 = vmatprep.subr.bf16.mxu0 0
        %2136 = vmatpush1.bf16.msra.mxu0 %v2118
        %2137 = vmatprep.subr.bf16.mxu0 0
        %2138 = vmatpush1.bf16.msra.mxu0 %v2119
        %2139 = vmatprep.subr.bf16.mxu0 0
        %2140 = vmatpush1.bf16.msra.mxu0 %v2120
        %2141 = vmatprep.subr.bf16.mxu0 0
        %2142 = vmatpush1.bf16.msra.mxu0 %v2121
        %2143 = vmatprep.subr.bf16.mxu0 0
        %2144 = vmatpush1.bf16.msra.mxu0 %v2122
        %2145 = vmatprep.subr.bf16.mxu0 0
        %2146 = vmatpush1.bf16.msra.mxu0 %v2123
        %2147 = vmatprep.subr.bf16.mxu0 0
        %2148 = vmatpush1.bf16.msra.mxu0 %v2124
        %2149 = vmatprep.subr.bf16.mxu0 0
        %2150 = vmatpush1.bf16.msra.mxu0 0
        %2151 = vmatprep.subr.bf16.mxu0 0
        %2152 = vmatpush1.bf16.msra.mxu0 0
        %2153 = vmatprep.subr.bf16.mxu0 0
        %2154 = vmatpush1.bf16.msra.mxu0 0
        %2155 = vmatprep.subr.bf16.mxu0 0
        %2156 = vmatpush1.bf16.msra.mxu0 0
        %2157 = vmatprep.subr.bf16.mxu0 0
        %2158 = vmatpush1.bf16.msra.mxu0 0
        %2159 = vmatprep.subr.bf16.mxu0 0
        %2160 = vmatpush1.bf16.msra.mxu0 0
        %2161 = vmatprep.subr.bf16.mxu0 0
        %2162 = vmatpush1.bf16.msra.mxu0 0
        %2163 = vmatprep.subr.bf16.mxu0 0
        %2164 = vmatpush1.bf16.msra.mxu0 0
        %2165 = vmatprep.mubr.bf16.mxu0 0
        %2166 = vmatmul.mubr.bf16.gmra.mrb[0].mxu0 %v2046
        %v2167 = vpop.f32.mrb[0].mxu0
        %v2168 = vadd.f32 %v2083, %v2167
        %v2169 = vpop.f32.mrb[0].mxu0
        %v2170 = vpop.f32.mrb[0].mxu0
        %v2171 = vadd.f32 %v2083, %v2170
        %v2172 = vpop.f32.mrb[0].mxu0
        %2173 = vmatprep.mubr.bf16.mxu0 0
        %2174 = vmatmul.mubr.bf16.gmra.mrb[0].mxu0 %v2047
        %v2175 = vpop.f32.mrb[0].mxu0
        %v2176 = vadd.f32 %v2083, %v2175
        %v2177 = vpop.f32.mrb[0].mxu0
        %v2178 = vpop.f32.mrb[0].mxu0
        %v2179 = vadd.f32 %v2083, %v2178
        %v2180 = vpop.f32.mrb[0].mxu0
        %2181 = vmatprep.mubr.bf16.mxu0 0
        %2182 = vmatmul.mubr.bf16.gmra.mrb[0].mxu0 %v2048
        %v2183 = vpop.f32.mrb[0].mxu0
        %v2184 = vadd.f32 %v2083, %v2183
        %v2185 = vpop.f32.mrb[0].mxu0
        %v2186 = vpop.f32.mrb[0].mxu0
        %v2187 = vadd.f32 %v2083, %v2186
        %v2188 = vpop.f32.mrb[0].mxu0
        %2189 = vmatprep.mubr.bf16.mxu0 0
        %2190 = vmatmul.mubr.bf16.gmra.mrb[0].mxu0 %v2049
        %v2191 = vpop.f32.mrb[0].mxu0
        %v2192 = vadd.f32 %v2083, %v2191
        %v2193 = vpop.f32.mrb[0].mxu0
        %v2194 = vpop.f32.mrb[0].mxu0
        %v2195 = vadd.f32 %v2083, %v2194
        %v2196 = vpop.f32.mrb[0].mxu0
        %2197 = vmatprep.mubr.bf16.mxu0 0
        %2198 = vmatmul.mubr.bf16.gmra.mrb[0].mxu0 %v2050
        %v2199 = vpop.f32.mrb[0].mxu0
        %v2200 = vadd.f32 %v2083, %v2199
        %v2201 = vpop.f32.mrb[0].mxu0
        %v2202 = vpop.f32.mrb[0].mxu0
        %v2203 = vadd.f32 %v2083, %v2202
        %v2204 = vpop.f32.mrb[0].mxu0
        %2205 = vmatprep.mubr.bf16.mxu0 0
        %2206 = vmatmul.mubr.bf16.gmra.mrb[0].mxu0 %v2051
        %v2207 = vpop.f32.mrb[0].mxu0
        %v2208 = vadd.f32 %v2083, %v2207
        %v2209 = vpop.f32.mrb[0].mxu0
        %v2210 = vpop.f32.mrb[0].mxu0
        %v2211 = vadd.f32 %v2083, %v2210
        %v2212 = vpop.f32.mrb[0].mxu0
        %2213 = vmatprep.mubr.bf16.mxu0 0
        %2214 = vmatmul.mubr.bf16.gmra.mrb[0].mxu0 %v2052
        %v2215 = vpop.f32.mrb[0].mxu0
        %v2216 = vadd.f32 %v2083, %v2215
        %v2217 = vpop.f32.mrb[0].mxu0
        %v2218 = vpop.f32.mrb[0].mxu0
        %v2219 = vadd.f32 %v2083, %v2218
        %v2220 = vpop.f32.mrb[0].mxu0
        %2221 = vmatprep.mubr.bf16.mxu0 0
        %2222 = vmatmul.mubr.bf16.gmra.mrb[0].mxu0 %v2053
        %v2223 = vpop.f32.mrb[0].mxu0
        %v2224 = vadd.f32 %v2083, %v2223
        %v2225 = vpop.f32.mrb[0].mxu0
        %v2226 = vpop.f32.mrb[0].mxu0
        %v2227 = vadd.f32 %v2083, %v2226
        %v2228 = vpop.f32.mrb[0].mxu0
        %2229 = vmatprep.mubr.bf16.mxu0 0
        %2230 = vmatmul.mubr.bf16.gmra.mrb[0].mxu0 %v2054
        %v2231 = vpop.f32.mrb[0].mxu0
        %v2232 = vadd.f32 %v2083, %v2231
        %v2233 = vpop.f32.mrb[0].mxu0
        %v2234 = vpop.f32.mrb[0].mxu0
        %v2235 = vadd.f32 %v2083, %v2234
        %v2236 = vpop.f32.mrb[0].mxu0
        %2237 = vmatprep.mubr.bf16.mxu0 0
        %2238 = vmatmul.mubr.bf16.gmra.mrb[0].mxu0 %v2055
        %v2239 = vpop.f32.mrb[0].mxu0
        %v2240 = vadd.f32 %v2083, %v2239
        %v2241 = vpop.f32.mrb[0].mxu0
        %v2242 = vpop.f32.mrb[0].mxu0
        %v2243 = vadd.f32 %v2083, %v2242
        %v2244 = vpop.f32.mrb[0].mxu0
        %2245 = vmatprep.mubr.bf16.mxu0 0
        %2246 = vmatmul.mubr.bf16.gmra.mrb[0].mxu0 %v2056
        %v2247 = vpop.f32.mrb[0].mxu0
        %v2248 = vadd.f32 %v2083, %v2247
        %v2249 = vpop.f32.mrb[0].mxu0
        %v2250 = vpop.f32.mrb[0].mxu0
        %v2251 = vadd.f32 %v2083, %v2250
        %v2252 = vpop.f32.mrb[0].mxu0
        %2253 = vmatprep.mubr.bf16.mxu0 0
        %2254 = vmatmul.mubr.bf16.gmra.mrb[0].mxu0 %v2057
        %v2255 = vpop.f32.mrb[0].mxu0
        %v2256 = vadd.f32 %v2083, %v2255
        %v2257 = vpop.f32.mrb[0].mxu0
        %v2258 = vpop.f32.mrb[0].mxu0
        %v2259 = vadd.f32 %v2083, %v2258
        %v2260 = vpop.f32.mrb[0].mxu0
        %2261 = vmatprep.mubr.bf16.mxu0 0
        %2262 = vmatmul.mubr.bf16.gmra.mrb[0].mxu0 %v2058
        %v2263 = vpop.f32.mrb[0].mxu0
        %v2264 = vadd.f32 %v2083, %v2263
        %v2265 = vpop.f32.mrb[0].mxu0
        %v2266 = vpop.f32.mrb[0].mxu0
        %v2267 = vadd.f32 %v2083, %v2266
        %v2268 = vpop.f32.mrb[0].mxu0
        %2269 = vmatprep.mubr.bf16.mxu0 0
        %2270 = vmatmul.mubr.bf16.gmra.mrb[0].mxu0 %v2059
        %v2271 = vpop.f32.mrb[0].mxu0
        %v2272 = vadd.f32 %v2083, %v2271
        %v2273 = vpop.f32.mrb[0].mxu0
        %v2274 = vpop.f32.mrb[0].mxu0
        %v2275 = vadd.f32 %v2083, %v2274
        %v2276 = vpop.f32.mrb[0].mxu0
        %2277 = vmatprep.mubr.bf16.mxu0 0
        %2278 = vmatmul.mubr.bf16.gmra.mrb[0].mxu0 %v2060
        %v2279 = vpop.f32.mrb[0].mxu0
        %v2280 = vadd.f32 %v2083, %v2279
        %v2281 = vpop.f32.mrb[0].mxu0
        %v2282 = vpop.f32.mrb[0].mxu0
        %v2283 = vadd.f32 %v2083, %v2282
        %v2284 = vpop.f32.mrb[0].mxu0
        %2285 = vmatprep.mubr.bf16.mxu0 0
        %2286 = vmatmul.mubr.bf16.gmra.mrb[0].mxu0 %v2061
        %v2287 = vpop.f32.mrb[0].mxu0
        %v2288 = vadd.f32 %v2083, %v2287
        %v2289 = vpop.f32.mrb[0].mxu0
        %v2290 = vpop.f32.mrb[0].mxu0
        %v2291 = vadd.f32 %v2083, %v2290
        %v2292 = vpop.f32.mrb[0].mxu0
        %2293 = vdwg.mxu0
        %vm2294 = vcmp.gt.f32.partialorder %v2168, 0.0
        %vm2295 = vcmp.gt.f32.partialorder %v2171, 0.0
        %vm2296 = vcmp.gt.f32.partialorder %v2176, 0.0
        %vm2297 = vcmp.gt.f32.partialorder %v2179, 0.0
        %vm2298 = vcmp.gt.f32.partialorder %v2184, 0.0
        %vm2299 = vcmp.gt.f32.partialorder %v2187, 0.0
        %vm2300 = vcmp.gt.f32.partialorder %v2192, 0.0
        %vm2301 = vcmp.gt.f32.partialorder %v2195, 0.0
        %vm2302 = vcmp.gt.f32.partialorder %v2200, 0.0
        %vm2303 = vcmp.gt.f32.partialorder %v2203, 0.0
        %vm2304 = vcmp.gt.f32.partialorder %v2208, 0.0
        %vm2305 = vcmp.gt.f32.partialorder %v2211, 0.0
        %vm2306 = vcmp.gt.f32.partialorder %v2216, 0.0
        %vm2307 = vcmp.gt.f32.partialorder %v2219, 0.0
        %vm2308 = vcmp.gt.f32.partialorder %v2224, 0.0
        %vm2309 = vcmp.gt.f32.partialorder %v2227, 0.0
        %vm2310 = vcmp.gt.f32.partialorder %v2232, 0.0
        %vm2311 = vcmp.gt.f32.partialorder %v2235, 0.0
        %vm2312 = vcmp.gt.f32.partialorder %v2240, 0.0
        %vm2313 = vcmp.gt.f32.partialorder %v2243, 0.0
        %vm2314 = vcmp.gt.f32.partialorder %v2248, 0.0
        %vm2315 = vcmp.gt.f32.partialorder %v2251, 0.0
        %vm2316 = vcmp.gt.f32.partialorder %v2256, 0.0
        %vm2317 = vcmp.gt.f32.partialorder %v2259, 0.0
        %vm2318 = vcmp.gt.f32.partialorder %v2264, 0.0
        %vm2319 = vcmp.gt.f32.partialorder %v2267, 0.0
        %vm2320 = vcmp.gt.f32.partialorder %v2272, 0.0
        %vm2321 = vcmp.gt.f32.partialorder %v2275, 0.0
        %vm2322 = vcmp.gt.f32.partialorder %v2280, 0.0
        %vm2323 = vcmp.gt.f32.partialorder %v2283, 0.0
        %vm2324 = vcmp.gt.f32.partialorder %v2288, 0.0
        %vm2325 = vcmp.gt.f32.partialorder %v2291, 0.0
        %v2326 = vmul.f32 %v2168, 0.01
        %v2327 = vmul.f32 %v2171, 0.01
        %v2328 = vmul.f32 %v2176, 0.01
        %v2329 = vmul.f32 %v2179, 0.01
        %v2330 = vmul.f32 %v2184, 0.01
        %v2331 = vmul.f32 %v2187, 0.01
        %v2332 = vmul.f32 %v2192, 0.01
        %v2333 = vmul.f32 %v2195, 0.01
        %v2334 = vmul.f32 %v2200, 0.01
        %v2335 = vmul.f32 %v2203, 0.01
        %v2336 = vmul.f32 %v2208, 0.01
        %v2337 = vmul.f32 %v2211, 0.01
        %v2338 = vmul.f32 %v2216, 0.01
        %v2339 = vmul.f32 %v2219, 0.01
        %v2340 = vmul.f32 %v2224, 0.01
        %v2341 = vmul.f32 %v2227, 0.01
        %v2342 = vmul.f32 %v2232, 0.01
        %v2343 = vmul.f32 %v2235, 0.01
        %v2344 = vmul.f32 %v2240, 0.01
        %v2345 = vmul.f32 %v2243, 0.01
        %v2346 = vmul.f32 %v2248, 0.01
        %v2347 = vmul.f32 %v2251, 0.01
        %v2348 = vmul.f32 %v2256, 0.01
        %v2349 = vmul.f32 %v2259, 0.01
        %v2350 = vmul.f32 %v2264, 0.01
        %v2351 = vmul.f32 %v2267, 0.01
        %v2352 = vmul.f32 %v2272, 0.01
        %v2353 = vmul.f32 %v2275, 0.01
        %v2354 = vmul.f32 %v2280, 0.01
        %v2355 = vmul.f32 %v2283, 0.01
        %v2356 = vmul.f32 %v2288, 0.01
        %v2357 = vmul.f32 %v2291, 0.01
        %v2358 = vsel %vm2294, %v2168, %v2326
        %v2359 = vsel %vm2295, %v2171, %v2327
        %v2360 = vsel %vm2296, %v2176, %v2328
        %v2361 = vsel %vm2297, %v2179, %v2329
        %v2362 = vsel %vm2298, %v2184, %v2330
        %v2363 = vsel %vm2299, %v2187, %v2331
        %v2364 = vsel %vm2300, %v2192, %v2332
        %v2365 = vsel %vm2301, %v2195, %v2333
        %v2366 = vsel %vm2302, %v2200, %v2334
        %v2367 = vsel %vm2303, %v2203, %v2335
        %v2368 = vsel %vm2304, %v2208, %v2336
        %v2369 = vsel %vm2305, %v2211, %v2337
        %v2370 = vsel %vm2306, %v2216, %v2338
        %v2371 = vsel %vm2307, %v2219, %v2339
        %v2372 = vsel %vm2308, %v2224, %v2340
        %v2373 = vsel %vm2309, %v2227, %v2341
        %v2374 = vsel %vm2310, %v2232, %v2342
        %v2375 = vsel %vm2311, %v2235, %v2343
        %v2376 = vsel %vm2312, %v2240, %v2344
        %v2377 = vsel %vm2313, %v2243, %v2345
        %v2378 = vsel %vm2314, %v2248, %v2346
        %v2379 = vsel %vm2315, %v2251, %v2347
        %v2380 = vsel %vm2316, %v2256, %v2348
        %v2381 = vsel %vm2317, %v2259, %v2349
        %v2382 = vsel %vm2318, %v2264, %v2350
        %v2383 = vsel %vm2319, %v2267, %v2351
        %v2384 = vsel %vm2320, %v2272, %v2352
        %v2385 = vsel %vm2321, %v2275, %v2353
        %v2386 = vsel %vm2322, %v2280, %v2354
        %v2387 = vsel %vm2323, %v2283, %v2355
        %v2388 = vsel %vm2324, %v2288, %v2356
        %v2389 = vsel %vm2325, %v2291, %v2357
        %v2390 = vpack.c.bf16 %v2359, %v2358
        %v2391 = vpack.c.bf16 %v2361, %v2360
        %v2392 = vpack.c.bf16 %v2363, %v2362
        %v2393 = vpack.c.bf16 %v2365, %v2364
        %v2394 = vpack.c.bf16 %v2367, %v2366
        %v2395 = vpack.c.bf16 %v2369, %v2368
        %v2396 = vpack.c.bf16 %v2371, %v2370
        %v2397 = vpack.c.bf16 %v2373, %v2372
        %v2398 = vpack.c.bf16 %v2375, %v2374
        %v2399 = vpack.c.bf16 %v2377, %v2376
        %v2400 = vpack.c.bf16 %v2379, %v2378
        %v2401 = vpack.c.bf16 %v2381, %v2380
        %v2402 = vpack.c.bf16 %v2383, %v2382
        %v2403 = vpack.c.bf16 %v2385, %v2384
        %v2404 = vpack.c.bf16 %v2387, %v2386
        %v2405 = vpack.c.bf16 %v2389, %v2388
        %v2406 = vld [vmem:[#allocation13] sm:$0xf]
        %v2407 = vld [vmem:[#allocation13 + $0x4] sm:$0xf]
        %v2408 = vld [vmem:[#allocation13 + $0x8] sm:$0xf]
        %v2409 = vld [vmem:[#allocation13 + $0xc] sm:$0xf]
        %v2410 = vld [vmem:[#allocation13 + $0x10] sm:$0xf]
        %v2411 = vld [vmem:[#allocation13 + $0x14] sm:$0xf]
        %v2412 = vld [vmem:[#allocation13 + $0x18] sm:$0xf]
        %v2413 = vld [vmem:[#allocation13 + $0x1c] sm:$0xf]
        %v2414 = vld [vmem:[#allocation13 + $0x20] sm:$0xf]
        %v2415 = vld [vmem:[#allocation13 + $0x24] sm:$0xf]
        %v2416 = vld [vmem:[#allocation13 + $0x28] sm:$0xf]
        %v2417 = vld [vmem:[#allocation13 + $0x2c] sm:$0xf]
        %v2418 = vld [vmem:[#allocation13 + $0x30] sm:$0xf]
        %v2419 = vld [vmem:[#allocation13 + $0x34] sm:$0xf]
        %v2420 = vld [vmem:[#allocation13 + $0x38] sm:$0xf]
        %v2421 = vld [vmem:[#allocation13 + $0x3c] sm:$0xf]
        %v2422 = vld [vmem:[%s12] sm:$0x1]
        %v2424 = vlaneseq
        %v2425 = vshrl.u32 %v2424, 7
        %v2426 = vsub.s32 0, %v2425
        %v2427 = vrot.slane %v2422, %v2426
        %v2445 = vunpack.c.l.b16 %v2406
        %v2446 = vunpack.c.l.b16 %v2407
        %v2447 = vunpack.c.l.b16 %v2408
        %v2448 = vunpack.c.l.b16 %v2409
        %v2449 = vunpack.c.l.b16 %v2410
        %v2450 = vunpack.c.l.b16 %v2411
        %v2451 = vunpack.c.l.b16 %v2412
        %v2452 = vunpack.c.l.b16 %v2413
        %v2453 = vunpack.c.l.b16 %v2414
        %v2454 = vunpack.c.l.b16 %v2415
        %v2455 = vunpack.c.l.b16 %v2416
        %v2456 = vunpack.c.l.b16 %v2417
        %v2457 = vunpack.c.l.b16 %v2418
        %v2458 = vunpack.c.l.b16 %v2419
        %v2459 = vunpack.c.l.b16 %v2420
        %v2460 = vunpack.c.l.b16 %v2421
        %v2461 = vpack.c.b16 %v2446, %v2445
        %v2462 = vpack.c.b16 %v2448, %v2447
        %v2463 = vpack.c.b16 %v2450, %v2449
        %v2464 = vpack.c.b16 %v2452, %v2451
        %v2465 = vpack.c.b16 %v2454, %v2453
        %v2466 = vpack.c.b16 %v2456, %v2455
        %v2467 = vpack.c.b16 %v2458, %v2457
        %v2468 = vpack.c.b16 %v2460, %v2459
        %2477 = vmatprep.subr.bf16.mxu0 0
        %2478 = vmatpush1.bf16.msra.mxu0 %v2461
        %2479 = vmatprep.subr.bf16.mxu0 0
        %2480 = vmatpush1.bf16.msra.mxu0 %v2462
        %2481 = vmatprep.subr.bf16.mxu0 0
        %2482 = vmatpush1.bf16.msra.mxu0 %v2463
        %2483 = vmatprep.subr.bf16.mxu0 0
        %2484 = vmatpush1.bf16.msra.mxu0 %v2464
        %2485 = vmatprep.subr.bf16.mxu0 0
        %2486 = vmatpush1.bf16.msra.mxu0 %v2465
        %2487 = vmatprep.subr.bf16.mxu0 0
        %2488 = vmatpush1.bf16.msra.mxu0 %v2466
        %2489 = vmatprep.subr.bf16.mxu0 0
        %2490 = vmatpush1.bf16.msra.mxu0 %v2467
        %2491 = vmatprep.subr.bf16.mxu0 0
        %2492 = vmatpush1.bf16.msra.mxu0 %v2468
        %2493 = vmatprep.subr.bf16.mxu0 0
        %2494 = vmatpush1.bf16.msra.mxu0 0
        %2495 = vmatprep.subr.bf16.mxu0 0
        %2496 = vmatpush1.bf16.msra.mxu0 0
        %2497 = vmatprep.subr.bf16.mxu0 0
        %2498 = vmatpush1.bf16.msra.mxu0 0
        %2499 = vmatprep.subr.bf16.mxu0 0
        %2500 = vmatpush1.bf16.msra.mxu0 0
        %2501 = vmatprep.subr.bf16.mxu0 0
        %2502 = vmatpush1.bf16.msra.mxu0 0
        %2503 = vmatprep.subr.bf16.mxu0 0
        %2504 = vmatpush1.bf16.msra.mxu0 0
        %2505 = vmatprep.subr.bf16.mxu0 0
        %2506 = vmatpush1.bf16.msra.mxu0 0
        %2507 = vmatprep.subr.bf16.mxu0 0
        %2508 = vmatpush1.bf16.msra.mxu0 0
        %2509 = vmatprep.mubr.bf16.mxu0 0
        %2510 = vmatmul.mubr.bf16.gmra.mrb[0].mxu0 %v2390
        %v2511 = vpop.f32.mrb[0].mxu0
        %v2512 = vadd.f32 %v2427, %v2511
        %v2513 = vpop.f32.mrb[0].mxu0
        %v2514 = vpop.f32.mrb[0].mxu0
        %v2515 = vadd.f32 %v2427, %v2514
        %v2516 = vpop.f32.mrb[0].mxu0
        %2517 = vmatprep.mubr.bf16.mxu0 0
        %2518 = vmatmul.mubr.bf16.gmra.mrb[0].mxu0 %v2391
        %v2519 = vpop.f32.mrb[0].mxu0
        %v2520 = vadd.f32 %v2427, %v2519
        %v2521 = vpop.f32.mrb[0].mxu0
        %v2522 = vpop.f32.mrb[0].mxu0
        %v2523 = vadd.f32 %v2427, %v2522
        %v2524 = vpop.f32.mrb[0].mxu0
        %2525 = vmatprep.mubr.bf16.mxu0 0
        %2526 = vmatmul.mubr.bf16.gmra.mrb[0].mxu0 %v2392
        %v2527 = vpop.f32.mrb[0].mxu0
        %v2528 = vadd.f32 %v2427, %v2527
        %v2529 = vpop.f32.mrb[0].mxu0
        %v2530 = vpop.f32.mrb[0].mxu0
        %v2531 = vadd.f32 %v2427, %v2530
        %v2532 = vpop.f32.mrb[0].mxu0
        %2533 = vmatprep.mubr.bf16.mxu0 0
        %2534 = vmatmul.mubr.bf16.gmra.mrb[0].mxu0 %v2393
        %v2535 = vpop.f32.mrb[0].mxu0
        %v2536 = vadd.f32 %v2427, %v2535
        %v2537 = vpop.f32.mrb[0].mxu0
        %v2538 = vpop.f32.mrb[0].mxu0
        %v2539 = vadd.f32 %v2427, %v2538
        %v2540 = vpop.f32.mrb[0].mxu0
        %2541 = vmatprep.mubr.bf16.mxu0 0
        %2542 = vmatmul.mubr.bf16.gmra.mrb[0].mxu0 %v2394
        %v2543 = vpop.f32.mrb[0].mxu0
        %v2544 = vadd.f32 %v2427, %v2543
        %v2545 = vpop.f32.mrb[0].mxu0
        %v2546 = vpop.f32.mrb[0].mxu0
        %v2547 = vadd.f32 %v2427, %v2546
        %v2548 = vpop.f32.mrb[0].mxu0
        %2549 = vmatprep.mubr.bf16.mxu0 0
        %2550 = vmatmul.mubr.bf16.gmra.mrb[0].mxu0 %v2395
        %v2551 = vpop.f32.mrb[0].mxu0
        %v2552 = vadd.f32 %v2427, %v2551
        %v2553 = vpop.f32.mrb[0].mxu0
        %v2554 = vpop.f32.mrb[0].mxu0
        %v2555 = vadd.f32 %v2427, %v2554
        %v2556 = vpop.f32.mrb[0].mxu0
        %2557 = vmatprep.mubr.bf16.mxu0 0
        %2558 = vmatmul.mubr.bf16.gmra.mrb[0].mxu0 %v2396
        %v2559 = vpop.f32.mrb[0].mxu0
        %v2560 = vadd.f32 %v2427, %v2559
        %v2561 = vpop.f32.mrb[0].mxu0
        %v2562 = vpop.f32.mrb[0].mxu0
        %v2563 = vadd.f32 %v2427, %v2562
        %v2564 = vpop.f32.mrb[0].mxu0
        %2565 = vmatprep.mubr.bf16.mxu0 0
        %2566 = vmatmul.mubr.bf16.gmra.mrb[0].mxu0 %v2397
        %v2567 = vpop.f32.mrb[0].mxu0
        %v2568 = vadd.f32 %v2427, %v2567
        %v2569 = vpop.f32.mrb[0].mxu0
        %v2570 = vpop.f32.mrb[0].mxu0
        %v2571 = vadd.f32 %v2427, %v2570
        %v2572 = vpop.f32.mrb[0].mxu0
        %2573 = vmatprep.mubr.bf16.mxu0 0
        %2574 = vmatmul.mubr.bf16.gmra.mrb[0].mxu0 %v2398
        %v2575 = vpop.f32.mrb[0].mxu0
        %v2576 = vadd.f32 %v2427, %v2575
        %v2577 = vpop.f32.mrb[0].mxu0
        %v2578 = vpop.f32.mrb[0].mxu0
        %v2579 = vadd.f32 %v2427, %v2578
        %v2580 = vpop.f32.mrb[0].mxu0
        %2581 = vmatprep.mubr.bf16.mxu0 0
        %2582 = vmatmul.mubr.bf16.gmra.mrb[0].mxu0 %v2399
        %v2583 = vpop.f32.mrb[0].mxu0
        %v2584 = vadd.f32 %v2427, %v2583
        %v2585 = vpop.f32.mrb[0].mxu0
        %v2586 = vpop.f32.mrb[0].mxu0
        %v2587 = vadd.f32 %v2427, %v2586
        %v2588 = vpop.f32.mrb[0].mxu0
        %2589 = vmatprep.mubr.bf16.mxu0 0
        %2590 = vmatmul.mubr.bf16.gmra.mrb[0].mxu0 %v2400
        %v2591 = vpop.f32.mrb[0].mxu0
        %v2592 = vadd.f32 %v2427, %v2591
        %v2593 = vpop.f32.mrb[0].mxu0
        %v2594 = vpop.f32.mrb[0].mxu0
        %v2595 = vadd.f32 %v2427, %v2594
        %v2596 = vpop.f32.mrb[0].mxu0
        %2597 = vmatprep.mubr.bf16.mxu0 0
        %2598 = vmatmul.mubr.bf16.gmra.mrb[0].mxu0 %v2401
        %v2599 = vpop.f32.mrb[0].mxu0
        %v2600 = vadd.f32 %v2427, %v2599
        %v2601 = vpop.f32.mrb[0].mxu0
        %v2602 = vpop.f32.mrb[0].mxu0
        %v2603 = vadd.f32 %v2427, %v2602
        %v2604 = vpop.f32.mrb[0].mxu0
        %2605 = vmatprep.mubr.bf16.mxu0 0
        %2606 = vmatmul.mubr.bf16.gmra.mrb[0].mxu0 %v2402
        %v2607 = vpop.f32.mrb[0].mxu0
        %v2608 = vadd.f32 %v2427, %v2607
        %v2609 = vpop.f32.mrb[0].mxu0
        %v2610 = vpop.f32.mrb[0].mxu0
        %v2611 = vadd.f32 %v2427, %v2610
        %v2612 = vpop.f32.mrb[0].mxu0
        %2613 = vmatprep.mubr.bf16.mxu0 0
        %2614 = vmatmul.mubr.bf16.gmra.mrb[0].mxu0 %v2403
        %v2615 = vpop.f32.mrb[0].mxu0
        %v2616 = vadd.f32 %v2427, %v2615
        %v2617 = vpop.f32.mrb[0].mxu0
        %v2618 = vpop.f32.mrb[0].mxu0
        %v2619 = vadd.f32 %v2427, %v2618
        %v2620 = vpop.f32.mrb[0].mxu0
        %2621 = vmatprep.mubr.bf16.mxu0 0
        %2622 = vmatmul.mubr.bf16.gmra.mrb[0].mxu0 %v2404
        %v2623 = vpop.f32.mrb[0].mxu0
        %v2624 = vadd.f32 %v2427, %v2623
        %v2625 = vpop.f32.mrb[0].mxu0
        %v2626 = vpop.f32.mrb[0].mxu0
        %v2627 = vadd.f32 %v2427, %v2626
        %v2628 = vpop.f32.mrb[0].mxu0
        %2629 = vmatprep.mubr.bf16.mxu0 0
        %2630 = vmatmul.mubr.bf16.gmra.mrb[0].mxu0 %v2405
        %v2631 = vpop.f32.mrb[0].mxu0
        %v2632 = vadd.f32 %v2427, %v2631
        %v2633 = vpop.f32.mrb[0].mxu0
        %v2634 = vpop.f32.mrb[0].mxu0
        %v2635 = vadd.f32 %v2427, %v2634
        %v2636 = vpop.f32.mrb[0].mxu0
        %2637 = vdwg.mxu0
        %v2638 = vpack.c.bf16 %v2515, %v2512
        %v2639 = vpack.c.bf16 %v2523, %v2520
        %v2640 = vpack.c.bf16 %v2531, %v2528
        %v2641 = vpack.c.bf16 %v2539, %v2536
        %v2642 = vpack.c.bf16 %v2547, %v2544
        %v2643 = vpack.c.bf16 %v2555, %v2552
        %v2644 = vpack.c.bf16 %v2563, %v2560
        %v2645 = vpack.c.bf16 %v2571, %v2568
        %v2646 = vpack.c.bf16 %v2579, %v2576
        %v2647 = vpack.c.bf16 %v2587, %v2584
        %v2648 = vpack.c.bf16 %v2595, %v2592
        %v2649 = vpack.c.bf16 %v2603, %v2600
        %v2650 = vpack.c.bf16 %v2611, %v2608
        %v2651 = vpack.c.bf16 %v2619, %v2616
        %v2652 = vpack.c.bf16 %v2627, %v2624
        %v2653 = vpack.c.bf16 %v2635, %v2632
        %v2670 = vunpack.c.l.b16 %v2638
        %v2671 = vunpack.c.h.b16 %v2638
        %v2672 = vunpack.c.l.b16 %v2639
        %v2673 = vunpack.c.h.b16 %v2639
        %v2674 = vunpack.c.l.b16 %v2640
        %v2675 = vunpack.c.h.b16 %v2640
        %v2676 = vunpack.c.l.b16 %v2641
        %v2677 = vunpack.c.h.b16 %v2641
        %v2678 = vunpack.c.l.b16 %v2642
        %v2679 = vunpack.c.h.b16 %v2642
        %v2680 = vunpack.c.l.b16 %v2643
        %v2681 = vunpack.c.h.b16 %v2643
        %v2682 = vunpack.c.l.b16 %v2644
        %v2683 = vunpack.c.h.b16 %v2644
        %v2684 = vunpack.c.l.b16 %v2645
        %v2685 = vunpack.c.h.b16 %v2645
        %v2686 = vunpack.c.l.b16 %v2646
        %v2687 = vunpack.c.h.b16 %v2646
        %v2688 = vunpack.c.l.b16 %v2647
        %v2689 = vunpack.c.h.b16 %v2647
        %v2690 = vunpack.c.l.b16 %v2648
        %v2691 = vunpack.c.h.b16 %v2648
        %v2692 = vunpack.c.l.b16 %v2649
        %v2693 = vunpack.c.h.b16 %v2649
        %v2694 = vunpack.c.l.b16 %v2650
        %v2695 = vunpack.c.h.b16 %v2650
        %v2696 = vunpack.c.l.b16 %v2651
        %v2697 = vunpack.c.h.b16 %v2651
        %v2698 = vunpack.c.l.b16 %v2652
        %v2699 = vunpack.c.h.b16 %v2652
        %v2700 = vunpack.c.l.b16 %v2653
        %v2701 = vunpack.c.h.b16 %v2653
        %v2702 = vpack.c.b16 %v2670, %v2670
        %v2703 = vpack.c.b16 %v2671, %v2671
        %v2704 = vpack.c.b16 %v2672, %v2672
        %v2705 = vpack.c.b16 %v2673, %v2673
        %v2706 = vpack.c.b16 %v2674, %v2674
        %v2707 = vpack.c.b16 %v2675, %v2675
        %v2708 = vpack.c.b16 %v2676, %v2676
        %v2709 = vpack.c.b16 %v2677, %v2677
        %v2710 = vpack.c.b16 %v2678, %v2678
        %v2711 = vpack.c.b16 %v2679, %v2679
        %v2712 = vpack.c.b16 %v2680, %v2680
        %v2713 = vpack.c.b16 %v2681, %v2681
        %v2714 = vpack.c.b16 %v2682, %v2682
        %v2715 = vpack.c.b16 %v2683, %v2683
        %v2716 = vpack.c.b16 %v2684, %v2684
        %v2717 = vpack.c.b16 %v2685, %v2685
        %v2718 = vpack.c.b16 %v2686, %v2686
        %v2719 = vpack.c.b16 %v2687, %v2687
        %v2720 = vpack.c.b16 %v2688, %v2688
        %v2721 = vpack.c.b16 %v2689, %v2689
        %v2722 = vpack.c.b16 %v2690, %v2690
        %v2723 = vpack.c.b16 %v2691, %v2691
        %v2724 = vpack.c.b16 %v2692, %v2692
        %v2725 = vpack.c.b16 %v2693, %v2693
        %v2726 = vpack.c.b16 %v2694, %v2694
        %v2727 = vpack.c.b16 %v2695, %v2695
        %v2728 = vpack.c.b16 %v2696, %v2696
        %v2729 = vpack.c.b16 %v2697, %v2697
        %v2730 = vpack.c.b16 %v2698, %v2698
        %v2731 = vpack.c.b16 %v2699, %v2699
        %v2732 = vpack.c.b16 %v2700, %v2700
        %v2733 = vpack.c.b16 %v2701, %v2701
        %2766 = vst [vmem:[%s580] sm:$0xf] %v2702
        %2767 = vst [vmem:[%s580 + $0x4] sm:$0xf] %v2703
        %2768 = vst [vmem:[%s580 + $0x8] sm:$0xf] %v2704
        %2769 = vst [vmem:[%s580 + $0xc] sm:$0xf] %v2705
        %2770 = vst [vmem:[%s580 + $0x10] sm:$0xf] %v2706
        %2771 = vst [vmem:[%s580 + $0x14] sm:$0xf] %v2707
        %2772 = vst [vmem:[%s580 + $0x18] sm:$0xf] %v2708
        %2773 = vst [vmem:[%s580 + $0x1c] sm:$0xf] %v2709
        %2774 = vst [vmem:[%s580 + $0x20] sm:$0xf] %v2710
        %2775 = vst [vmem:[%s580 + $0x24] sm:$0xf] %v2711
        %2776 = vst [vmem:[%s580 + $0x28] sm:$0xf] %v2712
        %2777 = vst [vmem:[%s580 + $0x2c] sm:$0xf] %v2713
        %2778 = vst [vmem:[%s580 + $0x30] sm:$0xf] %v2714
        %2779 = vst [vmem:[%s580 + $0x34] sm:$0xf] %v2715
        %2780 = vst [vmem:[%s580 + $0x38] sm:$0xf] %v2716
        %2781 = vst [vmem:[%s580 + $0x3c] sm:$0xf] %v2717
        %2782 = vst [vmem:[%s580 + $0x40] sm:$0xf] %v2718
        %2783 = vst [vmem:[%s580 + $0x44] sm:$0xf] %v2719
        %2784 = vst [vmem:[%s580 + $0x48] sm:$0xf] %v2720
        %2785 = vst [vmem:[%s580 + $0x4c] sm:$0xf] %v2721
        %2786 = vst [vmem:[%s580 + $0x50] sm:$0xf] %v2722
        %2787 = vst [vmem:[%s580 + $0x54] sm:$0xf] %v2723
        %2788 = vst [vmem:[%s580 + $0x58] sm:$0xf] %v2724
        %2789 = vst [vmem:[%s580 + $0x5c] sm:$0xf] %v2725
        %2790 = vst [vmem:[%s580 + $0x60] sm:$0xf] %v2726
        %2791 = vst [vmem:[%s580 + $0x64] sm:$0xf] %v2727
        %2792 = vst [vmem:[%s580 + $0x68] sm:$0xf] %v2728
        %2793 = vst [vmem:[%s580 + $0x6c] sm:$0xf] %v2729
        %2794 = vst [vmem:[%s580 + $0x70] sm:$0xf] %v2730
        %2795 = vst [vmem:[%s580 + $0x74] sm:$0xf] %v2731
        %2796 = vst [vmem:[%s580 + $0x78] sm:$0xf] %v2732
        %2797 = vst [vmem:[%s580 + $0x7c] sm:$0xf] %v2733
        %s2798 = smul.u32 32, %s35
        %p2799 = scmp.lt.s32.totalorder %s2798, 63
        %s2800 = scalar_select %p2799, %s2798, 63
        %s2801 = smul.addr %s2800, 4
        %s2802 = scalar_lea.vmem %s13, %s2801
        %s2803 = sand.u32 %s347, 1
        %s2804 = scalar_lea.sflag [#allocation4], %s2803
        %s2805 = sand.u32 %s347, 1
        %s2806 = smul.addr %s2805, 128
        %s2807 = scalar_lea.vmem [#allocation14], %s2806
        // Predicated region
        $region101: #{_forward_impl.1} parent=71 // pred_check
          %p2808 = pneg %p331
        $region102: #{_forward_impl.1} parent=71 // pred_check_branch
          %2810 = sbr.rel (%p2808) target = $region104
        $region103: #{_forward_impl.1} parent=71 // pred_region
          %s2811 = smul.u32 32, %s35
        $region104: #{_forward_impl.1} parent=71 // pred_fallthru
          _
        // Predicated region
        $region105: #{_forward_impl.1} parent=71 // pred_check
          %p2812 = pneg %p357
        $region106: #{_forward_impl.1} parent=71 // pred_check_branch
          %2814 = sbr.rel (%p2812) target = $region108
        $region107: #{_forward_impl.1} parent=71 // pred_region
          %s2815 = smul.u32 32, %s35
          %s2817 = ssub.s32 2048, 2048
          %2818 = vsyncadd %s2804, %s2817
          %s2819 = smul.addr %s2815, 64
          %s2820 = scalar_lea.hbm %s14, %s2819
          %s2821 = sshll.u32 %s2807, 4
          %s2822 = int_to_ptr.vmem [resolvable:$true] %s2821
          %2827 = dma.vmem_to_hbm [thread:$0]  %s2822, 2048, %s2820, %s2804, 64, 64, 4
        $region108: #{_forward_impl.1} parent=71 // pred_fallthru
          _
      $region72: #{_forward_impl.1} parent=5 // pred_fallthru
        _
      %p2828 = scmp.le.s32.totalorder 2, %s30
      // Predicated region
      $region109: #{_forward_impl.1} parent=5 // pred_check
        %p2829 = pneg %p2828
      $region110: #{_forward_impl.1} parent=5 // pred_check_branch
        %2831 = sbr.rel (%p2829) target = $region112
      $region111: #{_forward_impl.1} parent=5 // pred_region
        %s2832 = ssub.s32 %s30, 2
        // Predicated region
        $region113: #{_forward_impl.1} parent=111 // pred_check
          %p2833 = pneg %p337
        $region114: #{_forward_impl.1} parent=111 // pred_check_branch
          %2835 = sbr.rel (%p2833) target = $region116
        $region115: #{_forward_impl.1} parent=111 // pred_region
          %s2836 = smul.u32 32, %s36
          %p2837 = scmp.lt.s32.totalorder %s2836, 63
          %s2838 = scalar_select %p2837, %s2836, 63
          %s2839 = smul.addr %s2838, 4
          %s2840 = scalar_lea.vmem %s13, %s2839
        $region116: #{_forward_impl.1} parent=111 // pred_fallthru
          _
        // Predicated region
        $region117: #{_forward_impl.1} parent=111 // pred_check
          %p2841 = pneg %p363
        $region118: #{_forward_impl.1} parent=111 // pred_check_branch
          %2843 = sbr.rel (%p2841) target = $region120
        $region119: #{_forward_impl.1} parent=111 // pred_region
          %s2844 = sand.u32 %s348, 1
          %s2845 = scalar_lea.sflag [#allocation4], %s2844
          %s2846 = sand.u32 %s348, 1
          %s2847 = smul.addr %s2846, 128
          %s2848 = scalar_lea.vmem [#allocation14], %s2847
          %2849 = dma.done %s2845, 2048
        $region120: #{_forward_impl.1} parent=111 // pred_fallthru
          _
      $region112: #{_forward_impl.1} parent=5 // pred_fallthru
        _
    $region6: #{_forward_impl.1} parent=1 // loop_footer
      %s34 = sadd.s32 1, %s30
    $region7: #{_forward_impl.1} parent=1 // loop_footer_branch
      %29 = sbr.rel target = $region3
    $region8: #{_forward_impl.1} parent=1 // loop_exit
      _
    %2850 = vsyncpa [#allocation3], 1
    %s2851 = scalar_lea.sflag [#allocation3], 1
    %2852 = vsyncpa %s2851, 1
    %2853 = vsyncpa [#allocation6], 1
    %2854 = vsyncpa [#allocation9], 1
    %2855 = vsyncpa [#allocation12], 1
    %2856 = vsyncpa [#allocation4], 1
    %s2857 = scalar_lea.sflag [#allocation4], 1
    %2858 = vsyncpa %s2857, 1

</llo_original>
